<compile_context>
chip_gen: v7x
topology: tpu7x:2x2x1
jax: 0.10.0
libtpu: 0.0.40
codegen_flags: <defaults>
</compile_context>

<pallas_src>
import functools

import jax
import jax.numpy as jnp
from jax.experimental import pallas as pl
from jax.experimental.pallas import tpu as pltpu


def _round_up(x, m):
    return -(-x // m) * m


# ----------------------------------------------------------------------------
# Pallas kernel: one (tile_h, W) row-tile of a 3x3/pad=1 conv.
#   im2col in VMEM -> one big-K bf16 GEMM -> f32 bias (+ PReLU) epilogue.
# ----------------------------------------------------------------------------
def _conv3x3_kernel(x_main_ref, x_h0_ref, x_h1_ref, w_ref, b_ref, a_ref, o_ref,
                    xs_ref, lhs_ref, *, apply_prelu, tile_h, W, Cin, Cout,
                    Cout_p, nchw_out):
    # x_main_ref: (1, tile_h, W+2, Cin) bf16   rows [t*tile_h, t*tile_h+tile_h)
    # x_h0_ref  : (1, 1, W+2, Cin)      bf16   halo row  t*tile_h+tile_h
    # x_h1_ref  : (1, 1, W+2, Cin)      bf16   halo row  t*tile_h+tile_h+1
    # w_ref     : (9*Cin, Cout_p)       bf16   im2col weights (grid-resident)
    # b_ref     : (1, Cout_p)           f32    bias
    # a_ref     : (1, 1)                f32    SMEM scalar (shared PReLU alpha)
    # o_ref     : (1, tile_h, W, Cout)  or  (1, Cout, tile_h*W)
    # xs_ref    : (tile_h+2, W+2, Cin)  bf16   VMEM scratch: halo window
    # lhs_ref   : (tile_h, W, 9*Cin)    bf16   VMEM scratch: im2col LHS

    # Assemble the halo window from the main block + two 1-row halo blocks
    # (only VMEM copies; no duplicated HBM traffic).
    xs_ref[0:tile_h] = x_main_ref[0]
    xs_ref[tile_h:tile_h + 1] = x_h0_ref[0]
    xs_ref[tile_h + 1:tile_h + 2] = x_h1_ref[0]

    # im2col: one (tile_h*W, 9*Cin) LHS so a single big-K GEMM feeds the MXU
    # (instead of nine K=Cin tap GEMMs that starve its 256-deep K dimension).
    for ky in range(3):
        for kx in range(3):
            col = (3 * ky + kx) * Cin
            lhs_ref[:, :, col:col + Cin] = xs_ref[ky:ky + tile_h, kx:kx + W, :]

    npix = tile_h * W
    lhs = lhs_ref[...].reshape(npix, 9 * Cin)                 # W % 8 == 0 keeps
    acc = jnp.dot(lhs, w_ref[...],                            # this reshape free
                  preferred_element_type=jnp.float32)         # (npix, Cout_p) f32
    acc = acc + b_ref[...]
    if apply_prelu:
        a = a_ref[0, 0]
        acc = jnp.where(acc >= 0.0, acc, a * acc)             # PReLU, scalar alpha

    if nchw_out:
        # Planar (channel-major) store: only the real channels are written and
        # the lane dim of the store is npix (multiple of 128) -> dense vst.
        acc_t = jnp.transpose(acc)                            # (Cout_p, npix)
        o_ref[...] = acc_t[0:Cout, :].reshape(1, Cout, npix).astype(o_ref.dtype)
    else:
        o_ref[...] = acc.reshape(1, tile_h, W, Cout).astype(o_ref.dtype)


# ----------------------------------------------------------------------------
# Tile sizing / VMEM accounting
# ----------------------------------------------------------------------------
def _vmem_bytes(tile_h, W, Cin, Cout_p, out_item, nchw_out):
    """Rough per-step VMEM footprint (lane/sublane padding included)."""
    cin_l = _round_up(Cin, 128)
    cout_l = _round_up(Cout_p, 128)
    k_l = _round_up(9 * Cin, 128)
    npix = tile_h * W
    in_main = _round_up(tile_h, 8) * _round_up(W + 2, 8) * cin_l * 2
    in_halo = 2 * 8 * _round_up(W + 2, 8) * cin_l * 2
    xs = _round_up(tile_h + 2, 8) * _round_up(W + 2, 8) * cin_l * 2
    lhs = tile_h * _round_up(W, 8) * k_l * 2
    wts = _round_up(9 * Cin, 16) * cout_l * 2
    bias = 8 * cout_l * 4
    acc = _round_up(npix, 8) * cout_l * 4
    if nchw_out:
        out_tile = 8 * _round_up(npix, 128) * out_item
    else:
        out_tile = tile_h * _round_up(W, 8) * cout_l * out_item
    # double-buffered in/out blocks, resident weights, scratch, plus slack.
    return (2 * (in_main + in_halo + out_tile) + xs + lhs + 2 * wts + bias
            + 2 * acc + (2 << 20))


def _pick_tile_h(H, W, N, Cin, Cout_p, out_item, nchw_out,
                 target_pix=8192, vmem_budget=20 * 2**20):
    """Largest divisor of H that (a) keeps the out BlockSpec lane-dense for the
    planar output, (b) fits the VMEM budget, (c) targets ~target_pix output
    pixels per step, and (d) gives T>=2 tiles at batch=1 (v7x megacore)."""
    divs = [d for d in range(1, H + 1) if H % d == 0]
    valid = [d for d in divs
             if (not nchw_out) or d == H or (d * W) % 128 == 0]
    if not valid:
        valid = [H]
    fit = [d for d in valid
           if _vmem_bytes(d, W, Cin, Cout_p, out_item, nchw_out) <= vmem_budget]
    pool = fit or valid
    small = [d for d in pool if d * W <= target_pix]
    pool = small or [min(pool)]
    if N == 1:
        multi = [d for d in pool if H // d >= 2]
        pool = multi or pool
    return max(pool)


# ----------------------------------------------------------------------------
# 3x3 / stride-1 / pad-1 conv wrapper
# ----------------------------------------------------------------------------
def _conv3x3_pallas(x_nhwc, w_oihw, bias, alpha=None, apply_prelu=False,
                    out_dtype=None, out_layout="nhwc"):
    """Row-tiled 3x3 conv.  out_layout="nhwc" -> (N,H,W,Cout);
    out_layout="nchw" -> planar (N, Cout, H*W) (reshape to NCHW is free)."""
    N, H, W, Cin = x_nhwc.shape
    Cout = int(w_oihw.shape[0])
    out_dtype = x_nhwc.dtype if out_dtype is None else out_dtype
    out_item = jnp.dtype(out_dtype).itemsize
    nchw_out = (out_layout == "nchw")

    # GEMM channel padding: none for the 4C-output conv (already lane friendly);
    # the 3-channel final conv pads only to 8 (sublane-aligned accumulator /
    # transpose), and only the real channels are ever written to HBM.
    Cout_p = Cout if not nchw_out else max(8, _round_up(Cout, 8))

    tile_h = _pick_tile_h(H, W, N, Cin, Cout_p, out_item, nchw_out)
    T = H // tile_h
    npix = tile_h * W

    # --- glue (layout only): single zero-pad + bf16 cast, no halo duplication.
    x_pad = jnp.pad(x_nhwc, ((0, 0), (1, 1), (1, 1), (0, 0))).astype(jnp.bfloat16)

    # OIHW -> im2col weights (9*Cin, Cout_p), row k = (ky*3+kx)*Cin + ci.
    w2d = jnp.transpose(w_oihw, (2, 3, 1, 0)).reshape(9 * Cin, Cout)
    b2 = bias.reshape(1, Cout)
    if Cout_p != Cout:
        w2d = jnp.pad(w2d, ((0, 0), (0, Cout_p - Cout)))
        b2 = jnp.pad(b2, ((0, 0), (0, Cout_p - Cout)))
    w2d = w2d.astype(jnp.bfloat16)
    b2 = b2.astype(jnp.float32)
    a2 = (alpha if alpha is not None
          else jnp.zeros((), jnp.float32)).reshape(1, 1).astype(jnp.float32)

    kernel = functools.partial(_conv3x3_kernel, apply_prelu=apply_prelu,
                               tile_h=tile_h, W=W, Cin=Cin, Cout=Cout,
                               Cout_p=Cout_p, nchw_out=nchw_out)

    if nchw_out:
        out_shape = jax.ShapeDtypeStruct((N, Cout, H * W), out_dtype)
        out_spec = pl.BlockSpec((1, Cout, npix), lambda n, t: (n, 0, t))
    else:
        out_shape = jax.ShapeDtypeStruct((N, H, W, Cout), out_dtype)
        out_spec = pl.BlockSpec((1, tile_h, W, Cout), lambda n, t: (n, t, 0, 0))

    in_specs = [
        # main tile rows [t*tile_h, t*tile_h+tile_h) of the padded input
        pl.BlockSpec((1, tile_h, W + 2, Cin), lambda n, t: (n, t, 0, 0)),
        # two 1-row halo blocks (block size 1 -> block index == row index)
        pl.BlockSpec((1, 1, W + 2, Cin),
                     lambda n, t: (n, (t + 1) * tile_h, 0, 0)),
        pl.BlockSpec((1, 1, W + 2, Cin),
                     lambda n, t: (n, (t + 1) * tile_h + 1, 0, 0)),
        pl.BlockSpec((9 * Cin, Cout_p), lambda n, t: (0, 0)),
        pl.BlockSpec((1, Cout_p), lambda n, t: (0, 0)),
        pl.BlockSpec(memory_space=pltpu.MemorySpace.SMEM),
    ]
    scratch = [
        pltpu.VMEM((tile_h + 2, W + 2, Cin), jnp.bfloat16),   # halo window
        pltpu.VMEM((tile_h, W, 9 * Cin), jnp.bfloat16),       # im2col LHS
    ]

    est = _vmem_bytes(tile_h, W, Cin, Cout_p, out_item, nchw_out)
    vmem_limit = int(min(48 * 2**20, max(32 * 2**20, 2 * est)))

    # Honest cost model: real Cout, real bytes (halo double-reads negligible).
    flops = 2 * N * H * W * 9 * Cin * Cout
    bytes_accessed = int(N * (H + 2) * (W + 2) * Cin * 2
                         + 9 * Cin * Cout_p * 2
                         + N * H * W * Cout * out_item)

    return pl.pallas_call(
        kernel,
        out_shape=out_shape,
        grid_spec=pltpu.PrefetchScalarGridSpec(
            num_scalar_prefetch=0,
            grid=(N, T),
            in_specs=in_specs,
            out_specs=out_spec,
            scratch_shapes=scratch),
        compiler_params=pltpu.CompilerParams(
            dimension_semantics=("parallel", "parallel"),
            vmem_limit_bytes=vmem_limit),
        cost_estimate=pl.CostEstimate(flops=flops, transcendentals=0,
                                      bytes_accessed=bytes_accessed),
    )(x_pad, x_pad, x_pad, w2d, b2, a2)


# ----------------------------------------------------------------------------
# Glue ops
# ----------------------------------------------------------------------------
def _pixel_shuffle_nhwc(x, r):
    """NHWC PixelShuffle matching torch.nn.PixelShuffle on NCHW channel order."""
    N, H, W, Crr = x.shape
    C = Crr // (r * r)
    x = x.reshape(N, H, W, C, r, r)              # channel ch = c*r*r + i*r + j
    x = jnp.transpose(x, (0, 1, 4, 2, 5, 3))     # (N, H, i, W, j, C)
    return x.reshape(N, H * r, W * r, C)


def srresnet_decoder_forward(x_nchw, params):
    """Forward pass of SRResNetDecoder (in_channels=C, out_channels=3, scale=2)."""
    N = x_nchw.shape[0]
    x = jnp.transpose(x_nchw, (0, 2, 3, 1))      # NCHW -> NHWC
    # upsampling_0: conv(C->4C) + PixelShuffle(2) + PReLU.  PReLU is elementwise
    # with a shared scalar alpha, so fusing it into the conv epilogue (before
    # the shuffle) is equivalent.  bf16 intermediate halves HBM traffic.
    y = _conv3x3_pallas(x, params["up0_w"], params["up0_b"],
                        alpha=params["prelu_a"], apply_prelu=True,
                        out_dtype=jnp.bfloat16, out_layout="nhwc")
    # TODO(synk): fold the PixelShuffle into the first conv's output store; the
    # channel->space interleave needs a lane->sublane relayout inside the kernel.
    y = _pixel_shuffle_nhwc(y, 2)
    # final conv: C -> 3, written planar (N, 3, H2*W2) from inside the kernel;
    # the reshape below is contiguous (no transpose, no channel padding).
    out_flat = _conv3x3_pallas(y, params["conv_w"], params["conv_b"],
                               out_dtype=jnp.float32, out_layout="nchw")
    _, H2, W2, _ = y.shape
    Cout = params["conv_w"].shape[0]
    return out_flat.reshape(N, Cout, H2, W2)     # NCHW


# ----------------------------------------------------------------------------
# Pure-JAX f32 reference (for correctness check)
# ----------------------------------------------------------------------------
def _reference_forward(x_nchw, params):
    def conv(x, w_oihw, b):
        w = jnp.transpose(w_oihw, (2, 3, 1, 0))  # HWIO
        y = jax.lax.conv_general_dilated(
            x, w, (1, 1), "SAME",
            dimension_numbers=("NHWC", "HWIO", "NHWC"),
            precision=jax.lax.Precision.HIGHEST)
        return y + b
    x = jnp.transpose(x_nchw, (0, 2, 3, 1))
    y = conv(x, params["up0_w"], params["up0_b"])
    y = _pixel_shuffle_nhwc(y, 2)
    a = params["prelu_a"]
    y = jnp.where(y >= 0.0, y, a * y)
    y = conv(y, params["conv_w"], params["conv_b"])
    return jnp.transpose(y, (0, 3, 1, 2))


# ----------------------------------------------------------------------------
def _run_check(key, N, C_in, H, W, C_out=3, scale=2, tol=5e-2):
    kx, k1, k2, k3, k4 = jax.random.split(key, 5)
    x = jax.random.normal(kx, (N, C_in, H, W), jnp.float32)
    params = {
        "up0_w": 0.05 * jax.random.normal(
            k1, (C_in * scale * scale, C_in, 3, 3), jnp.float32),
        "up0_b": 0.05 * jax.random.normal(k2, (C_in * scale * scale,),
                                          jnp.float32),
        "prelu_a": jnp.asarray(0.25, jnp.float32),   # nn.PReLU default init
        "conv_w": 0.05 * jax.random.normal(k3, (C_out, C_in, 3, 3), jnp.float32),
        "conv_b": 0.05 * jax.random.normal(k4, (C_out,), jnp.float32),
    }
    out = jax.jit(srresnet_decoder_forward)(x, params)
    out = jax.block_until_ready(out)
    assert out.shape == (N, C_out, H * scale, W * scale), out.shape
    ref = jax.jit(_reference_forward)(x, params)
    max_err = float(jnp.max(jnp.abs(out - ref)))
    # Tolerance sized for bf16 MXU inputs with f32 accumulation vs f32 reference
    # (intentional precision tradeoff).
    assert max_err < tol, f"max abs err too large: {max_err}"


if __name__ == "__main__":
    key = jax.random.PRNGKey(0)
    k_small, k_large = jax.random.split(key)
    # Small shapes consistent with the module (embedding channels, 2x upscale).
    _run_check(k_small, N=2, C_in=32, H=8, W=8)
    # Larger shape: exercises row tiling (T>1 in both convs) at batch=1, where
    # the tile picker forces T>=2 so both v7x TensorCores get work.
    _run_check(k_large, N=1, C_in=32, H=64, W=64)
    print("KERNEL_OK")
</pallas_src>

<mosaic_0001>
module attributes {stable_mosaic.version = 11 : i64} {
  func.func @_conv3x3_kernel(%arg0: i32, %arg1: i32, %arg2: memref<1x8x10x32xbf16, #tpu.memory_space<vmem>>, %arg3: memref<1x1x10x32xbf16, #tpu.memory_space<vmem>>, %arg4: memref<1x1x10x32xbf16, #tpu.memory_space<vmem>>, %arg5: memref<288x128xbf16, #tpu.memory_space<vmem>>, %arg6: memref<1x128xf32, #tpu.memory_space<vmem>>, %arg7: memref<1x1xf32, #tpu.memory_space<smem>>, %arg8: memref<1x8x8x128xbf16, #tpu.memory_space<vmem>>, %arg9: memref<10x10x32xbf16, #tpu.memory_space<vmem>>, %arg10: memref<8x8x288xbf16, #tpu.memory_space<vmem>>) attributes {dimension_semantics = [#tpu.dimension_semantics<parallel>, #tpu.dimension_semantics<parallel>], iteration_bounds = array<i64: 2, 1>, scalar_prefetch = 0 : i64, scratch_operands = 2 : i64, tpu.core_type = #tpu.core_type<tc>, window_params = [{transform_indices = @transform_0, window_bounds = array<i64: 1, 8, 10, 32>}, {transform_indices = @transform_1, window_bounds = array<i64: 1, 1, 10, 32>}, {transform_indices = @transform_2, window_bounds = array<i64: 1, 1, 10, 32>}, {pipeline_mode = #tpu.pipeline_mode<synchronous>, transform_indices = @transform_3, window_bounds = array<i64: 288, 128>}, {pipeline_mode = #tpu.pipeline_mode<synchronous>, transform_indices = @transform_4, window_bounds = array<i64: 1, 128>}, {transform_indices = @transform_5, window_bounds = array<i64: 1, 1>}, {transform_indices = @transform_6, window_bounds = array<i64: 1, 8, 8, 128>}]} {
    %c0 = arith.constant 0 : index
    %c0_0 = arith.constant 0 : index
    %c0_1 = arith.constant 0 : index
    %c0_2 = arith.constant 0 : index
    %0 = vector.load %arg2[%c0, %c0_0, %c0_1, %c0_2] : memref<1x8x10x32xbf16, #tpu.memory_space<vmem>>, vector<1x8x10x32xbf16>
    %1 = vector.shape_cast %0 : vector<1x8x10x32xbf16> to vector<8x10x32xbf16>
    %c0_3 = arith.constant 0 : index
    %c0_4 = arith.constant 0 : index
    %c0_5 = arith.constant 0 : index
    %2 = vector.load %arg9[%c0_3, %c0_4, %c0_5] : memref<10x10x32xbf16, #tpu.memory_space<vmem>>, vector<8x10x32xbf16>
    tpu.vector_store %arg9[%c0_3, %c0_4, %c0_5], %1 {strides = array<i32>} : memref<10x10x32xbf16, #tpu.memory_space<vmem>>, vector<8x10x32xbf16>,
    %c0_6 = arith.constant 0 : index
    %c0_7 = arith.constant 0 : index
    %c0_8 = arith.constant 0 : index
    %c0_9 = arith.constant 0 : index
    %3 = vector.load %arg3[%c0_6, %c0_7, %c0_8, %c0_9] : memref<1x1x10x32xbf16, #tpu.memory_space<vmem>>, vector<1x1x10x32xbf16>
    %4 = vector.shape_cast %3 : vector<1x1x10x32xbf16> to vector<1x10x32xbf16>
    %c8 = arith.constant 8 : index
    %c0_10 = arith.constant 0 : index
    %c0_11 = arith.constant 0 : index
    %5 = vector.load %arg9[%c8, %c0_10, %c0_11] : memref<10x10x32xbf16, #tpu.memory_space<vmem>>, vector<1x10x32xbf16>
    tpu.vector_store %arg9[%c8, %c0_10, %c0_11], %4 {strides = array<i32>} : memref<10x10x32xbf16, #tpu.memory_space<vmem>>, vector<1x10x32xbf16>,
    %c0_12 = arith.constant 0 : index
    %c0_13 = arith.constant 0 : index
    %c0_14 = arith.constant 0 : index
    %c0_15 = arith.constant 0 : index
    %6 = vector.load %arg4[%c0_12, %c0_13, %c0_14, %c0_15] : memref<1x1x10x32xbf16, #tpu.memory_space<vmem>>, vector<1x1x10x32xbf16>
    %7 = vector.shape_cast %6 : vector<1x1x10x32xbf16> to vector<1x10x32xbf16>
    %c9 = arith.constant 9 : index
    %c0_16 = arith.constant 0 : index
    %c0_17 = arith.constant 0 : index
    %8 = vector.load %arg9[%c9, %c0_16, %c0_17] : memref<10x10x32xbf16, #tpu.memory_space<vmem>>, vector<1x10x32xbf16>
    tpu.vector_store %arg9[%c9, %c0_16, %c0_17], %7 {strides = array<i32>} : memref<10x10x32xbf16, #tpu.memory_space<vmem>>, vector<1x10x32xbf16>,
    %c0_18 = arith.constant 0 : index
    %c0_19 = arith.constant 0 : index
    %c0_20 = arith.constant 0 : index
    %9 = vector.load %arg9[%c0_18, %c0_19, %c0_20] : memref<10x10x32xbf16, #tpu.memory_space<vmem>>, vector<8x8x32xbf16>
    %c0_21 = arith.constant 0 : index
    %c0_22 = arith.constant 0 : index
    %c0_23 = arith.constant 0 : index
    %10 = vector.load %arg10[%c0_21, %c0_22, %c0_23] : memref<8x8x288xbf16, #tpu.memory_space<vmem>>, vector<8x8x32xbf16>
    tpu.vector_store %arg10[%c0_21, %c0_22, %c0_23], %9 {strides = array<i32>} : memref<8x8x288xbf16, #tpu.memory_space<vmem>>, vector<8x8x32xbf16>,
    %c0_24 = arith.constant 0 : index
    %c1 = arith.constant 1 : index
    %c0_25 = arith.constant 0 : index
    %11 = vector.load %arg9[%c0_24, %c1, %c0_25] : memref<10x10x32xbf16, #tpu.memory_space<vmem>>, vector<8x8x32xbf16>
    %c0_26 = arith.constant 0 : index
    %c0_27 = arith.constant 0 : index
    %c32 = arith.constant 32 : index
    %12 = vector.load %arg10[%c0_26, %c0_27, %c32] : memref<8x8x288xbf16, #tpu.memory_space<vmem>>, vector<8x8x32xbf16>
    tpu.vector_store %arg10[%c0_26, %c0_27, %c32], %11 {strides = array<i32>} : memref<8x8x288xbf16, #tpu.memory_space<vmem>>, vector<8x8x32xbf16>,
    %c0_28 = arith.constant 0 : index
    %c2 = arith.constant 2 : index
    %c0_29 = arith.constant 0 : index
    %13 = vector.load %arg9[%c0_28, %c2, %c0_29] : memref<10x10x32xbf16, #tpu.memory_space<vmem>>, vector<8x8x32xbf16>
    %c0_30 = arith.constant 0 : index
    %c0_31 = arith.constant 0 : index
    %c64 = arith.constant 64 : index
    %14 = vector.load %arg10[%c0_30, %c0_31, %c64] : memref<8x8x288xbf16, #tpu.memory_space<vmem>>, vector<8x8x32xbf16>
    tpu.vector_store %arg10[%c0_30, %c0_31, %c64], %13 {strides = array<i32>} : memref<8x8x288xbf16, #tpu.memory_space<vmem>>, vector<8x8x32xbf16>,
    %c1_32 = arith.constant 1 : index
    %c0_33 = arith.constant 0 : index
    %c0_34 = arith.constant 0 : index
    %15 = vector.load %arg9[%c1_32, %c0_33, %c0_34] : memref<10x10x32xbf16, #tpu.memory_space<vmem>>, vector<8x8x32xbf16>
    %c0_35 = arith.constant 0 : index
    %c0_36 = arith.constant 0 : index
    %c96 = arith.constant 96 : index
    %16 = vector.load %arg10[%c0_35, %c0_36, %c96] : memref<8x8x288xbf16, #tpu.memory_space<vmem>>, vector<8x8x32xbf16>
    tpu.vector_store %arg10[%c0_35, %c0_36, %c96], %15 {strides = array<i32>} : memref<8x8x288xbf16, #tpu.memory_space<vmem>>, vector<8x8x32xbf16>,
    %c1_37 = arith.constant 1 : index
    %c1_38 = arith.constant 1 : index
    %c0_39 = arith.constant 0 : index
    %17 = vector.load %arg9[%c1_37, %c1_38, %c0_39] : memref<10x10x32xbf16, #tpu.memory_space<vmem>>, vector<8x8x32xbf16>
    %c0_40 = arith.constant 0 : index
    %c0_41 = arith.constant 0 : index
    %c128 = arith.constant 128 : index
    %18 = vector.load %arg10[%c0_40, %c0_41, %c128] : memref<8x8x288xbf16, #tpu.memory_space<vmem>>, vector<8x8x32xbf16>
    tpu.vector_store %arg10[%c0_40, %c0_41, %c128], %17 {strides = array<i32>} : memref<8x8x288xbf16, #tpu.memory_space<vmem>>, vector<8x8x32xbf16>,
    %c1_42 = arith.constant 1 : index
    %c2_43 = arith.constant 2 : index
    %c0_44 = arith.constant 0 : index
    %19 = vector.load %arg9[%c1_42, %c2_43, %c0_44] : memref<10x10x32xbf16, #tpu.memory_space<vmem>>, vector<8x8x32xbf16>
    %c0_45 = arith.constant 0 : index
    %c0_46 = arith.constant 0 : index
    %c160 = arith.constant 160 : index
    %20 = vector.load %arg10[%c0_45, %c0_46, %c160] : memref<8x8x288xbf16, #tpu.memory_space<vmem>>, vector<8x8x32xbf16>
    tpu.vector_store %arg10[%c0_45, %c0_46, %c160], %19 {strides = array<i32>} : memref<8x8x288xbf16, #tpu.memory_space<vmem>>, vector<8x8x32xbf16>,
    %c2_47 = arith.constant 2 : index
    %c0_48 = arith.constant 0 : index
    %c0_49 = arith.constant 0 : index
    %21 = vector.load %arg9[%c2_47, %c0_48, %c0_49] : memref<10x10x32xbf16, #tpu.memory_space<vmem>>, vector<8x8x32xbf16>
    %c0_50 = arith.constant 0 : index
    %c0_51 = arith.constant 0 : index
    %c192 = arith.constant 192 : index
    %22 = vector.load %arg10[%c0_50, %c0_51, %c192] : memref<8x8x288xbf16, #tpu.memory_space<vmem>>, vector<8x8x32xbf16>
    tpu.vector_store %arg10[%c0_50, %c0_51, %c192], %21 {strides = array<i32>} : memref<8x8x288xbf16, #tpu.memory_space<vmem>>, vector<8x8x32xbf16>,
    %c2_52 = arith.constant 2 : index
    %c1_53 = arith.constant 1 : index
    %c0_54 = arith.constant 0 : index
    %23 = vector.load %arg9[%c2_52, %c1_53, %c0_54] : memref<10x10x32xbf16, #tpu.memory_space<vmem>>, vector<8x8x32xbf16>
    %c0_55 = arith.constant 0 : index
    %c0_56 = arith.constant 0 : index
    %c224 = arith.constant 224 : index
    %24 = vector.load %arg10[%c0_55, %c0_56, %c224] : memref<8x8x288xbf16, #tpu.memory_space<vmem>>, vector<8x8x32xbf16>
    tpu.vector_store %arg10[%c0_55, %c0_56, %c224], %23 {strides = array<i32>} : memref<8x8x288xbf16, #tpu.memory_space<vmem>>, vector<8x8x32xbf16>,
    %c2_57 = arith.constant 2 : index
    %c2_58 = arith.constant 2 : index
    %c0_59 = arith.constant 0 : index
    %25 = vector.load %arg9[%c2_57, %c2_58, %c0_59] : memref<10x10x32xbf16, #tpu.memory_space<vmem>>, vector<8x8x32xbf16>
    %c0_60 = arith.constant 0 : index
    %c0_61 = arith.constant 0 : index
    %c256 = arith.constant 256 : index
    %26 = vector.load %arg10[%c0_60, %c0_61, %c256] : memref<8x8x288xbf16, #tpu.memory_space<vmem>>, vector<8x8x32xbf16>
    tpu.vector_store %arg10[%c0_60, %c0_61, %c256], %25 {strides = array<i32>} : memref<8x8x288xbf16, #tpu.memory_space<vmem>>, vector<8x8x32xbf16>,
    %c0_62 = arith.constant 0 : index
    %c0_63 = arith.constant 0 : index
    %c0_64 = arith.constant 0 : index
    %27 = vector.load %arg10[%c0_62, %c0_63, %c0_64] : memref<8x8x288xbf16, #tpu.memory_space<vmem>>, vector<8x8x288xbf16>
    %28 = vector.shape_cast %27 : vector<8x8x288xbf16> to vector<64x288xbf16>
    %c0_65 = arith.constant 0 : index
    %c0_66 = arith.constant 0 : index
    %29 = vector.load %arg5[%c0_65, %c0_66] : memref<288x128xbf16, #tpu.memory_space<vmem>>, vector<288x128xbf16>
    %cst = arith.constant dense<0.000000e+00> : vector<64x128xf32>
    %30 = tpu.matmul %28, %29, %cst {dimension_numbers = #tpu.dot_dimension_numbers<[1], [0], [0], [1], [0, 0, 1, 1], [], []>} : vector<64x288xbf16>, vector<288x128xbf16>, vector<64x128xf32> -> vector<64x128xf32>
    %c0_67 = arith.constant 0 : index
    %c0_68 = arith.constant 0 : index
    %31 = vector.load %arg6[%c0_67, %c0_68] : memref<1x128xf32, #tpu.memory_space<vmem>>, vector<1x128xf32>
    %32 = vector.broadcast %31 : vector<1x128xf32> to vector<64x128xf32>
    %33 = arith.addf %30, %32 : vector<64x128xf32>
    %c0_69 = arith.constant 0 : index
    %c0_70 = arith.constant 0 : index
    %34 = memref.load %arg7[%c0_69, %c0_70] : memref<1x1xf32, #tpu.memory_space<smem>>
    %cst_71 = arith.constant 0.000000e+00 : f32
    %35 = vector.broadcast %cst_71 : f32 to vector<64x128xf32>
    %36 = arith.cmpf oge, %33, %35 : vector<64x128xf32>
    %37 = vector.broadcast %34 : f32 to vector<64x128xf32>
    %38 = arith.mulf %37, %33 : vector<64x128xf32>
    %39 = arith.select %36, %33, %38 : vector<64x128xi1>, vector<64x128xf32>
    %40 = vector.shape_cast %39 : vector<64x128xf32> to vector<1x8x8x128xf32>
    %41 = arith.truncf %40 : vector<1x8x8x128xf32> to vector<1x8x8x128xbf16>
    %c0_72 = arith.constant 0 : index
    %c0_73 = arith.constant 0 : index
    %c0_74 = arith.constant 0 : index
    %c0_75 = arith.constant 0 : index
    %42 = vector.load %arg8[%c0_72, %c0_73, %c0_74, %c0_75] : memref<1x8x8x128xbf16, #tpu.memory_space<vmem>>, vector<1x8x8x128xbf16>
    tpu.vector_store %arg8[%c0_72, %c0_73, %c0_74, %c0_75], %41 {strides = array<i32>} : memref<1x8x8x128xbf16, #tpu.memory_space<vmem>>, vector<1x8x8x128xbf16>,
    return
  }
  func.func @transform_0(%arg0: i32, %arg1: i32) -> (i32, i32, i32, i32) {
    %c0_i32 = arith.constant 0 : i32
    %c0_i32_0 = arith.constant 0 : i32
    %c0_i32_1 = arith.constant 0 : i32
    return %arg0, %arg1, %c0_i32, %c0_i32_0 : i32, i32, i32, i32
  }
  func.func @transform_1(%arg0: i32, %arg1: i32) -> (i32, i32, i32, i32) {
    %c1_i32 = arith.constant 1 : i32
    %0 = arith.addi %arg1, %c1_i32 : i32
    %c8_i32 = arith.constant 8 : i32
    %1 = arith.muli %0, %c8_i32 : i32
    %c0_i32 = arith.constant 0 : i32
    %c0_i32_0 = arith.constant 0 : i32
    %c0_i32_1 = arith.constant 0 : i32
    return %arg0, %1, %c0_i32, %c0_i32_0 : i32, i32, i32, i32
  }
  func.func @transform_2(%arg0: i32, %arg1: i32) -> (i32, i32, i32, i32) {
    %c1_i32 = arith.constant 1 : i32
    %0 = arith.addi %arg1, %c1_i32 : i32
    %c8_i32 = arith.constant 8 : i32
    %1 = arith.muli %0, %c8_i32 : i32
    %c1_i32_0 = arith.constant 1 : i32
    %2 = arith.addi %1, %c1_i32_0 : i32
    %c0_i32 = arith.constant 0 : i32
    %c0_i32_1 = arith.constant 0 : i32
    %c0_i32_2 = arith.constant 0 : i32
    return %arg0, %2, %c0_i32, %c0_i32_1 : i32, i32, i32, i32
  }
  func.func @transform_3(%arg0: i32, %arg1: i32) -> (i32, i32) {
    %c0_i32 = arith.constant 0 : i32
    %c0_i32_0 = arith.constant 0 : i32
    %c0_i32_1 = arith.constant 0 : i32
    return %c0_i32, %c0_i32_0 : i32, i32
  }
  func.func @transform_4(%arg0: i32, %arg1: i32) -> (i32, i32) {
    %c0_i32 = arith.constant 0 : i32
    %c0_i32_0 = arith.constant 0 : i32
    %c0_i32_1 = arith.constant 0 : i32
    return %c0_i32, %c0_i32_0 : i32, i32
  }
  func.func @transform_5(%arg0: i32, %arg1: i32) -> (i32, i32) {
    %c0_i32 = arith.constant 0 : i32
    %c0_i32_0 = arith.constant 0 : i32
    %c0_i32_1 = arith.constant 0 : i32
    return %c0_i32, %c0_i32_0 : i32, i32
  }
  func.func @transform_6(%arg0: i32, %arg1: i32) -> (i32, i32, i32, i32) {
    %c0_i32 = arith.constant 0 : i32
    %c0_i32_0 = arith.constant 0 : i32
    %c0_i32_1 = arith.constant 0 : i32
    return %arg0, %arg1, %c0_i32, %c0_i32_0 : i32, i32, i32, i32
  }
}

module attributes {stable_mosaic.version = 11 : i64} {
  func.func @_conv3x3_kernel(%arg0: i32, %arg1: i32, %arg2: memref<1x16x18x32xbf16, #tpu.memory_space<vmem>>, %arg3: memref<1x1x18x32xbf16, #tpu.memory_space<vmem>>, %arg4: memref<1x1x18x32xbf16, #tpu.memory_space<vmem>>, %arg5: memref<288x8xbf16, #tpu.memory_space<vmem>>, %arg6: memref<1x8xf32, #tpu.memory_space<vmem>>, %arg7: memref<1x1xf32, #tpu.memory_space<smem>>, %arg8: memref<1x3x256xf32, #tpu.memory_space<vmem>>, %arg9: memref<18x18x32xbf16, #tpu.memory_space<vmem>>, %arg10: memref<16x16x288xbf16, #tpu.memory_space<vmem>>) attributes {dimension_semantics = [#tpu.dimension_semantics<parallel>, #tpu.dimension_semantics<parallel>], iteration_bounds = array<i64: 2, 1>, scalar_prefetch = 0 : i64, scratch_operands = 2 : i64, tpu.core_type = #tpu.core_type<tc>, window_params = [{transform_indices = @transform_0, window_bounds = array<i64: 1, 16, 18, 32>}, {transform_indices = @transform_1, window_bounds = array<i64: 1, 1, 18, 32>}, {transform_indices = @transform_2, window_bounds = array<i64: 1, 1, 18, 32>}, {pipeline_mode = #tpu.pipeline_mode<synchronous>, transform_indices = @transform_3, window_bounds = array<i64: 288, 8>}, {pipeline_mode = #tpu.pipeline_mode<synchronous>, transform_indices = @transform_4, window_bounds = array<i64: 1, 8>}, {transform_indices = @transform_5, window_bounds = array<i64: 1, 1>}, {transform_indices = @transform_6, window_bounds = array<i64: 1, 3, 256>}]} {
    %c0 = arith.constant 0 : index
    %c0_0 = arith.constant 0 : index
    %c0_1 = arith.constant 0 : index
    %c0_2 = arith.constant 0 : index
    %0 = vector.load %arg2[%c0, %c0_0, %c0_1, %c0_2] : memref<1x16x18x32xbf16, #tpu.memory_space<vmem>>, vector<1x16x18x32xbf16>
    %1 = vector.shape_cast %0 : vector<1x16x18x32xbf16> to vector<16x18x32xbf16>
    %c0_3 = arith.constant 0 : index
    %c0_4 = arith.constant 0 : index
    %c0_5 = arith.constant 0 : index
    %2 = vector.load %arg9[%c0_3, %c0_4, %c0_5] : memref<18x18x32xbf16, #tpu.memory_space<vmem>>, vector<16x18x32xbf16>
    tpu.vector_store %arg9[%c0_3, %c0_4, %c0_5], %1 {strides = array<i32>} : memref<18x18x32xbf16, #tpu.memory_space<vmem>>, vector<16x18x32xbf16>,
    %c0_6 = arith.constant 0 : index
    %c0_7 = arith.constant 0 : index
    %c0_8 = arith.constant 0 : index
    %c0_9 = arith.constant 0 : index
    %3 = vector.load %arg3[%c0_6, %c0_7, %c0_8, %c0_9] : memref<1x1x18x32xbf16, #tpu.memory_space<vmem>>, vector<1x1x18x32xbf16>
    %4 = vector.shape_cast %3 : vector<1x1x18x32xbf16> to vector<1x18x32xbf16>
    %c16 = arith.constant 16 : index
    %c0_10 = arith.constant 0 : index
    %c0_11 = arith.constant 0 : index
    %5 = vector.load %arg9[%c16, %c0_10, %c0_11] : memref<18x18x32xbf16, #tpu.memory_space<vmem>>, vector<1x18x32xbf16>
    tpu.vector_store %arg9[%c16, %c0_10, %c0_11], %4 {strides = array<i32>} : memref<18x18x32xbf16, #tpu.memory_space<vmem>>, vector<1x18x32xbf16>,
    %c0_12 = arith.constant 0 : index
    %c0_13 = arith.constant 0 : index
    %c0_14 = arith.constant 0 : index
    %c0_15 = arith.constant 0 : index
    %6 = vector.load %arg4[%c0_12, %c0_13, %c0_14, %c0_15] : memref<1x1x18x32xbf16, #tpu.memory_space<vmem>>, vector<1x1x18x32xbf16>
    %7 = vector.shape_cast %6 : vector<1x1x18x32xbf16> to vector<1x18x32xbf16>
    %c17 = arith.constant 17 : index
    %c0_16 = arith.constant 0 : index
    %c0_17 = arith.constant 0 : index
    %8 = vector.load %arg9[%c17, %c0_16, %c0_17] : memref<18x18x32xbf16, #tpu.memory_space<vmem>>, vector<1x18x32xbf16>
    tpu.vector_store %arg9[%c17, %c0_16, %c0_17], %7 {strides = array<i32>} : memref<18x18x32xbf16, #tpu.memory_space<vmem>>, vector<1x18x32xbf16>,
    %c0_18 = arith.constant 0 : index
    %c0_19 = arith.constant 0 : index
    %c0_20 = arith.constant 0 : index
    %9 = vector.load %arg9[%c0_18, %c0_19, %c0_20] : memref<18x18x32xbf16, #tpu.memory_space<vmem>>, vector<16x16x32xbf16>
    %c0_21 = arith.constant 0 : index
    %c0_22 = arith.constant 0 : index
    %c0_23 = arith.constant 0 : index
    %10 = vector.load %arg10[%c0_21, %c0_22, %c0_23] : memref<16x16x288xbf16, #tpu.memory_space<vmem>>, vector<16x16x32xbf16>
    tpu.vector_store %arg10[%c0_21, %c0_22, %c0_23], %9 {strides = array<i32>} : memref<16x16x288xbf16, #tpu.memory_space<vmem>>, vector<16x16x32xbf16>,
    %c0_24 = arith.constant 0 : index
    %c1 = arith.constant 1 : index
    %c0_25 = arith.constant 0 : index
    %11 = vector.load %arg9[%c0_24, %c1, %c0_25] : memref<18x18x32xbf16, #tpu.memory_space<vmem>>, vector<16x16x32xbf16>
    %c0_26 = arith.constant 0 : index
    %c0_27 = arith.constant 0 : index
    %c32 = arith.constant 32 : index
    %12 = vector.load %arg10[%c0_26, %c0_27, %c32] : memref<16x16x288xbf16, #tpu.memory_space<vmem>>, vector<16x16x32xbf16>
    tpu.vector_store %arg10[%c0_26, %c0_27, %c32], %11 {strides = array<i32>} : memref<16x16x288xbf16, #tpu.memory_space<vmem>>, vector<16x16x32xbf16>,
    %c0_28 = arith.constant 0 : index
    %c2 = arith.constant 2 : index
    %c0_29 = arith.constant 0 : index
    %13 = vector.load %arg9[%c0_28, %c2, %c0_29] : memref<18x18x32xbf16, #tpu.memory_space<vmem>>, vector<16x16x32xbf16>
    %c0_30 = arith.constant 0 : index
    %c0_31 = arith.constant 0 : index
    %c64 = arith.constant 64 : index
    %14 = vector.load %arg10[%c0_30, %c0_31, %c64] : memref<16x16x288xbf16, #tpu.memory_space<vmem>>, vector<16x16x32xbf16>
    tpu.vector_store %arg10[%c0_30, %c0_31, %c64], %13 {strides = array<i32>} : memref<16x16x288xbf16, #tpu.memory_space<vmem>>, vector<16x16x32xbf16>,
    %c1_32 = arith.constant 1 : index
    %c0_33 = arith.constant 0 : index
    %c0_34 = arith.constant 0 : index
    %15 = vector.load %arg9[%c1_32, %c0_33, %c0_34] : memref<18x18x32xbf16, #tpu.memory_space<vmem>>, vector<16x16x32xbf16>
    %c0_35 = arith.constant 0 : index
    %c0_36 = arith.constant 0 : index
    %c96 = arith.constant 96 : index
    %16 = vector.load %arg10[%c0_35, %c0_36, %c96] : memref<16x16x288xbf16, #tpu.memory_space<vmem>>, vector<16x16x32xbf16>
    tpu.vector_store %arg10[%c0_35, %c0_36, %c96], %15 {strides = array<i32>} : memref<16x16x288xbf16, #tpu.memory_space<vmem>>, vector<16x16x32xbf16>,
    %c1_37 = arith.constant 1 : index
    %c1_38 = arith.constant 1 : index
    %c0_39 = arith.constant 0 : index
    %17 = vector.load %arg9[%c1_37, %c1_38, %c0_39] : memref<18x18x32xbf16, #tpu.memory_space<vmem>>, vector<16x16x32xbf16>
    %c0_40 = arith.constant 0 : index
    %c0_41 = arith.constant 0 : index
    %c128 = arith.constant 128 : index
    %18 = vector.load %arg10[%c0_40, %c0_41, %c128] : memref<16x16x288xbf16, #tpu.memory_space<vmem>>, vector<16x16x32xbf16>
    tpu.vector_store %arg10[%c0_40, %c0_41, %c128], %17 {strides = array<i32>} : memref<16x16x288xbf16, #tpu.memory_space<vmem>>, vector<16x16x32xbf16>,
    %c1_42 = arith.constant 1 : index
    %c2_43 = arith.constant 2 : index
    %c0_44 = arith.constant 0 : index
    %19 = vector.load %arg9[%c1_42, %c2_43, %c0_44] : memref<18x18x32xbf16, #tpu.memory_space<vmem>>, vector<16x16x32xbf16>
    %c0_45 = arith.constant 0 : index
    %c0_46 = arith.constant 0 : index
    %c160 = arith.constant 160 : index
    %20 = vector.load %arg10[%c0_45, %c0_46, %c160] : memref<16x16x288xbf16, #tpu.memory_space<vmem>>, vector<16x16x32xbf16>
    tpu.vector_store %arg10[%c0_45, %c0_46, %c160], %19 {strides = array<i32>} : memref<16x16x288xbf16, #tpu.memory_space<vmem>>, vector<16x16x32xbf16>,
    %c2_47 = arith.constant 2 : index
    %c0_48 = arith.constant 0 : index
    %c0_49 = arith.constant 0 : index
    %21 = vector.load %arg9[%c2_47, %c0_48, %c0_49] : memref<18x18x32xbf16, #tpu.memory_space<vmem>>, vector<16x16x32xbf16>
    %c0_50 = arith.constant 0 : index
    %c0_51 = arith.constant 0 : index
    %c192 = arith.constant 192 : index
    %22 = vector.load %arg10[%c0_50, %c0_51, %c192] : memref<16x16x288xbf16, #tpu.memory_space<vmem>>, vector<16x16x32xbf16>
    tpu.vector_store %arg10[%c0_50, %c0_51, %c192], %21 {strides = array<i32>} : memref<16x16x288xbf16, #tpu.memory_space<vmem>>, vector<16x16x32xbf16>,
    %c2_52 = arith.constant 2 : index
    %c1_53 = arith.constant 1 : index
    %c0_54 = arith.constant 0 : index
    %23 = vector.load %arg9[%c2_52, %c1_53, %c0_54] : memref<18x18x32xbf16, #tpu.memory_space<vmem>>, vector<16x16x32xbf16>
    %c0_55 = arith.constant 0 : index
    %c0_56 = arith.constant 0 : index
    %c224 = arith.constant 224 : index
    %24 = vector.load %arg10[%c0_55, %c0_56, %c224] : memref<16x16x288xbf16, #tpu.memory_space<vmem>>, vector<16x16x32xbf16>
    tpu.vector_store %arg10[%c0_55, %c0_56, %c224], %23 {strides = array<i32>} : memref<16x16x288xbf16, #tpu.memory_space<vmem>>, vector<16x16x32xbf16>,
    %c2_57 = arith.constant 2 : index
    %c2_58 = arith.constant 2 : index
    %c0_59 = arith.constant 0 : index
    %25 = vector.load %arg9[%c2_57, %c2_58, %c0_59] : memref<18x18x32xbf16, #tpu.memory_space<vmem>>, vector<16x16x32xbf16>
    %c0_60 = arith.constant 0 : index
    %c0_61 = arith.constant 0 : index
    %c256 = arith.constant 256 : index
    %26 = vector.load %arg10[%c0_60, %c0_61, %c256] : memref<16x16x288xbf16, #tpu.memory_space<vmem>>, vector<16x16x32xbf16>
    tpu.vector_store %arg10[%c0_60, %c0_61, %c256], %25 {strides = array<i32>} : memref<16x16x288xbf16, #tpu.memory_space<vmem>>, vector<16x16x32xbf16>,
    %c0_62 = arith.constant 0 : index
    %c0_63 = arith.constant 0 : index
    %c0_64 = arith.constant 0 : index
    %27 = vector.load %arg10[%c0_62, %c0_63, %c0_64] : memref<16x16x288xbf16, #tpu.memory_space<vmem>>, vector<16x16x288xbf16>
    %28 = vector.shape_cast %27 : vector<16x16x288xbf16> to vector<256x288xbf16>
    %c0_65 = arith.constant 0 : index
    %c0_66 = arith.constant 0 : index
    %29 = vector.load %arg5[%c0_65, %c0_66] : memref<288x8xbf16, #tpu.memory_space<vmem>>, vector<288x8xbf16>
    %cst = arith.constant dense<0.000000e+00> : vector<256x8xf32>
    %30 = tpu.matmul %28, %29, %cst {dimension_numbers = #tpu.dot_dimension_numbers<[1], [0], [0], [1], [0, 0, 1, 1], [], []>} : vector<256x288xbf16>, vector<288x8xbf16>, vector<256x8xf32> -> vector<256x8xf32>
    %c0_67 = arith.constant 0 : index
    %c0_68 = arith.constant 0 : index
    %31 = vector.load %arg6[%c0_67, %c0_68] : memref<1x8xf32, #tpu.memory_space<vmem>>, vector<1x8xf32>
    %32 = vector.broadcast %31 : vector<1x8xf32> to vector<256x8xf32>
    %33 = arith.addf %30, %32 : vector<256x8xf32>
    %34 = tpu.transpose %33, [1, 0] : vector<256x8xf32> -> vector<8x256xf32>
    %35 = vector.extract_strided_slice %34 {offsets = [0, 0], sizes = [3, 256], strides = [1, 1]} : vector<8x256xf32> to vector<3x256xf32>
    %36 = vector.shape_cast %35 : vector<3x256xf32> to vector<1x3x256xf32>
    %c0_69 = arith.constant 0 : index
    %c0_70 = arith.constant 0 : index
    %c0_71 = arith.constant 0 : index
    %37 = vector.load %arg8[%c0_69, %c0_70, %c0_71] : memref<1x3x256xf32, #tpu.memory_space<vmem>>, vector<1x3x256xf32>
    tpu.vector_store %arg8[%c0_69, %c0_70, %c0_71], %36 {strides = array<i32>} : memref<1x3x256xf32, #tpu.memory_space<vmem>>, vector<1x3x256xf32>,
    return
  }
  func.func @transform_0(%arg0: i32, %arg1: i32) -> (i32, i32, i32, i32) {
    %c0_i32 = arith.constant 0 : i32
    %c0_i32_0 = arith.constant 0 : i32
    %c0_i32_1 = arith.constant 0 : i32
    return %arg0, %arg1, %c0_i32, %c0_i32_0 : i32, i32, i32, i32
  }
  func.func @transform_1(%arg0: i32, %arg1: i32) -> (i32, i32, i32, i32) {
    %c1_i32 = arith.constant 1 : i32
    %0 = arith.addi %arg1, %c1_i32 : i32
    %c16_i32 = arith.constant 16 : i32
    %1 = arith.muli %0, %c16_i32 : i32
    %c0_i32 = arith.constant 0 : i32
    %c0_i32_0 = arith.constant 0 : i32
    %c0_i32_1 = arith.constant 0 : i32
    return %arg0, %1, %c0_i32, %c0_i32_0 : i32, i32, i32, i32
  }
  func.func @transform_2(%arg0: i32, %arg1: i32) -> (i32, i32, i32, i32) {
    %c1_i32 = arith.constant 1 : i32
    %0 = arith.addi %arg1, %c1_i32 : i32
    %c16_i32 = arith.constant 16 : i32
    %1 = arith.muli %0, %c16_i32 : i32
    %c1_i32_0 = arith.constant 1 : i32
    %2 = arith.addi %1, %c1_i32_0 : i32
    %c0_i32 = arith.constant 0 : i32
    %c0_i32_1 = arith.constant 0 : i32
    %c0_i32_2 = arith.constant 0 : i32
    return %arg0, %2, %c0_i32, %c0_i32_1 : i32, i32, i32, i32
  }
  func.func @transform_3(%arg0: i32, %arg1: i32) -> (i32, i32) {
    %c0_i32 = arith.constant 0 : i32
    %c0_i32_0 = arith.constant 0 : i32
    %c0_i32_1 = arith.constant 0 : i32
    return %c0_i32, %c0_i32_0 : i32, i32
  }
  func.func @transform_4(%arg0: i32, %arg1: i32) -> (i32, i32) {
    %c0_i32 = arith.constant 0 : i32
    %c0_i32_0 = arith.constant 0 : i32
    %c0_i32_1 = arith.constant 0 : i32
    return %c0_i32, %c0_i32_0 : i32, i32
  }
  func.func @transform_5(%arg0: i32, %arg1: i32) -> (i32, i32) {
    %c0_i32 = arith.constant 0 : i32
    %c0_i32_0 = arith.constant 0 : i32
    %c0_i32_1 = arith.constant 0 : i32
    return %c0_i32, %c0_i32_0 : i32, i32
  }
  func.func @transform_6(%arg0: i32, %arg1: i32) -> (i32, i32, i32) {
    %c0_i32 = arith.constant 0 : i32
    %c0_i32_0 = arith.constant 0 : i32
    return %arg0, %c0_i32, %arg1 : i32, i32, i32
  }
}

</mosaic_0001>

<llo_original>
// kernel: srresnet_decoder_forward.2
$region0: #{srresnet_decoder_forward.2}
  #allocation0 [shape = 'u32[]', space=smem, size = 0x4, offset = 0x4, fixed_abs, tag = 'smem constant byte address 0x4 - core index']
  #allocation1 [shape = 'u32[144,128]{1,0:T(1,128)}', space=vmem, size = 0x12000, scoped, tag = 'internal scratch']
  #allocation2 [shape = 'bf16[10,10,32]{2,1,0:T(8,128)(2,1)}', space=vmem, size = 0xa000, scoped, tag = 'scratch operand']
  #allocation3 [shape = 'bf16[8,8,288]{2,1,0:T(8,128)(2,1)}', space=vmem, size = 0xc000, scoped, tag = 'scratch operand']
  #allocation4 [shape = 'f32[1,1]{1,0:T(1,128)S(6)}', space=smem, size = 0x200, scoped, tag = 'scoped memory for srresnet_decoder_forward.2']
  %s0 = inlined_call_operand.vmem [shape: bf16[2,10,10,32], index: 0, kind: input, shape index: {}, may-alias: {0,1,2}]
  %s1 = inlined_call_operand.vmem [shape: bf16[2,10,10,32], index: 1, kind: input, shape index: {}, may-alias: {0,1,2}]
  %s2 = inlined_call_operand.vmem [shape: bf16[2,10,10,32], index: 2, kind: input, shape index: {}, may-alias: {0,1,2}]
  %s3 = inlined_call_operand.vmem [shape: bf16[288,128], index: 3, kind: input, shape index: {}]
  %s4 = inlined_call_operand.vmem [shape: f32[1,128], index: 4, kind: input, shape index: {}]
  %s5 = inlined_call_operand.<no memory space> [shape: f32[1,1], index: 5, kind: input, shape index: {}]
  %s6 = inlined_call_operand.vmem [shape: bf16[2,8,8,128], index: 6, kind: output, shape index: {}]
  %s7 = sld [smem:[#allocation0]]
  $region57: #{srresnet_decoder_forward.2} parent=0
    _
  %s9 = ssub.s32 1, %s7
  %s10 = scalar_select 0, %s9, %s7
  %11 = sst [smem:[#allocation4]] %s5
  loop: start=0, step=1, limit=4
  $region2: #{srresnet_decoder_forward.2} parent=0 // loop_pre_header
    _
  $region3: #{srresnet_decoder_forward.2} parent=0 // loop_header
    %s13 = sphi 0, %s17
    %p14 = scmp.ge.s32.totalorder %s13, 4
    %s20 = sphi 0, %s32
    %s21 = sphi 0, %s28
    %s22 = sphi 0, %s20
    %s23 = sphi 0, %s21
    %s24 = sphi 0, %s22
    %s25 = sphi 0, %s23
    %s37 = sphi 0, %s39
    %s40 = sphi 0, %s37
    %s41 = sphi 0, %s40
    %s57 = sphi 0, %s41
    %s69 = sphi 0, %s71
    %s72 = sphi 0, %s69
    %s73 = sphi 0, %s72
    %s89 = sphi 0, %s73
    %s103 = sphi 0, %s105
    %s106 = sphi 0, %s103
    %s107 = sphi 0, %s106
    %s123 = sphi 0, %s107
    %s127 = sphi 0, %s127
    %s129 = sphi 0, %s127
    %s130 = sphi 0, %s129
    %s144 = sphi 0, %s130
    %s148 = sphi 0, %s148
    %s150 = sphi 0, %s148
    %s151 = sphi 0, %s150
    %s165 = sphi 0, %s151
    %s169 = sphi 0, %s169
    %s171 = sphi 0, %s169
    %s172 = sphi 0, %s171
    %s186 = sphi 0, %s172
    %s194 = sphi 0, %s196
    %s197 = sphi 0, %s194
    %s198 = sphi 0, %s197
    %s214 = sphi 0, %s198
  $region4: #{srresnet_decoder_forward.2} parent=0 // loop_header_branch
    %16 = sbr.rel (%p14) target = $region8
  $region5: #{srresnet_decoder_forward.2} parent=0 // loop_body
    %s18 = ssub.s32 %s13, 1
    %s19 = ssub.s32 %s13, 2
    %s26 = sadd.s32 1, %s21
    %p27 = scmp.ge.s32.totalorder %s26, 1
    %s28 = scalar_select %p27, 0, %s26
    %s29 = sadd.s32 1, %s20
    %s30 = scalar_select %p27, %s29, %s20
    %p31 = scmp.ge.s32.totalorder %s30, 2
    %s32 = scalar_select %p31, 0, %s30
    %s33 = ssub.s32 %s20, %s32
    %s34 = ssub.s32 %s21, %s28
    %s35 = sor.u32 %s33, %s34
    %p36 = scmp.eq.s32.totalorder %s35, 0
    %s38 = sadd.s32 %s37, 1
    %s39 = scalar_select %p36, %s37, %s38
    %p42 = pneg %p36
    %p43 = scmp.eq.s32.totalorder %s13, 1
    %p44 = por %p42, %p43
    %p45 = scmp.ne.s32.totalorder %s37, %s40
    %p46 = scmp.eq.s32.totalorder %s13, 0
    %p47 = por %p45, %p46
    %p48 = scmp.ne.s32.totalorder %s37, %s40
    %p49 = scmp.eq.s32.totalorder %s18, 1
    %p50 = por %p48, %p49
    %p51 = scmp.ne.s32.totalorder %s40, %s41
    %p52 = scmp.eq.s32.totalorder %s18, 0
    %p53 = por %p51, %p52
    %p54 = scmp.ne.s32.totalorder %s40, %s41
    %p55 = scmp.eq.s32.totalorder %s19, 1
    %p56 = por %p54, %p55
    %p58 = scmp.ne.s32.totalorder %s41, %s57
    %p59 = scmp.eq.s32.totalorder %s19, 0
    %p60 = por %p58, %p59
    %s61 = sadd.s32 %s21, 1
    %s62 = smul.u32 %s61, 8
    %s63 = sadd.s32 %s28, 1
    %s64 = smul.u32 %s63, 8
    %s65 = ssub.s32 %s20, %s32
    %s66 = ssub.s32 %s62, %s64
    %s67 = sor.u32 %s65, %s66
    %p68 = scmp.eq.s32.totalorder %s67, 0
    %s70 = sadd.s32 %s69, 1
    %s71 = scalar_select %p68, %s69, %s70
    %p74 = pneg %p68
    %p75 = scmp.eq.s32.totalorder %s13, 1
    %p76 = por %p74, %p75
    %p77 = scmp.ne.s32.totalorder %s69, %s72
    %p78 = scmp.eq.s32.totalorder %s13, 0
    %p79 = por %p77, %p78
    %p80 = scmp.ne.s32.totalorder %s69, %s72
    %p81 = scmp.eq.s32.totalorder %s18, 1
    %p82 = por %p80, %p81
    %p83 = scmp.ne.s32.totalorder %s72, %s73
    %p84 = scmp.eq.s32.totalorder %s18, 0
    %p85 = por %p83, %p84
    %p86 = scmp.ne.s32.totalorder %s72, %s73
    %p87 = scmp.eq.s32.totalorder %s19, 1
    %p88 = por %p86, %p87
    %p90 = scmp.ne.s32.totalorder %s73, %s89
    %p91 = scmp.eq.s32.totalorder %s19, 0
    %p92 = por %p90, %p91
    %s93 = sadd.s32 %s21, 1
    %s94 = smul.u32 %s93, 8
    %s95 = sadd.s32 %s94, 1
    %s96 = sadd.s32 %s28, 1
    %s97 = smul.u32 %s96, 8
    %s98 = sadd.s32 %s97, 1
    %s99 = ssub.s32 %s20, %s32
    %s100 = ssub.s32 %s95, %s98
    %s101 = sor.u32 %s99, %s100
    %p102 = scmp.eq.s32.totalorder %s101, 0
    %s104 = sadd.s32 %s103, 1
    %s105 = scalar_select %p102, %s103, %s104
    %p108 = pneg %p102
    %p109 = scmp.eq.s32.totalorder %s13, 1
    %p110 = por %p108, %p109
    %p111 = scmp.ne.s32.totalorder %s103, %s106
    %p112 = scmp.eq.s32.totalorder %s13, 0
    %p113 = por %p111, %p112
    %p114 = scmp.ne.s32.totalorder %s103, %s106
    %p115 = scmp.eq.s32.totalorder %s18, 1
    %p116 = por %p114, %p115
    %p117 = scmp.ne.s32.totalorder %s106, %s107
    %p118 = scmp.eq.s32.totalorder %s18, 0
    %p119 = por %p117, %p118
    %p120 = scmp.ne.s32.totalorder %s106, %s107
    %p121 = scmp.eq.s32.totalorder %s19, 1
    %p122 = por %p120, %p121
    %p124 = scmp.ne.s32.totalorder %s107, %s123
    %p125 = scmp.eq.s32.totalorder %s19, 0
    %p126 = por %p124, %p125
    %s128 = sadd.s32 %s127, 1
    %p131 = scmp.eq.s32.totalorder %s13, 1
    %p132 = scmp.ne.s32.totalorder %s127, %s129
    %p133 = scmp.eq.s32.totalorder %s13, 0
    %p134 = por %p132, %p133
    %p135 = scmp.ne.s32.totalorder %s127, %s129
    %p136 = scmp.eq.s32.totalorder %s18, 1
    %p137 = por %p135, %p136
    %p138 = scmp.ne.s32.totalorder %s129, %s130
    %p139 = scmp.eq.s32.totalorder %s18, 0
    %p140 = por %p138, %p139
    %p141 = scmp.ne.s32.totalorder %s129, %s130
    %p142 = scmp.eq.s32.totalorder %s19, 1
    %p143 = por %p141, %p142
    %p145 = scmp.ne.s32.totalorder %s130, %s144
    %p146 = scmp.eq.s32.totalorder %s19, 0
    %p147 = por %p145, %p146
    %s149 = sadd.s32 %s148, 1
    %p152 = scmp.eq.s32.totalorder %s13, 1
    %p153 = scmp.ne.s32.totalorder %s148, %s150
    %p154 = scmp.eq.s32.totalorder %s13, 0
    %p155 = por %p153, %p154
    %p156 = scmp.ne.s32.totalorder %s148, %s150
    %p157 = scmp.eq.s32.totalorder %s18, 1
    %p158 = por %p156, %p157
    %p159 = scmp.ne.s32.totalorder %s150, %s151
    %p160 = scmp.eq.s32.totalorder %s18, 0
    %p161 = por %p159, %p160
    %p162 = scmp.ne.s32.totalorder %s150, %s151
    %p163 = scmp.eq.s32.totalorder %s19, 1
    %p164 = por %p162, %p163
    %p166 = scmp.ne.s32.totalorder %s151, %s165
    %p167 = scmp.eq.s32.totalorder %s19, 0
    %p168 = por %p166, %p167
    %s170 = sadd.s32 %s169, 1
    %p173 = scmp.eq.s32.totalorder %s13, 1
    %p174 = scmp.ne.s32.totalorder %s169, %s171
    %p175 = scmp.eq.s32.totalorder %s13, 0
    %p176 = por %p174, %p175
    %p177 = scmp.ne.s32.totalorder %s169, %s171
    %p178 = scmp.eq.s32.totalorder %s18, 1
    %p179 = por %p177, %p178
    %p180 = scmp.ne.s32.totalorder %s171, %s172
    %p181 = scmp.eq.s32.totalorder %s18, 0
    %p182 = por %p180, %p181
    %p183 = scmp.ne.s32.totalorder %s171, %s172
    %p184 = scmp.eq.s32.totalorder %s19, 1
    %p185 = por %p183, %p184
    %p187 = scmp.ne.s32.totalorder %s172, %s186
    %p188 = scmp.eq.s32.totalorder %s19, 0
    %p189 = por %p187, %p188
    %s190 = ssub.s32 %s20, %s32
    %s191 = ssub.s32 %s21, %s28
    %s192 = sor.u32 %s190, %s191
    %p193 = scmp.eq.s32.totalorder %s192, 0
    %s195 = sadd.s32 %s194, 1
    %s196 = scalar_select %p193, %s194, %s195
    %p199 = pneg %p193
    %p200 = scmp.eq.s32.totalorder %s13, 1
    %p201 = por %p199, %p200
    %p202 = scmp.ne.s32.totalorder %s194, %s197
    %p203 = scmp.eq.s32.totalorder %s13, 0
    %p204 = por %p202, %p203
    %p205 = scmp.ne.s32.totalorder %s194, %s197
    %p206 = scmp.eq.s32.totalorder %s18, 1
    %p207 = por %p205, %p206
    %p208 = scmp.ne.s32.totalorder %s197, %s198
    %p209 = scmp.eq.s32.totalorder %s18, 0
    %p210 = por %p208, %p209
    %p211 = scmp.ne.s32.totalorder %s197, %s198
    %p212 = scmp.eq.s32.totalorder %s19, 1
    %p213 = por %p211, %p212
    %p215 = scmp.ne.s32.totalorder %s198, %s214
    %p216 = scmp.eq.s32.totalorder %s19, 0
    %p217 = por %p215, %p216
    %p218 = scmp.le.s32.totalorder 1, %s13
    %p219 = scmp.lt.s32.totalorder %s13, 3
    %p220 = pnand %p218, %p219
    %p221 = pneg %p220
    // Predicated region
    $region9: #{srresnet_decoder_forward.2} parent=5 // pred_check
      _
    $region10: #{srresnet_decoder_forward.2} parent=5 // pred_check_branch
      %223 = sbr.rel (%p220) target = $region12
    $region11: #{srresnet_decoder_forward.2} parent=5 // pred_region
      %s224 = ssub.s32 %s13, 1
      // Predicated region
      $region13: #{srresnet_decoder_forward.2} parent=11 // pred_check
        %p225 = pneg %p140
      $region14: #{srresnet_decoder_forward.2} parent=11 // pred_check_branch
        %227 = sbr.rel (%p225) target = $region16
      $region15: #{srresnet_decoder_forward.2} parent=11 // pred_region
        _
      $region16: #{srresnet_decoder_forward.2} parent=11 // pred_fallthru
        _
      // Predicated region
      $region17: #{srresnet_decoder_forward.2} parent=11 // pred_check
        %p228 = pneg %p161
      $region18: #{srresnet_decoder_forward.2} parent=11 // pred_check_branch
        %230 = sbr.rel (%p228) target = $region20
      $region19: #{srresnet_decoder_forward.2} parent=11 // pred_region
        _
      $region20: #{srresnet_decoder_forward.2} parent=11 // pred_fallthru
        _
      // Predicated region
      $region21: #{srresnet_decoder_forward.2} parent=11 // pred_check
        %p231 = pneg %p182
      $region22: #{srresnet_decoder_forward.2} parent=11 // pred_check_branch
        %233 = sbr.rel (%p231) target = $region24
      $region23: #{srresnet_decoder_forward.2} parent=11 // pred_region
        _
      $region24: #{srresnet_decoder_forward.2} parent=11 // pred_fallthru
        _
    $region12: #{srresnet_decoder_forward.2} parent=5 // pred_fallthru
      _
    %p234 = scmp.lt.s32.totalorder %s13, 2
    // Predicated region
    $region25: #{srresnet_decoder_forward.2} parent=5 // pred_check
      %p235 = pneg %p234
    $region26: #{srresnet_decoder_forward.2} parent=5 // pred_check_branch
      %237 = sbr.rel (%p235) target = $region28
    $region27: #{srresnet_decoder_forward.2} parent=5 // pred_region
      // Predicated region
      $region29: #{srresnet_decoder_forward.2} parent=27 // pred_check
        %p238 = pneg %p47
      $region30: #{srresnet_decoder_forward.2} parent=27 // pred_check_branch
        %240 = sbr.rel (%p238) target = $region32
      $region31: #{srresnet_decoder_forward.2} parent=27 // pred_region
        %s241 = smul.u32 8, %s21
        %s242 = ssub.s32 10, %s241
        %p243 = scmp.lt.s32.totalorder %s242, 8
        %s244 = scalar_select %p243, %s242, 8
        %s245 = smul.u32 64, %s244
        %s246 = smul.u32 %s245, 2
        %p247 = scmp.lt.s32.totalorder %s20, 1
        %s248 = scalar_select %p247, %s20, 1
        %p249 = scmp.lt.s32.totalorder %s241, 9
        %s250 = scalar_select %p249, %s241, 9
        %s251 = smul.addr %s250, 2
        %s252 = smul.addr %s248, 20
        %s253 = sadd.s32 %s251, %s252
        %s254 = smul.addr %s253, 4
        %s255 = scalar_lea.vmem %s0, %s254
        %s256 = smul.u32 8, %s21
        %s257 = ssub.s32 10, %s256
        %p258 = scmp.lt.s32.totalorder %s257, 8
        %s259 = scalar_select %p258, %s257, 8
        %s260 = smul.u32 64, %s259
        %s261 = smul.u32 %s260, 2
      $region32: #{srresnet_decoder_forward.2} parent=27 // pred_fallthru
        _
      // Predicated region
      $region33: #{srresnet_decoder_forward.2} parent=27 // pred_check
        %p262 = pneg %p79
      $region34: #{srresnet_decoder_forward.2} parent=27 // pred_check_branch
        %264 = sbr.rel (%p262) target = $region36
      $region35: #{srresnet_decoder_forward.2} parent=27 // pred_region
        %s265 = sadd.s32 %s21, 1
        %s266 = smul.u32 %s265, 8
        %p267 = scmp.lt.s32.totalorder %s20, 1
        %s268 = scalar_select %p267, %s20, 1
        %p269 = scmp.lt.s32.totalorder %s266, 9
        %s270 = scalar_select %p269, %s266, 9
        %s271 = smul.addr %s270, 2
        %s272 = smul.addr %s268, 20
        %s273 = sadd.s32 %s271, %s272
        %s274 = smul.addr %s273, 4
        %s275 = scalar_lea.vmem %s1, %s274
        %s276 = sadd.s32 %s21, 1
        %s277 = smul.u32 %s276, 8
      $region36: #{srresnet_decoder_forward.2} parent=27 // pred_fallthru
        _
      // Predicated region
      $region37: #{srresnet_decoder_forward.2} parent=27 // pred_check
        %p278 = pneg %p113
      $region38: #{srresnet_decoder_forward.2} parent=27 // pred_check_branch
        %280 = sbr.rel (%p278) target = $region40
      $region39: #{srresnet_decoder_forward.2} parent=27 // pred_region
        %s281 = sadd.s32 %s21, 1
        %s282 = smul.u32 %s281, 8
        %s283 = sadd.s32 %s282, 1
        %p284 = scmp.lt.s32.totalorder %s20, 1
        %s285 = scalar_select %p284, %s20, 1
        %p286 = scmp.lt.s32.totalorder %s283, 9
        %s287 = scalar_select %p286, %s283, 9
        %s288 = smul.addr %s287, 2
        %s289 = smul.addr %s285, 20
        %s290 = sadd.s32 %s288, %s289
        %s291 = smul.addr %s290, 4
        %s292 = scalar_lea.vmem %s2, %s291
        %s293 = sadd.s32 %s21, 1
        %s294 = smul.u32 %s293, 8
        %s295 = sadd.s32 %s294, 1
      $region40: #{srresnet_decoder_forward.2} parent=27 // pred_fallthru
        _
    $region28: #{srresnet_decoder_forward.2} parent=5 // pred_fallthru
      _
    %p296 = scmp.le.s32.totalorder 1, %s13
    %p297 = scmp.lt.s32.totalorder %s13, 3
    %p298 = pnand %p296, %p297
    %p299 = pneg %p298
    // Predicated region
    $region41: #{srresnet_decoder_forward.2} parent=5 // pred_check
      _
    $region42: #{srresnet_decoder_forward.2} parent=5 // pred_check_branch
      %301 = sbr.rel (%p298) target = $region44
    $region43: #{srresnet_decoder_forward.2} parent=5 // pred_region
      %s302 = ssub.s32 %s13, 1
      %s303 = smul.u32 8, %s23
      %s304 = ssub.s32 10, %s303
      %p305 = scmp.lt.s32.totalorder %s304, 8
      %s306 = scalar_select %p305, %s304, 8
      %s307 = smul.u32 64, %s306
      %s308 = smul.u32 %s307, 2
      %p309 = scmp.lt.s32.totalorder %s22, 1
      %s310 = scalar_select %p309, %s22, 1
      %p311 = scmp.lt.s32.totalorder %s303, 9
      %s312 = scalar_select %p311, %s303, 9
      %s313 = smul.addr %s312, 2
      %s314 = smul.addr %s310, 20
      %s315 = sadd.s32 %s313, %s314
      %s316 = smul.addr %s315, 4
      %s317 = scalar_lea.vmem %s0, %s316
      %p318 = pneg %p53
      %p319 = pneg %p50
      %s320 = sadd.s32 %s23, 1
      %s321 = smul.u32 %s320, 8
      %p322 = scmp.lt.s32.totalorder %s22, 1
      %s323 = scalar_select %p322, %s22, 1
      %p324 = scmp.lt.s32.totalorder %s321, 9
      %s325 = scalar_select %p324, %s321, 9
      %s326 = smul.addr %s325, 2
      %s327 = smul.addr %s323, 20
      %s328 = sadd.s32 %s326, %s327
      %s329 = smul.addr %s328, 4
      %s330 = scalar_lea.vmem %s1, %s329
      %p331 = pneg %p85
      %p332 = pneg %p82
      %s333 = sadd.s32 %s23, 1
      %s334 = smul.u32 %s333, 8
      %s335 = sadd.s32 %s334, 1
      %p336 = scmp.lt.s32.totalorder %s22, 1
      %s337 = scalar_select %p336, %s22, 1
      %p338 = scmp.lt.s32.totalorder %s335, 9
      %s339 = scalar_select %p338, %s335, 9
      %s340 = smul.addr %s339, 2
      %s341 = smul.addr %s337, 20
      %s342 = sadd.s32 %s340, %s341
      %s343 = smul.addr %s342, 4
      %s344 = scalar_lea.vmem %s2, %s343
      %p345 = pneg %p119
      %p346 = pneg %p116
      %p347 = pneg %p140
      %p348 = pneg %p137
      %p349 = pneg %p161
      %p350 = pneg %p158
      %p351 = pneg %p182
      %p352 = pneg %p179
      %p353 = pneg %p210
      %p354 = pneg %p207
      %s355 = smul.u32 8, %s23
      %p356 = scmp.lt.s32.totalorder %s22, 1
      %s357 = scalar_select %p356, %s22, 1
      %p358 = scmp.lt.s32.totalorder %s355, 7
      %s359 = scalar_select %p358, %s355, 7
      %s360 = smul.addr %s357, 8
      %s361 = sadd.s32 %s359, %s360
      %s362 = smul.addr %s361, 4
      %s363 = scalar_lea.vmem %s6, %s362
      %s364 = smul.u32 8, %s23
      %s365 = ssub.s32 10, %s364
      %p366 = scmp.lt.s32.totalorder %s365, 8
      %s367 = scalar_select %p366, %s365, 8
      %s368 = smul.u32 64, %s367
      %s369 = smul.u32 %s368, 2
      %p370 = scmp.lt.s32.totalorder %s22, 1
      %s371 = scalar_select %p370, %s22, 1
      %p372 = scmp.lt.s32.totalorder %s364, 9
      %s373 = scalar_select %p372, %s364, 9
      %s374 = smul.addr %s373, 2
      %s375 = smul.addr %s371, 20
      %s376 = sadd.s32 %s374, %s375
      %s377 = smul.addr %s376, 4
      %s378 = scalar_lea.vmem %s0, %s377
      %s379 = smul.u32 8, %s23
      %s380 = ssub.s32 10, %s379
      %p381 = scmp.lt.s32.totalorder %s380, 8
      %s382 = scalar_select %p381, %s380, 8
      %s383 = smul.u32 64, %s382
      %s384 = smul.u32 %s383, 2
      %s385 = sadd.s32 %s23, 1
      %s386 = smul.u32 %s385, 8
      %p387 = scmp.lt.s32.totalorder %s22, 1
      %s388 = scalar_select %p387, %s22, 1
      %p389 = scmp.lt.s32.totalorder %s386, 9
      %s390 = scalar_select %p389, %s386, 9
      %s391 = smul.addr %s390, 2
      %s392 = smul.addr %s388, 20
      %s393 = sadd.s32 %s391, %s392
      %s394 = smul.addr %s393, 4
      %s395 = scalar_lea.vmem %s1, %s394
      %s396 = sadd.s32 %s23, 1
      %s397 = smul.u32 %s396, 8
      %s398 = sadd.s32 %s23, 1
      %s399 = smul.u32 %s398, 8
      %s400 = sadd.s32 %s399, 1
      %p401 = scmp.lt.s32.totalorder %s22, 1
      %s402 = scalar_select %p401, %s22, 1
      %p403 = scmp.lt.s32.totalorder %s400, 9
      %s404 = scalar_select %p403, %s400, 9
      %s405 = smul.addr %s404, 2
      %s406 = smul.addr %s402, 20
      %s407 = sadd.s32 %s405, %s406
      %s408 = smul.addr %s407, 4
      %s409 = scalar_lea.vmem %s2, %s408
      %s410 = sadd.s32 %s23, 1
      %s411 = smul.u32 %s410, 8
      %s412 = sadd.s32 %s411, 1
      %s413 = smul.u32 8, %s23
      %p414 = scmp.lt.s32.totalorder %s22, 1
      %s415 = scalar_select %p414, %s22, 1
      %p416 = scmp.lt.s32.totalorder %s413, 7
      %s417 = scalar_select %p416, %s413, 7
      %s418 = smul.addr %s415, 8
      %s419 = sadd.s32 %s417, %s418
      %s420 = smul.addr %s419, 4
      %s421 = scalar_lea.vmem %s6, %s420
      %s422 = smul.u32 8, %s23
      %v424 = vld [vmem:[%s378] sm:$0xf]
      %v425 = vld [vmem:[%s378 + $0x4] sm:$0x1]
      %v426 = vld [vmem:[%s378 + $0x8] sm:$0xf]
      %v427 = vld [vmem:[%s378 + $0xc] sm:$0x1]
      %v428 = vld [vmem:[%s378 + $0x10] sm:$0xf]
      %v429 = vld [vmem:[%s378 + $0x14] sm:$0x1]
      %v430 = vld [vmem:[%s378 + $0x18] sm:$0xf]
      %v431 = vld [vmem:[%s378 + $0x1c] sm:$0x1]
      %v432 = vld [vmem:[%s378 + $0x20] sm:$0xf]
      %v433 = vld [vmem:[%s378 + $0x24] sm:$0x1]
      %v434 = vld [vmem:[%s378 + $0x28] sm:$0xf]
      %v435 = vld [vmem:[%s378 + $0x2c] sm:$0x1]
      %v436 = vld [vmem:[%s378 + $0x30] sm:$0xf]
      %v437 = vld [vmem:[%s378 + $0x34] sm:$0x1]
      %v438 = vld [vmem:[%s378 + $0x38] sm:$0xf]
      %v439 = vld [vmem:[%s378 + $0x3c] sm:$0x1]
      %vm440 = vcmask 257024
      %441 = vst.msk [vmem:[#allocation2] sm:$0xf] %vm440, %v424
      %vm442 = vcmask 253952
      %443 = vst.msk [vmem:[#allocation2 + $0x4] sm:$0x1] %vm442, %v425
      %444 = vst.msk [vmem:[#allocation2 + $0x8] sm:$0xf] %vm440, %v426
      %445 = vst.msk [vmem:[#allocation2 + $0xc] sm:$0x1] %vm442, %v427
      %446 = vst.msk [vmem:[#allocation2 + $0x10] sm:$0xf] %vm440, %v428
      %447 = vst.msk [vmem:[#allocation2 + $0x14] sm:$0x1] %vm442, %v429
      %448 = vst.msk [vmem:[#allocation2 + $0x18] sm:$0xf] %vm440, %v430
      %449 = vst.msk [vmem:[#allocation2 + $0x1c] sm:$0x1] %vm442, %v431
      %450 = vst.msk [vmem:[#allocation2 + $0x20] sm:$0xf] %vm440, %v432
      %451 = vst.msk [vmem:[#allocation2 + $0x24] sm:$0x1] %vm442, %v433
      %452 = vst.msk [vmem:[#allocation2 + $0x28] sm:$0xf] %vm440, %v434
      %453 = vst.msk [vmem:[#allocation2 + $0x2c] sm:$0x1] %vm442, %v435
      %454 = vst.msk [vmem:[#allocation2 + $0x30] sm:$0xf] %vm440, %v436
      %455 = vst.msk [vmem:[#allocation2 + $0x34] sm:$0x1] %vm442, %v437
      %456 = vst.msk [vmem:[#allocation2 + $0x38] sm:$0xf] %vm440, %v438
      %457 = vst.msk [vmem:[#allocation2 + $0x3c] sm:$0x1] %vm442, %v439
      %v458 = vld [vmem:[%s395] sm:$0xf]
      %v459 = vld [vmem:[%s395 + $0x4] sm:$0x1]
      %s460 = scalar_lea.vmem [#allocation2], 64
      %461 = vst.msk [vmem:[%s460] sm:$0xf] %vm440, %v458
      %462 = vst.msk [vmem:[%s460 + $0x4] sm:$0x1] %vm442, %v459
      %v463 = vld [vmem:[%s409] sm:$0xf]
      %v464 = vld [vmem:[%s409 + $0x4] sm:$0x1]
      %s465 = scalar_lea.vmem [#allocation2], 72
      %466 = vst.msk [vmem:[%s465] sm:$0xf] %vm440, %v463
      %467 = vst.msk [vmem:[%s465 + $0x4] sm:$0x1] %vm442, %v464
      %v468 = vld [vmem:[#allocation2] sm:$0xf]
      %v469 = vld [vmem:[#allocation2 + $0x8] sm:$0xf]
      %v470 = vld [vmem:[#allocation2 + $0x10] sm:$0xf]
      %v471 = vld [vmem:[#allocation2 + $0x18] sm:$0xf]
      %v472 = vld [vmem:[#allocation2 + $0x20] sm:$0xf]
      %v473 = vld [vmem:[#allocation2 + $0x28] sm:$0xf]
      %v474 = vld [vmem:[#allocation2 + $0x30] sm:$0xf]
      %v475 = vld [vmem:[#allocation2 + $0x38] sm:$0xf]
      %476 = vst.msk [vmem:[#allocation3] sm:$0xf] %vm440, %v468
      %477 = vst.msk [vmem:[#allocation3 + $0xc] sm:$0xf] %vm440, %v469
      %478 = vst.msk [vmem:[#allocation3 + $0x18] sm:$0xf] %vm440, %v470
      %479 = vst.msk [vmem:[#allocation3 + $0x24] sm:$0xf] %vm440, %v471
      %480 = vst.msk [vmem:[#allocation3 + $0x30] sm:$0xf] %vm440, %v472
      %481 = vst.msk [vmem:[#allocation3 + $0x3c] sm:$0xf] %vm440, %v473
      %482 = vst.msk [vmem:[#allocation3 + $0x48] sm:$0xf] %vm440, %v474
      %483 = vst.msk [vmem:[#allocation3 + $0x54] sm:$0xf] %vm440, %v475
      %v484 = vld [vmem:[#allocation2] sm:$0xf]
      %v485 = vld [vmem:[#allocation2 + $0x4] sm:$0x1]
      %v486 = vld [vmem:[#allocation2 + $0x8] sm:$0xf]
      %v487 = vld [vmem:[#allocation2 + $0xc] sm:$0x1]
      %v488 = vld [vmem:[#allocation2 + $0x10] sm:$0xf]
      %v489 = vld [vmem:[#allocation2 + $0x14] sm:$0x1]
      %v490 = vld [vmem:[#allocation2 + $0x18] sm:$0xf]
      %v491 = vld [vmem:[#allocation2 + $0x1c] sm:$0x1]
      %v492 = vld [vmem:[#allocation2 + $0x20] sm:$0xf]
      %v493 = vld [vmem:[#allocation2 + $0x24] sm:$0x1]
      %v494 = vld [vmem:[#allocation2 + $0x28] sm:$0xf]
      %v495 = vld [vmem:[#allocation2 + $0x2c] sm:$0x1]
      %v496 = vld [vmem:[#allocation2 + $0x30] sm:$0xf]
      %v497 = vld [vmem:[#allocation2 + $0x34] sm:$0x1]
      %v498 = vld [vmem:[#allocation2 + $0x38] sm:$0xf]
      %v499 = vld [vmem:[#allocation2 + $0x3c] sm:$0x1]
      %vm500 = vsmask.f32 3328
      %vm501 = vsmask.f32 7440
      %vm502 = vmor %vm500, %vm501
      %v504 = vshrl.u32 %v484, 16
      %v506 = vrot.slane %v504, 4
      %v507 = vshll.u32 %v484, 16
      %v509 = vrot.slane %v507, 5
      %v510 = vor.u32 %v506, %v509
      %v511 = vrot.slane %v510, 4
      %v513 = vshll.u32 %v485, 16
      %v515 = vrot.slane %v513, 5
      %v516 = vsel %vm502, %v511, %v515
      %v518 = vshrl.u32 %v486, 16
      %v520 = vrot.slane %v518, 4
      %v521 = vshll.u32 %v486, 16
      %v523 = vrot.slane %v521, 5
      %v524 = vor.u32 %v520, %v523
      %v525 = vrot.slane %v524, 4
      %v527 = vshll.u32 %v487, 16
      %v529 = vrot.slane %v527, 5
      %v530 = vsel %vm502, %v525, %v529
      %v532 = vshrl.u32 %v488, 16
      %v534 = vrot.slane %v532, 4
      %v535 = vshll.u32 %v488, 16
      %v537 = vrot.slane %v535, 5
      %v538 = vor.u32 %v534, %v537
      %v539 = vrot.slane %v538, 4
      %v541 = vshll.u32 %v489, 16
      %v543 = vrot.slane %v541, 5
      %v544 = vsel %vm502, %v539, %v543
      %v546 = vshrl.u32 %v490, 16
      %v548 = vrot.slane %v546, 4
      %v549 = vshll.u32 %v490, 16
      %v551 = vrot.slane %v549, 5
      %v552 = vor.u32 %v548, %v551
      %v553 = vrot.slane %v552, 4
      %v555 = vshll.u32 %v491, 16
      %v557 = vrot.slane %v555, 5
      %v558 = vsel %vm502, %v553, %v557
      %v560 = vshrl.u32 %v492, 16
      %v562 = vrot.slane %v560, 4
      %v563 = vshll.u32 %v492, 16
      %v565 = vrot.slane %v563, 5
      %v566 = vor.u32 %v562, %v565
      %v567 = vrot.slane %v566, 4
      %v569 = vshll.u32 %v493, 16
      %v571 = vrot.slane %v569, 5
      %v572 = vsel %vm502, %v567, %v571
      %v574 = vshrl.u32 %v494, 16
      %v576 = vrot.slane %v574, 4
      %v577 = vshll.u32 %v494, 16
      %v579 = vrot.slane %v577, 5
      %v580 = vor.u32 %v576, %v579
      %v581 = vrot.slane %v580, 4
      %v583 = vshll.u32 %v495, 16
      %v585 = vrot.slane %v583, 5
      %v586 = vsel %vm502, %v581, %v585
      %v588 = vshrl.u32 %v496, 16
      %v590 = vrot.slane %v588, 4
      %v591 = vshll.u32 %v496, 16
      %v593 = vrot.slane %v591, 5
      %v594 = vor.u32 %v590, %v593
      %v595 = vrot.slane %v594, 4
      %v597 = vshll.u32 %v497, 16
      %v599 = vrot.slane %v597, 5
      %v600 = vsel %vm502, %v595, %v599
      %v602 = vshrl.u32 %v498, 16
      %v604 = vrot.slane %v602, 4
      %v605 = vshll.u32 %v498, 16
      %v607 = vrot.slane %v605, 5
      %v608 = vor.u32 %v604, %v607
      %v609 = vrot.slane %v608, 4
      %v611 = vshll.u32 %v499, 16
      %v613 = vrot.slane %v611, 5
      %v614 = vsel %vm502, %v609, %v613
      %615 = vrot.lane.b32.xlu0 %v516, 32
      %v616 = vpop.permute.xlu0 %615
      %617 = vrot.lane.b32.xlu0 %v530, 32
      %v618 = vpop.permute.xlu0 %617
      %619 = vrot.lane.b32.xlu0 %v544, 32
      %v620 = vpop.permute.xlu0 %619
      %621 = vrot.lane.b32.xlu0 %v558, 32
      %v622 = vpop.permute.xlu0 %621
      %623 = vrot.lane.b32.xlu0 %v572, 32
      %v624 = vpop.permute.xlu0 %623
      %625 = vrot.lane.b32.xlu0 %v586, 32
      %v626 = vpop.permute.xlu0 %625
      %627 = vrot.lane.b32.xlu0 %v600, 32
      %v628 = vpop.permute.xlu0 %627
      %629 = vrot.lane.b32.xlu0 %v614, 32
      %v630 = vpop.permute.xlu0 %629
      %vm639 = vcmask 519424
      %640 = vst.msk [vmem:[#allocation3] sm:$0xf] %vm639, %v616
      %641 = vst.msk [vmem:[#allocation3 + $0xc] sm:$0xf] %vm639, %v618
      %642 = vst.msk [vmem:[#allocation3 + $0x18] sm:$0xf] %vm639, %v620
      %643 = vst.msk [vmem:[#allocation3 + $0x24] sm:$0xf] %vm639, %v622
      %644 = vst.msk [vmem:[#allocation3 + $0x30] sm:$0xf] %vm639, %v624
      %645 = vst.msk [vmem:[#allocation3 + $0x3c] sm:$0xf] %vm639, %v626
      %646 = vst.msk [vmem:[#allocation3 + $0x48] sm:$0xf] %vm639, %v628
      %647 = vst.msk [vmem:[#allocation3 + $0x54] sm:$0xf] %vm639, %v630
      %v648 = vld [vmem:[#allocation2] sm:$0xe]
      %v649 = vld [vmem:[#allocation2 + $0x4] sm:$0x1]
      %v650 = vld [vmem:[#allocation2 + $0x8] sm:$0xe]
      %v651 = vld [vmem:[#allocation2 + $0xc] sm:$0x1]
      %v652 = vld [vmem:[#allocation2 + $0x10] sm:$0xe]
      %v653 = vld [vmem:[#allocation2 + $0x14] sm:$0x1]
      %v654 = vld [vmem:[#allocation2 + $0x18] sm:$0xe]
      %v655 = vld [vmem:[#allocation2 + $0x1c] sm:$0x1]
      %v656 = vld [vmem:[#allocation2 + $0x20] sm:$0xe]
      %v657 = vld [vmem:[#allocation2 + $0x24] sm:$0x1]
      %v658 = vld [vmem:[#allocation2 + $0x28] sm:$0xe]
      %v659 = vld [vmem:[#allocation2 + $0x2c] sm:$0x1]
      %v660 = vld [vmem:[#allocation2 + $0x30] sm:$0xe]
      %v661 = vld [vmem:[#allocation2 + $0x34] sm:$0x1]
      %v662 = vld [vmem:[#allocation2 + $0x38] sm:$0xe]
      %v663 = vld [vmem:[#allocation2 + $0x3c] sm:$0x1]
      %vm680 = vcmask 1042432
      %vm681 = vcmask 1046532
      %vm682 = vmor %vm680, %vm681
      %v683 = vrot.slane %v648, 5
      %v684 = vrot.slane %v683, 4
      %v685 = vrot.slane %v649, 5
      %v686 = vsel %vm682, %v684, %v685
      %v687 = vrot.slane %v650, 5
      %v688 = vrot.slane %v687, 4
      %v689 = vrot.slane %v651, 5
      %v690 = vsel %vm682, %v688, %v689
      %v691 = vrot.slane %v652, 5
      %v692 = vrot.slane %v691, 4
      %v693 = vrot.slane %v653, 5
      %v694 = vsel %vm682, %v692, %v693
      %v695 = vrot.slane %v654, 5
      %v696 = vrot.slane %v695, 4
      %v697 = vrot.slane %v655, 5
      %v698 = vsel %vm682, %v696, %v697
      %v699 = vrot.slane %v656, 5
      %v700 = vrot.slane %v699, 4
      %v701 = vrot.slane %v657, 5
      %v702 = vsel %vm682, %v700, %v701
      %v703 = vrot.slane %v658, 5
      %v704 = vrot.slane %v703, 4
      %v705 = vrot.slane %v659, 5
      %v706 = vsel %vm682, %v704, %v705
      %v707 = vrot.slane %v660, 5
      %v708 = vrot.slane %v707, 4
      %v709 = vrot.slane %v661, 5
      %v710 = vsel %vm682, %v708, %v709
      %v711 = vrot.slane %v662, 5
      %v712 = vrot.slane %v711, 4
      %v713 = vrot.slane %v663, 5
      %v714 = vsel %vm682, %v712, %v713
      %715 = vrot.lane.b32.xlu0 %v686, 64
      %v716 = vpop.permute.xlu0 %715
      %717 = vrot.lane.b32.xlu0 %v690, 64
      %v718 = vpop.permute.xlu0 %717
      %719 = vrot.lane.b32.xlu0 %v694, 64
      %v720 = vpop.permute.xlu0 %719
      %721 = vrot.lane.b32.xlu0 %v698, 64
      %v722 = vpop.permute.xlu0 %721
      %723 = vrot.lane.b32.xlu0 %v702, 64
      %v724 = vpop.permute.xlu0 %723
      %725 = vrot.lane.b32.xlu0 %v706, 64
      %v726 = vpop.permute.xlu0 %725
      %727 = vrot.lane.b32.xlu0 %v710, 64
      %v728 = vpop.permute.xlu0 %727
      %729 = vrot.lane.b32.xlu0 %v714, 64
      %v730 = vpop.permute.xlu0 %729
      %vm739 = vcmask 781824
      %740 = vst.msk [vmem:[#allocation3] sm:$0xf] %vm739, %v716
      %741 = vst.msk [vmem:[#allocation3 + $0xc] sm:$0xf] %vm739, %v718
      %742 = vst.msk [vmem:[#allocation3 + $0x18] sm:$0xf] %vm739, %v720
      %743 = vst.msk [vmem:[#allocation3 + $0x24] sm:$0xf] %vm739, %v722
      %744 = vst.msk [vmem:[#allocation3 + $0x30] sm:$0xf] %vm739, %v724
      %745 = vst.msk [vmem:[#allocation3 + $0x3c] sm:$0xf] %vm739, %v726
      %746 = vst.msk [vmem:[#allocation3 + $0x48] sm:$0xf] %vm739, %v728
      %747 = vst.msk [vmem:[#allocation3 + $0x54] sm:$0xf] %vm739, %v730
      %s748 = scalar_lea.vmem [#allocation2], 8
      %v749 = vld [vmem:[%s748] sm:$0xf]
      %v750 = vld [vmem:[%s748 + $0x8] sm:$0xf]
      %v751 = vld [vmem:[%s748 + $0x10] sm:$0xf]
      %v752 = vld [vmem:[%s748 + $0x18] sm:$0xf]
      %v753 = vld [vmem:[%s748 + $0x20] sm:$0xf]
      %v754 = vld [vmem:[%s748 + $0x28] sm:$0xf]
      %v755 = vld [vmem:[%s748 + $0x30] sm:$0xf]
      %v756 = vld [vmem:[%s748 + $0x38] sm:$0xf]
      %765 = vrot.lane.b32.xlu0 %v749, 96
      %v766 = vpop.permute.xlu0 %765
      %767 = vrot.lane.b32.xlu0 %v750, 96
      %v768 = vpop.permute.xlu0 %767
      %769 = vrot.lane.b32.xlu0 %v751, 96
      %v770 = vpop.permute.xlu0 %769
      %771 = vrot.lane.b32.xlu0 %v752, 96
      %v772 = vpop.permute.xlu0 %771
      %773 = vrot.lane.b32.xlu0 %v753, 96
      %v774 = vpop.permute.xlu0 %773
      %775 = vrot.lane.b32.xlu0 %v754, 96
      %v776 = vpop.permute.xlu0 %775
      %777 = vrot.lane.b32.xlu0 %v755, 96
      %v778 = vpop.permute.xlu0 %777
      %779 = vrot.lane.b32.xlu0 %v756, 96
      %v780 = vpop.permute.xlu0 %779
      %vm789 = vcmask 1044224
      %790 = vst.msk [vmem:[#allocation3] sm:$0xf] %vm789, %v766
      %791 = vst.msk [vmem:[#allocation3 + $0xc] sm:$0xf] %vm789, %v768
      %792 = vst.msk [vmem:[#allocation3 + $0x18] sm:$0xf] %vm789, %v770
      %793 = vst.msk [vmem:[#allocation3 + $0x24] sm:$0xf] %vm789, %v772
      %794 = vst.msk [vmem:[#allocation3 + $0x30] sm:$0xf] %vm789, %v774
      %795 = vst.msk [vmem:[#allocation3 + $0x3c] sm:$0xf] %vm789, %v776
      %796 = vst.msk [vmem:[#allocation3 + $0x48] sm:$0xf] %vm789, %v778
      %797 = vst.msk [vmem:[#allocation3 + $0x54] sm:$0xf] %vm789, %v780
      %v798 = vld [vmem:[%s748] sm:$0xf]
      %v799 = vld [vmem:[%s748 + $0x4] sm:$0x1]
      %v800 = vld [vmem:[%s748 + $0x8] sm:$0xf]
      %v801 = vld [vmem:[%s748 + $0xc] sm:$0x1]
      %v802 = vld [vmem:[%s748 + $0x10] sm:$0xf]
      %v803 = vld [vmem:[%s748 + $0x14] sm:$0x1]
      %v804 = vld [vmem:[%s748 + $0x18] sm:$0xf]
      %v805 = vld [vmem:[%s748 + $0x1c] sm:$0x1]
      %v806 = vld [vmem:[%s748 + $0x20] sm:$0xf]
      %v807 = vld [vmem:[%s748 + $0x24] sm:$0x1]
      %v808 = vld [vmem:[%s748 + $0x28] sm:$0xf]
      %v809 = vld [vmem:[%s748 + $0x2c] sm:$0x1]
      %v810 = vld [vmem:[%s748 + $0x30] sm:$0xf]
      %v811 = vld [vmem:[%s748 + $0x34] sm:$0x1]
      %v812 = vld [vmem:[%s748 + $0x38] sm:$0xf]
      %v813 = vld [vmem:[%s748 + $0x3c] sm:$0x1]
      %v815 = vshrl.u32 %v798, 16
      %v817 = vrot.slane %v815, 4
      %v818 = vshll.u32 %v798, 16
      %v820 = vrot.slane %v818, 5
      %v821 = vor.u32 %v817, %v820
      %v822 = vrot.slane %v821, 4
      %v824 = vshll.u32 %v799, 16
      %v826 = vrot.slane %v824, 5
      %v827 = vsel %vm502, %v822, %v826
      %v829 = vshrl.u32 %v800, 16
      %v831 = vrot.slane %v829, 4
      %v832 = vshll.u32 %v800, 16
      %v834 = vrot.slane %v832, 5
      %v835 = vor.u32 %v831, %v834
      %v836 = vrot.slane %v835, 4
      %v838 = vshll.u32 %v801, 16
      %v840 = vrot.slane %v838, 5
      %v841 = vsel %vm502, %v836, %v840
      %v843 = vshrl.u32 %v802, 16
      %v845 = vrot.slane %v843, 4
      %v846 = vshll.u32 %v802, 16
      %v848 = vrot.slane %v846, 5
      %v849 = vor.u32 %v845, %v848
      %v850 = vrot.slane %v849, 4
      %v852 = vshll.u32 %v803, 16
      %v854 = vrot.slane %v852, 5
      %v855 = vsel %vm502, %v850, %v854
      %v857 = vshrl.u32 %v804, 16
      %v859 = vrot.slane %v857, 4
      %v860 = vshll.u32 %v804, 16
      %v862 = vrot.slane %v860, 5
      %v863 = vor.u32 %v859, %v862
      %v864 = vrot.slane %v863, 4
      %v866 = vshll.u32 %v805, 16
      %v868 = vrot.slane %v866, 5
      %v869 = vsel %vm502, %v864, %v868
      %v871 = vshrl.u32 %v806, 16
      %v873 = vrot.slane %v871, 4
      %v874 = vshll.u32 %v806, 16
      %v876 = vrot.slane %v874, 5
      %v877 = vor.u32 %v873, %v876
      %v878 = vrot.slane %v877, 4
      %v880 = vshll.u32 %v807, 16
      %v882 = vrot.slane %v880, 5
      %v883 = vsel %vm502, %v878, %v882
      %v885 = vshrl.u32 %v808, 16
      %v887 = vrot.slane %v885, 4
      %v888 = vshll.u32 %v808, 16
      %v890 = vrot.slane %v888, 5
      %v891 = vor.u32 %v887, %v890
      %v892 = vrot.slane %v891, 4
      %v894 = vshll.u32 %v809, 16
      %v896 = vrot.slane %v894, 5
      %v897 = vsel %vm502, %v892, %v896
      %v899 = vshrl.u32 %v810, 16
      %v901 = vrot.slane %v899, 4
      %v902 = vshll.u32 %v810, 16
      %v904 = vrot.slane %v902, 5
      %v905 = vor.u32 %v901, %v904
      %v906 = vrot.slane %v905, 4
      %v908 = vshll.u32 %v811, 16
      %v910 = vrot.slane %v908, 5
      %v911 = vsel %vm502, %v906, %v910
      %v913 = vshrl.u32 %v812, 16
      %v915 = vrot.slane %v913, 4
      %v916 = vshll.u32 %v812, 16
      %v918 = vrot.slane %v916, 5
      %v919 = vor.u32 %v915, %v918
      %v920 = vrot.slane %v919, 4
      %v922 = vshll.u32 %v813, 16
      %v924 = vrot.slane %v922, 5
      %v925 = vsel %vm502, %v920, %v924
      %934 = vst.msk [vmem:[#allocation3 + $0x4] sm:$0xf] %vm440, %v827
      %935 = vst.msk [vmem:[#allocation3 + $0x10] sm:$0xf] %vm440, %v841
      %936 = vst.msk [vmem:[#allocation3 + $0x1c] sm:$0xf] %vm440, %v855
      %937 = vst.msk [vmem:[#allocation3 + $0x28] sm:$0xf] %vm440, %v869
      %938 = vst.msk [vmem:[#allocation3 + $0x34] sm:$0xf] %vm440, %v883
      %939 = vst.msk [vmem:[#allocation3 + $0x40] sm:$0xf] %vm440, %v897
      %940 = vst.msk [vmem:[#allocation3 + $0x4c] sm:$0xf] %vm440, %v911
      %941 = vst.msk [vmem:[#allocation3 + $0x58] sm:$0xf] %vm440, %v925
      %v942 = vld [vmem:[%s748] sm:$0xe]
      %v943 = vld [vmem:[%s748 + $0x4] sm:$0x1]
      %v944 = vld [vmem:[%s748 + $0x8] sm:$0xe]
      %v945 = vld [vmem:[%s748 + $0xc] sm:$0x1]
      %v946 = vld [vmem:[%s748 + $0x10] sm:$0xe]
      %v947 = vld [vmem:[%s748 + $0x14] sm:$0x1]
      %v948 = vld [vmem:[%s748 + $0x18] sm:$0xe]
      %v949 = vld [vmem:[%s748 + $0x1c] sm:$0x1]
      %v950 = vld [vmem:[%s748 + $0x20] sm:$0xe]
      %v951 = vld [vmem:[%s748 + $0x24] sm:$0x1]
      %v952 = vld [vmem:[%s748 + $0x28] sm:$0xe]
      %v953 = vld [vmem:[%s748 + $0x2c] sm:$0x1]
      %v954 = vld [vmem:[%s748 + $0x30] sm:$0xe]
      %v955 = vld [vmem:[%s748 + $0x34] sm:$0x1]
      %v956 = vld [vmem:[%s748 + $0x38] sm:$0xe]
      %v957 = vld [vmem:[%s748 + $0x3c] sm:$0x1]
      %v974 = vrot.slane %v942, 5
      %v975 = vrot.slane %v974, 4
      %v976 = vrot.slane %v943, 5
      %v977 = vsel %vm682, %v975, %v976
      %v978 = vrot.slane %v944, 5
      %v979 = vrot.slane %v978, 4
      %v980 = vrot.slane %v945, 5
      %v981 = vsel %vm682, %v979, %v980
      %v982 = vrot.slane %v946, 5
      %v983 = vrot.slane %v982, 4
      %v984 = vrot.slane %v947, 5
      %v985 = vsel %vm682, %v983, %v984
      %v986 = vrot.slane %v948, 5
      %v987 = vrot.slane %v986, 4
      %v988 = vrot.slane %v949, 5
      %v989 = vsel %vm682, %v987, %v988
      %v990 = vrot.slane %v950, 5
      %v991 = vrot.slane %v990, 4
      %v992 = vrot.slane %v951, 5
      %v993 = vsel %vm682, %v991, %v992
      %v994 = vrot.slane %v952, 5
      %v995 = vrot.slane %v994, 4
      %v996 = vrot.slane %v953, 5
      %v997 = vsel %vm682, %v995, %v996
      %v998 = vrot.slane %v954, 5
      %v999 = vrot.slane %v998, 4
      %v1000 = vrot.slane %v955, 5
      %v1001 = vsel %vm682, %v999, %v1000
      %v1002 = vrot.slane %v956, 5
      %v1003 = vrot.slane %v1002, 4
      %v1004 = vrot.slane %v957, 5
      %v1005 = vsel %vm682, %v1003, %v1004
      %1006 = vrot.lane.b32.xlu0 %v977, 32
      %v1007 = vpop.permute.xlu0 %1006
      %1008 = vrot.lane.b32.xlu0 %v981, 32
      %v1009 = vpop.permute.xlu0 %1008
      %1010 = vrot.lane.b32.xlu0 %v985, 32
      %v1011 = vpop.permute.xlu0 %1010
      %1012 = vrot.lane.b32.xlu0 %v989, 32
      %v1013 = vpop.permute.xlu0 %1012
      %1014 = vrot.lane.b32.xlu0 %v993, 32
      %v1015 = vpop.permute.xlu0 %1014
      %1016 = vrot.lane.b32.xlu0 %v997, 32
      %v1017 = vpop.permute.xlu0 %1016
      %1018 = vrot.lane.b32.xlu0 %v1001, 32
      %v1019 = vpop.permute.xlu0 %1018
      %1020 = vrot.lane.b32.xlu0 %v1005, 32
      %v1021 = vpop.permute.xlu0 %1020
      %1030 = vst.msk [vmem:[#allocation3 + $0x4] sm:$0xf] %vm639, %v1007
      %1031 = vst.msk [vmem:[#allocation3 + $0x10] sm:$0xf] %vm639, %v1009
      %1032 = vst.msk [vmem:[#allocation3 + $0x1c] sm:$0xf] %vm639, %v1011
      %1033 = vst.msk [vmem:[#allocation3 + $0x28] sm:$0xf] %vm639, %v1013
      %1034 = vst.msk [vmem:[#allocation3 + $0x34] sm:$0xf] %vm639, %v1015
      %1035 = vst.msk [vmem:[#allocation3 + $0x40] sm:$0xf] %vm639, %v1017
      %1036 = vst.msk [vmem:[#allocation3 + $0x4c] sm:$0xf] %vm639, %v1019
      %1037 = vst.msk [vmem:[#allocation3 + $0x58] sm:$0xf] %vm639, %v1021
      %s1038 = scalar_lea.vmem [#allocation2], 16
      %v1039 = vld [vmem:[%s1038] sm:$0xf]
      %v1040 = vld [vmem:[%s1038 + $0x8] sm:$0xf]
      %v1041 = vld [vmem:[%s1038 + $0x10] sm:$0xf]
      %v1042 = vld [vmem:[%s1038 + $0x18] sm:$0xf]
      %v1043 = vld [vmem:[%s1038 + $0x20] sm:$0xf]
      %v1044 = vld [vmem:[%s1038 + $0x28] sm:$0xf]
      %v1045 = vld [vmem:[%s1038 + $0x30] sm:$0xf]
      %v1046 = vld [vmem:[%s1038 + $0x38] sm:$0xf]
      %1055 = vrot.lane.b32.xlu0 %v1039, 64
      %v1056 = vpop.permute.xlu0 %1055
      %1057 = vrot.lane.b32.xlu0 %v1040, 64
      %v1058 = vpop.permute.xlu0 %1057
      %1059 = vrot.lane.b32.xlu0 %v1041, 64
      %v1060 = vpop.permute.xlu0 %1059
      %1061 = vrot.lane.b32.xlu0 %v1042, 64
      %v1062 = vpop.permute.xlu0 %1061
      %1063 = vrot.lane.b32.xlu0 %v1043, 64
      %v1064 = vpop.permute.xlu0 %1063
      %1065 = vrot.lane.b32.xlu0 %v1044, 64
      %v1066 = vpop.permute.xlu0 %1065
      %1067 = vrot.lane.b32.xlu0 %v1045, 64
      %v1068 = vpop.permute.xlu0 %1067
      %1069 = vrot.lane.b32.xlu0 %v1046, 64
      %v1070 = vpop.permute.xlu0 %1069
      %1079 = vst.msk [vmem:[#allocation3 + $0x4] sm:$0xf] %vm739, %v1056
      %1080 = vst.msk [vmem:[#allocation3 + $0x10] sm:$0xf] %vm739, %v1058
      %1081 = vst.msk [vmem:[#allocation3 + $0x1c] sm:$0xf] %vm739, %v1060
      %1082 = vst.msk [vmem:[#allocation3 + $0x28] sm:$0xf] %vm739, %v1062
      %1083 = vst.msk [vmem:[#allocation3 + $0x34] sm:$0xf] %vm739, %v1064
      %1084 = vst.msk [vmem:[#allocation3 + $0x40] sm:$0xf] %vm739, %v1066
      %1085 = vst.msk [vmem:[#allocation3 + $0x4c] sm:$0xf] %vm739, %v1068
      %1086 = vst.msk [vmem:[#allocation3 + $0x58] sm:$0xf] %vm739, %v1070
      %v1087 = vld [vmem:[%s1038] sm:$0xf]
      %v1088 = vld [vmem:[%s1038 + $0x4] sm:$0x1]
      %v1089 = vld [vmem:[%s1038 + $0x8] sm:$0xf]
      %v1090 = vld [vmem:[%s1038 + $0xc] sm:$0x1]
      %v1091 = vld [vmem:[%s1038 + $0x10] sm:$0xf]
      %v1092 = vld [vmem:[%s1038 + $0x14] sm:$0x1]
      %v1093 = vld [vmem:[%s1038 + $0x18] sm:$0xf]
      %v1094 = vld [vmem:[%s1038 + $0x1c] sm:$0x1]
      %v1095 = vld [vmem:[%s1038 + $0x20] sm:$0xf]
      %v1096 = vld [vmem:[%s1038 + $0x24] sm:$0x1]
      %v1097 = vld [vmem:[%s1038 + $0x28] sm:$0xf]
      %v1098 = vld [vmem:[%s1038 + $0x2c] sm:$0x1]
      %v1099 = vld [vmem:[%s1038 + $0x30] sm:$0xf]
      %v1100 = vld [vmem:[%s1038 + $0x34] sm:$0x1]
      %v1101 = vld [vmem:[%s1038 + $0x38] sm:$0xf]
      %v1102 = vld [vmem:[%s1038 + $0x3c] sm:$0x1]
      %v1104 = vshrl.u32 %v1087, 16
      %v1106 = vrot.slane %v1104, 4
      %v1107 = vshll.u32 %v1087, 16
      %v1109 = vrot.slane %v1107, 5
      %v1110 = vor.u32 %v1106, %v1109
      %v1111 = vrot.slane %v1110, 4
      %v1113 = vshll.u32 %v1088, 16
      %v1115 = vrot.slane %v1113, 5
      %v1116 = vsel %vm502, %v1111, %v1115
      %v1118 = vshrl.u32 %v1089, 16
      %v1120 = vrot.slane %v1118, 4
      %v1121 = vshll.u32 %v1089, 16
      %v1123 = vrot.slane %v1121, 5
      %v1124 = vor.u32 %v1120, %v1123
      %v1125 = vrot.slane %v1124, 4
      %v1127 = vshll.u32 %v1090, 16
      %v1129 = vrot.slane %v1127, 5
      %v1130 = vsel %vm502, %v1125, %v1129
      %v1132 = vshrl.u32 %v1091, 16
      %v1134 = vrot.slane %v1132, 4
      %v1135 = vshll.u32 %v1091, 16
      %v1137 = vrot.slane %v1135, 5
      %v1138 = vor.u32 %v1134, %v1137
      %v1139 = vrot.slane %v1138, 4
      %v1141 = vshll.u32 %v1092, 16
      %v1143 = vrot.slane %v1141, 5
      %v1144 = vsel %vm502, %v1139, %v1143
      %v1146 = vshrl.u32 %v1093, 16
      %v1148 = vrot.slane %v1146, 4
      %v1149 = vshll.u32 %v1093, 16
      %v1151 = vrot.slane %v1149, 5
      %v1152 = vor.u32 %v1148, %v1151
      %v1153 = vrot.slane %v1152, 4
      %v1155 = vshll.u32 %v1094, 16
      %v1157 = vrot.slane %v1155, 5
      %v1158 = vsel %vm502, %v1153, %v1157
      %v1160 = vshrl.u32 %v1095, 16
      %v1162 = vrot.slane %v1160, 4
      %v1163 = vshll.u32 %v1095, 16
      %v1165 = vrot.slane %v1163, 5
      %v1166 = vor.u32 %v1162, %v1165
      %v1167 = vrot.slane %v1166, 4
      %v1169 = vshll.u32 %v1096, 16
      %v1171 = vrot.slane %v1169, 5
      %v1172 = vsel %vm502, %v1167, %v1171
      %v1174 = vshrl.u32 %v1097, 16
      %v1176 = vrot.slane %v1174, 4
      %v1177 = vshll.u32 %v1097, 16
      %v1179 = vrot.slane %v1177, 5
      %v1180 = vor.u32 %v1176, %v1179
      %v1181 = vrot.slane %v1180, 4
      %v1183 = vshll.u32 %v1098, 16
      %v1185 = vrot.slane %v1183, 5
      %v1186 = vsel %vm502, %v1181, %v1185
      %v1188 = vshrl.u32 %v1099, 16
      %v1190 = vrot.slane %v1188, 4
      %v1191 = vshll.u32 %v1099, 16
      %v1193 = vrot.slane %v1191, 5
      %v1194 = vor.u32 %v1190, %v1193
      %v1195 = vrot.slane %v1194, 4
      %v1197 = vshll.u32 %v1100, 16
      %v1199 = vrot.slane %v1197, 5
      %v1200 = vsel %vm502, %v1195, %v1199
      %v1202 = vshrl.u32 %v1101, 16
      %v1204 = vrot.slane %v1202, 4
      %v1205 = vshll.u32 %v1101, 16
      %v1207 = vrot.slane %v1205, 5
      %v1208 = vor.u32 %v1204, %v1207
      %v1209 = vrot.slane %v1208, 4
      %v1211 = vshll.u32 %v1102, 16
      %v1213 = vrot.slane %v1211, 5
      %v1214 = vsel %vm502, %v1209, %v1213
      %1215 = vrot.lane.b32.xlu0 %v1116, 96
      %v1216 = vpop.permute.xlu0 %1215
      %1217 = vrot.lane.b32.xlu0 %v1130, 96
      %v1218 = vpop.permute.xlu0 %1217
      %1219 = vrot.lane.b32.xlu0 %v1144, 96
      %v1220 = vpop.permute.xlu0 %1219
      %1221 = vrot.lane.b32.xlu0 %v1158, 96
      %v1222 = vpop.permute.xlu0 %1221
      %1223 = vrot.lane.b32.xlu0 %v1172, 96
      %v1224 = vpop.permute.xlu0 %1223
      %1225 = vrot.lane.b32.xlu0 %v1186, 96
      %v1226 = vpop.permute.xlu0 %1225
      %1227 = vrot.lane.b32.xlu0 %v1200, 96
      %v1228 = vpop.permute.xlu0 %1227
      %1229 = vrot.lane.b32.xlu0 %v1214, 96
      %v1230 = vpop.permute.xlu0 %1229
      %1239 = vst.msk [vmem:[#allocation3 + $0x4] sm:$0xf] %vm789, %v1216
      %1240 = vst.msk [vmem:[#allocation3 + $0x10] sm:$0xf] %vm789, %v1218
      %1241 = vst.msk [vmem:[#allocation3 + $0x1c] sm:$0xf] %vm789, %v1220
      %1242 = vst.msk [vmem:[#allocation3 + $0x28] sm:$0xf] %vm789, %v1222
      %1243 = vst.msk [vmem:[#allocation3 + $0x34] sm:$0xf] %vm789, %v1224
      %1244 = vst.msk [vmem:[#allocation3 + $0x40] sm:$0xf] %vm789, %v1226
      %1245 = vst.msk [vmem:[#allocation3 + $0x4c] sm:$0xf] %vm789, %v1228
      %1246 = vst.msk [vmem:[#allocation3 + $0x58] sm:$0xf] %vm789, %v1230
      %v1247 = vld [vmem:[%s1038] sm:$0xe]
      %v1248 = vld [vmem:[%s1038 + $0x4] sm:$0x1]
      %v1249 = vld [vmem:[%s1038 + $0x8] sm:$0xe]
      %v1250 = vld [vmem:[%s1038 + $0xc] sm:$0x1]
      %v1251 = vld [vmem:[%s1038 + $0x10] sm:$0xe]
      %v1252 = vld [vmem:[%s1038 + $0x14] sm:$0x1]
      %v1253 = vld [vmem:[%s1038 + $0x18] sm:$0xe]
      %v1254 = vld [vmem:[%s1038 + $0x1c] sm:$0x1]
      %v1255 = vld [vmem:[%s1038 + $0x20] sm:$0xe]
      %v1256 = vld [vmem:[%s1038 + $0x24] sm:$0x1]
      %v1257 = vld [vmem:[%s1038 + $0x28] sm:$0xe]
      %v1258 = vld [vmem:[%s1038 + $0x2c] sm:$0x1]
      %v1259 = vld [vmem:[%s1038 + $0x30] sm:$0xe]
      %v1260 = vld [vmem:[%s1038 + $0x34] sm:$0x1]
      %v1261 = vld [vmem:[%s1038 + $0x38] sm:$0xe]
      %v1262 = vld [vmem:[%s1038 + $0x3c] sm:$0x1]
      %v1279 = vrot.slane %v1247, 5
      %v1280 = vrot.slane %v1279, 4
      %v1281 = vrot.slane %v1248, 5
      %v1282 = vsel %vm682, %v1280, %v1281
      %v1283 = vrot.slane %v1249, 5
      %v1284 = vrot.slane %v1283, 4
      %v1285 = vrot.slane %v1250, 5
      %v1286 = vsel %vm682, %v1284, %v1285
      %v1287 = vrot.slane %v1251, 5
      %v1288 = vrot.slane %v1287, 4
      %v1289 = vrot.slane %v1252, 5
      %v1290 = vsel %vm682, %v1288, %v1289
      %v1291 = vrot.slane %v1253, 5
      %v1292 = vrot.slane %v1291, 4
      %v1293 = vrot.slane %v1254, 5
      %v1294 = vsel %vm682, %v1292, %v1293
      %v1295 = vrot.slane %v1255, 5
      %v1296 = vrot.slane %v1295, 4
      %v1297 = vrot.slane %v1256, 5
      %v1298 = vsel %vm682, %v1296, %v1297
      %v1299 = vrot.slane %v1257, 5
      %v1300 = vrot.slane %v1299, 4
      %v1301 = vrot.slane %v1258, 5
      %v1302 = vsel %vm682, %v1300, %v1301
      %v1303 = vrot.slane %v1259, 5
      %v1304 = vrot.slane %v1303, 4
      %v1305 = vrot.slane %v1260, 5
      %v1306 = vsel %vm682, %v1304, %v1305
      %v1307 = vrot.slane %v1261, 5
      %v1308 = vrot.slane %v1307, 4
      %v1309 = vrot.slane %v1262, 5
      %v1310 = vsel %vm682, %v1308, %v1309
      %1319 = vst.msk [vmem:[#allocation3 + $0x8] sm:$0xf] %vm440, %v1282
      %1320 = vst.msk [vmem:[#allocation3 + $0x14] sm:$0xf] %vm440, %v1286
      %1321 = vst.msk [vmem:[#allocation3 + $0x20] sm:$0xf] %vm440, %v1290
      %1322 = vst.msk [vmem:[#allocation3 + $0x2c] sm:$0xf] %vm440, %v1294
      %1323 = vst.msk [vmem:[#allocation3 + $0x38] sm:$0xf] %vm440, %v1298
      %1324 = vst.msk [vmem:[#allocation3 + $0x44] sm:$0xf] %vm440, %v1302
      %1325 = vst.msk [vmem:[#allocation3 + $0x50] sm:$0xf] %vm440, %v1306
      %1326 = vst.msk [vmem:[#allocation3 + $0x5c] sm:$0xf] %vm440, %v1310
      %v1327 = vld [vmem:[#allocation3] sm:$0xff]
      %v1328 = vld [vmem:[#allocation3 + $0x8] sm:$0xf]
      %v1329 = vld [vmem:[#allocation3 + $0xc] sm:$0xff]
      %v1330 = vld [vmem:[#allocation3 + $0x14] sm:$0xf]
      %v1331 = vld [vmem:[#allocation3 + $0x18] sm:$0xff]
      %v1332 = vld [vmem:[#allocation3 + $0x20] sm:$0xf]
      %v1333 = vld [vmem:[#allocation3 + $0x24] sm:$0xff]
      %v1334 = vld [vmem:[#allocation3 + $0x2c] sm:$0xf]
      %v1335 = vld [vmem:[#allocation3 + $0x30] sm:$0xff]
      %v1336 = vld [vmem:[#allocation3 + $0x38] sm:$0xf]
      %v1337 = vld [vmem:[#allocation3 + $0x3c] sm:$0xff]
      %v1338 = vld [vmem:[#allocation3 + $0x44] sm:$0xf]
      %v1339 = vld [vmem:[#allocation3 + $0x48] sm:$0xff]
      %v1340 = vld [vmem:[#allocation3 + $0x50] sm:$0xf]
      %v1341 = vld [vmem:[#allocation3 + $0x54] sm:$0xff]
      %v1342 = vld [vmem:[#allocation3 + $0x5c] sm:$0xf]
      %v1343 = vld [vmem:[%s3] sm:$0xf]
      %v1344 = vld [vmem:[%s3 + $0x4] sm:$0xf]
      %v1345 = vld [vmem:[%s3 + $0x8] sm:$0xf]
      %v1346 = vld [vmem:[%s3 + $0xc] sm:$0xf]
      %v1347 = vld [vmem:[%s3 + $0x10] sm:$0xf]
      %v1348 = vld [vmem:[%s3 + $0x14] sm:$0xf]
      %v1349 = vld [vmem:[%s3 + $0x18] sm:$0xf]
      %v1350 = vld [vmem:[%s3 + $0x1c] sm:$0xf]
      %v1351 = vld [vmem:[%s3 + $0x20] sm:$0xf]
      %v1352 = vld [vmem:[%s3 + $0x24] sm:$0xf]
      %v1353 = vld [vmem:[%s3 + $0x28] sm:$0xf]
      %v1354 = vld [vmem:[%s3 + $0x2c] sm:$0xf]
      %v1355 = vld [vmem:[%s3 + $0x30] sm:$0xf]
      %v1356 = vld [vmem:[%s3 + $0x34] sm:$0xf]
      %v1357 = vld [vmem:[%s3 + $0x38] sm:$0xf]
      %v1358 = vld [vmem:[%s3 + $0x3c] sm:$0xf]
      %v1359 = vld [vmem:[%s3 + $0x40] sm:$0xf]
      %v1360 = vld [vmem:[%s3 + $0x44] sm:$0xf]
      %v1361 = vld [vmem:[%s3 + $0x48] sm:$0xf]
      %v1362 = vld [vmem:[%s3 + $0x4c] sm:$0xf]
      %v1363 = vld [vmem:[%s3 + $0x50] sm:$0xf]
      %v1364 = vld [vmem:[%s3 + $0x54] sm:$0xf]
      %v1365 = vld [vmem:[%s3 + $0x58] sm:$0xf]
      %v1366 = vld [vmem:[%s3 + $0x5c] sm:$0xf]
      %v1367 = vld [vmem:[%s3 + $0x60] sm:$0xf]
      %v1368 = vld [vmem:[%s3 + $0x64] sm:$0xf]
      %v1369 = vld [vmem:[%s3 + $0x68] sm:$0xf]
      %v1370 = vld [vmem:[%s3 + $0x6c] sm:$0xf]
      %v1371 = vld [vmem:[%s3 + $0x70] sm:$0xf]
      %v1372 = vld [vmem:[%s3 + $0x74] sm:$0xf]
      %v1373 = vld [vmem:[%s3 + $0x78] sm:$0xf]
      %v1374 = vld [vmem:[%s3 + $0x7c] sm:$0xf]
      %v1375 = vld [vmem:[%s3 + $0x80] sm:$0xf]
      %v1376 = vld [vmem:[%s3 + $0x84] sm:$0xf]
      %v1377 = vld [vmem:[%s3 + $0x88] sm:$0xf]
      %v1378 = vld [vmem:[%s3 + $0x8c] sm:$0xf]
      %v1379 = vld [vmem:[%s4] sm:$0x1]
      %v1381 = vlaneseq
      %v1382 = vshrl.u32 %v1381, 7
      %v1383 = vsub.s32 0, %v1382
      %v1384 = vrot.slane %v1379, %v1383
      %v1402 = vunpack.c.l.b16 %v1327
      %v1403 = vunpack.c.h.b16 %v1327
      %v1404 = vunpack.c.l.b16 %v1328
      %v1405 = vunpack.c.l.b16 %v1329
      %v1406 = vunpack.c.h.b16 %v1329
      %v1407 = vunpack.c.l.b16 %v1330
      %v1408 = vunpack.c.l.b16 %v1331
      %v1409 = vunpack.c.h.b16 %v1331
      %v1410 = vunpack.c.l.b16 %v1332
      %v1411 = vunpack.c.l.b16 %v1333
      %v1412 = vunpack.c.h.b16 %v1333
      %v1413 = vunpack.c.l.b16 %v1334
      %v1414 = vunpack.c.l.b16 %v1335
      %v1415 = vunpack.c.h.b16 %v1335
      %v1416 = vunpack.c.l.b16 %v1336
      %v1417 = vunpack.c.l.b16 %v1337
      %v1418 = vunpack.c.h.b16 %v1337
      %v1419 = vunpack.c.l.b16 %v1338
      %v1420 = vunpack.c.l.b16 %v1339
      %v1421 = vunpack.c.h.b16 %v1339
      %v1422 = vunpack.c.l.b16 %v1340
      %v1423 = vunpack.c.l.b16 %v1341
      %v1424 = vunpack.c.h.b16 %v1341
      %v1425 = vunpack.c.l.b16 %v1342
      %v1426 = vpack.c.b16 %v1405, %v1402
      %v1427 = vpack.c.b16 %v1406, %v1403
      %v1428 = vpack.c.b16 %v1407, %v1404
      %v1429 = vpack.c.b16 %v1411, %v1408
      %v1430 = vpack.c.b16 %v1412, %v1409
      %v1431 = vpack.c.b16 %v1413, %v1410
      %v1432 = vpack.c.b16 %v1417, %v1414
      %v1433 = vpack.c.b16 %v1418, %v1415
      %v1434 = vpack.c.b16 %v1419, %v1416
      %v1435 = vpack.c.b16 %v1423, %v1420
      %v1436 = vpack.c.b16 %v1424, %v1421
      %v1437 = vpack.c.b16 %v1425, %v1422
      %v1482 = vunpack.c.l.b16 %v1343
      %v1483 = vunpack.c.l.b16 %v1344
      %v1484 = vunpack.c.l.b16 %v1345
      %v1485 = vunpack.c.l.b16 %v1346
      %v1486 = vunpack.c.l.b16 %v1347
      %v1487 = vunpack.c.l.b16 %v1348
      %v1488 = vunpack.c.l.b16 %v1349
      %v1489 = vunpack.c.l.b16 %v1350
      %v1490 = vunpack.c.l.b16 %v1351
      %v1491 = vunpack.c.l.b16 %v1352
      %v1492 = vunpack.c.l.b16 %v1353
      %v1493 = vunpack.c.l.b16 %v1354
      %v1494 = vunpack.c.l.b16 %v1355
      %v1495 = vunpack.c.l.b16 %v1356
      %v1496 = vunpack.c.l.b16 %v1357
      %v1497 = vunpack.c.l.b16 %v1358
      %v1498 = vunpack.c.l.b16 %v1359
      %v1499 = vunpack.c.l.b16 %v1360
      %v1500 = vunpack.c.l.b16 %v1361
      %v1501 = vunpack.c.l.b16 %v1362
      %v1502 = vunpack.c.l.b16 %v1363
      %v1503 = vunpack.c.l.b16 %v1364
      %v1504 = vunpack.c.l.b16 %v1365
      %v1505 = vunpack.c.l.b16 %v1366
      %v1506 = vunpack.c.l.b16 %v1367
      %v1507 = vunpack.c.l.b16 %v1368
      %v1508 = vunpack.c.l.b16 %v1369
      %v1509 = vunpack.c.l.b16 %v1370
      %v1510 = vunpack.c.l.b16 %v1371
      %v1511 = vunpack.c.l.b16 %v1372
      %v1512 = vunpack.c.l.b16 %v1373
      %v1513 = vunpack.c.l.b16 %v1374
      %v1514 = vunpack.c.l.b16 %v1375
      %v1515 = vunpack.c.l.b16 %v1376
      %v1516 = vunpack.c.l.b16 %v1377
      %v1517 = vunpack.c.l.b16 %v1378
      %v1518 = vpack.c.b16 %v1483, %v1482
      %v1519 = vpack.c.b16 %v1485, %v1484
      %v1520 = vpack.c.b16 %v1487, %v1486
      %v1521 = vpack.c.b16 %v1489, %v1488
      %v1522 = vpack.c.b16 %v1491, %v1490
      %v1523 = vpack.c.b16 %v1493, %v1492
      %v1524 = vpack.c.b16 %v1495, %v1494
      %v1525 = vpack.c.b16 %v1497, %v1496
      %v1526 = vpack.c.b16 %v1499, %v1498
      %v1527 = vpack.c.b16 %v1501, %v1500
      %v1528 = vpack.c.b16 %v1503, %v1502
      %v1529 = vpack.c.b16 %v1505, %v1504
      %v1530 = vpack.c.b16 %v1507, %v1506
      %v1531 = vpack.c.b16 %v1509, %v1508
      %v1532 = vpack.c.b16 %v1511, %v1510
      %v1533 = vpack.c.b16 %v1513, %v1512
      %v1534 = vpack.c.b16 %v1515, %v1514
      %v1535 = vpack.c.b16 %v1517, %v1516
      %vm1554 = vcmask 261120
      %v1556 = vsel %vm1554, %v1428, 0
      %v1559 = vsel %vm1554, %v1431, 0
      %v1562 = vsel %vm1554, %v1434, 0
      %v1565 = vsel %vm1554, %v1437, 0
      %1567 = vmatprep.subr.bf16.mxu0 0
      %1568 = vmatpush1.bf16.msra.mxu0 %v1518
      %1569 = vmatprep.subr.bf16.mxu0 0
      %1570 = vmatpush1.bf16.msra.mxu0 %v1519
      %1571 = vmatprep.subr.bf16.mxu0 0
      %1572 = vmatpush1.bf16.msra.mxu0 %v1520
      %1573 = vmatprep.subr.bf16.mxu0 0
      %1574 = vmatpush1.bf16.msra.mxu0 %v1521
      %1575 = vmatprep.subr.bf16.mxu0 0
      %1576 = vmatpush1.bf16.msra.mxu0 %v1522
      %1577 = vmatprep.subr.bf16.mxu0 0
      %1578 = vmatpush1.bf16.msra.mxu0 %v1523
      %1579 = vmatprep.subr.bf16.mxu0 0
      %1580 = vmatpush1.bf16.msra.mxu0 %v1524
      %1581 = vmatprep.subr.bf16.mxu0 0
      %1582 = vmatpush1.bf16.msra.mxu0 %v1525
      %1583 = vmatprep.subr.bf16.mxu0 0
      %1584 = vmatpush1.bf16.msra.mxu0 %v1526
      %1585 = vmatprep.subr.bf16.mxu0 0
      %1586 = vmatpush1.bf16.msra.mxu0 %v1527
      %1587 = vmatprep.subr.bf16.mxu0 0
      %1588 = vmatpush1.bf16.msra.mxu0 %v1528
      %1589 = vmatprep.subr.bf16.mxu0 0
      %1590 = vmatpush1.bf16.msra.mxu0 %v1529
      %1591 = vmatprep.subr.bf16.mxu0 0
      %1592 = vmatpush1.bf16.msra.mxu0 %v1530
      %1593 = vmatprep.subr.bf16.mxu0 0
      %1594 = vmatpush1.bf16.msra.mxu0 %v1531
      %1595 = vmatprep.subr.bf16.mxu0 0
      %1596 = vmatpush1.bf16.msra.mxu0 %v1532
      %1597 = vmatprep.subr.bf16.mxu0 0
      %1598 = vmatpush1.bf16.msra.mxu0 %v1533
      %1599 = vmatprep.mubr.bf16.mxu0 %v1427
      %1600 = vmatmul.mubr.bf16.gmra.mrb[0].mxu0 %v1426
      %v1601 = vpop.f32.mrb[0].mxu0
      %v1602 = vadd.f32 %v1384, %v1601
      %v1603 = vpop.f32.mrb[0].mxu0
      %v1604 = vpop.f32.mrb[0].mxu0
      %v1605 = vadd.f32 %v1384, %v1604
      %v1606 = vpop.f32.mrb[0].mxu0
      %1607 = vmatprep.mubr.bf16.mxu0 %v1430
      %1608 = vmatmul.mubr.bf16.gmra.mrb[0].mxu0 %v1429
      %v1609 = vpop.f32.mrb[0].mxu0
      %v1610 = vadd.f32 %v1384, %v1609
      %v1611 = vpop.f32.mrb[0].mxu0
      %v1612 = vpop.f32.mrb[0].mxu0
      %v1613 = vadd.f32 %v1384, %v1612
      %v1614 = vpop.f32.mrb[0].mxu0
      %1615 = vmatprep.mubr.bf16.mxu0 %v1433
      %1616 = vmatmul.mubr.bf16.gmra.mrb[0].mxu0 %v1432
      %v1617 = vpop.f32.mrb[0].mxu0
      %v1618 = vadd.f32 %v1384, %v1617
      %v1619 = vpop.f32.mrb[0].mxu0
      %v1620 = vpop.f32.mrb[0].mxu0
      %v1621 = vadd.f32 %v1384, %v1620
      %v1622 = vpop.f32.mrb[0].mxu0
      %1623 = vmatprep.mubr.bf16.mxu0 %v1436
      %1624 = vmatmul.mubr.bf16.gmra.mrb[0].mxu0 %v1435
      %v1625 = vpop.f32.mrb[0].mxu0
      %v1626 = vadd.f32 %v1384, %v1625
      %v1627 = vpop.f32.mrb[0].mxu0
      %v1628 = vpop.f32.mrb[0].mxu0
      %v1629 = vadd.f32 %v1384, %v1628
      %v1630 = vpop.f32.mrb[0].mxu0
      %1631 = vdwg.mxu0
      %1632 = vmatprep.subr.bf16.mxu0 0
      %1633 = vmatpush1.bf16.msra.mxu0 %v1534
      %1634 = vmatprep.subr.bf16.mxu0 0
      %1635 = vmatpush1.bf16.msra.mxu0 %v1535
      %1636 = vmatprep.subr.bf16.mxu0 0
      %1637 = vmatpush1.bf16.msra.mxu0 0
      %1638 = vmatprep.subr.bf16.mxu0 0
      %1639 = vmatpush1.bf16.msra.mxu0 0
      %1640 = vmatprep.subr.bf16.mxu0 0
      %1641 = vmatpush1.bf16.msra.mxu0 0
      %1642 = vmatprep.subr.bf16.mxu0 0
      %1643 = vmatpush1.bf16.msra.mxu0 0
      %1644 = vmatprep.subr.bf16.mxu0 0
      %1645 = vmatpush1.bf16.msra.mxu0 0
      %1646 = vmatprep.subr.bf16.mxu0 0
      %1647 = vmatpush1.bf16.msra.mxu0 0
      %1648 = vmatprep.subr.bf16.mxu0 0
      %1649 = vmatpush1.bf16.msra.mxu0 0
      %1650 = vmatprep.subr.bf16.mxu0 0
      %1651 = vmatpush1.bf16.msra.mxu0 0
      %1652 = vmatprep.subr.bf16.mxu0 0
      %1653 = vmatpush1.bf16.msra.mxu0 0
      %1654 = vmatprep.subr.bf16.mxu0 0
      %1655 = vmatpush1.bf16.msra.mxu0 0
      %1656 = vmatprep.subr.bf16.mxu0 0
      %1657 = vmatpush1.bf16.msra.mxu0 0
      %1658 = vmatprep.subr.bf16.mxu0 0
      %1659 = vmatpush1.bf16.msra.mxu0 0
      %1660 = vmatprep.subr.bf16.mxu0 0
      %1661 = vmatpush1.bf16.msra.mxu0 0
      %1662 = vmatprep.subr.bf16.mxu0 0
      %1663 = vmatpush1.bf16.msra.mxu0 0
      %1664 = vmatprep.mubr.bf16.mxu0 0
      %1665 = vmatmul.mubr.bf16.gmra.mrb[0].mxu0 %v1556
      %v1666 = vpop.f32.mrb[0].mxu0
      %v1667 = vadd.f32 %v1602, %v1666
      %v1668 = vpop.f32.mrb[0].mxu0
      %v1669 = vpop.f32.mrb[0].mxu0
      %v1670 = vadd.f32 %v1605, %v1669
      %v1671 = vpop.f32.mrb[0].mxu0
      %1672 = vmatprep.mubr.bf16.mxu0 0
      %1673 = vmatmul.mubr.bf16.gmra.mrb[0].mxu0 %v1559
      %v1674 = vpop.f32.mrb[0].mxu0
      %v1675 = vadd.f32 %v1610, %v1674
      %v1676 = vpop.f32.mrb[0].mxu0
      %v1677 = vpop.f32.mrb[0].mxu0
      %v1678 = vadd.f32 %v1613, %v1677
      %v1679 = vpop.f32.mrb[0].mxu0
      %1680 = vmatprep.mubr.bf16.mxu0 0
      %1681 = vmatmul.mubr.bf16.gmra.mrb[0].mxu0 %v1562
      %v1682 = vpop.f32.mrb[0].mxu0
      %v1683 = vadd.f32 %v1618, %v1682
      %v1684 = vpop.f32.mrb[0].mxu0
      %v1685 = vpop.f32.mrb[0].mxu0
      %v1686 = vadd.f32 %v1621, %v1685
      %v1687 = vpop.f32.mrb[0].mxu0
      %1688 = vmatprep.mubr.bf16.mxu0 0
      %1689 = vmatmul.mubr.bf16.gmra.mrb[0].mxu0 %v1565
      %v1690 = vpop.f32.mrb[0].mxu0
      %v1691 = vadd.f32 %v1626, %v1690
      %v1692 = vpop.f32.mrb[0].mxu0
      %v1693 = vpop.f32.mrb[0].mxu0
      %v1694 = vadd.f32 %v1629, %v1693
      %v1695 = vpop.f32.mrb[0].mxu0
      %1696 = vdwg.mxu0
      %s1697 = sld [smem:[#allocation4]]
      %vm1698 = vcmp.ge.f32.partialorder %v1667, 0.0
      %vm1699 = vcmp.ge.f32.partialorder %v1670, 0.0
      %vm1700 = vcmp.ge.f32.partialorder %v1675, 0.0
      %vm1701 = vcmp.ge.f32.partialorder %v1678, 0.0
      %vm1702 = vcmp.ge.f32.partialorder %v1683, 0.0
      %vm1703 = vcmp.ge.f32.partialorder %v1686, 0.0
      %vm1704 = vcmp.ge.f32.partialorder %v1691, 0.0
      %vm1705 = vcmp.ge.f32.partialorder %v1694, 0.0
      %v1706 = vstv %s1697
      %v1707 = vmul.f32 %v1706, %v1667
      %v1708 = vmul.f32 %v1706, %v1670
      %v1709 = vmul.f32 %v1706, %v1675
      %v1710 = vmul.f32 %v1706, %v1678
      %v1711 = vmul.f32 %v1706, %v1683
      %v1712 = vmul.f32 %v1706, %v1686
      %v1713 = vmul.f32 %v1706, %v1691
      %v1714 = vmul.f32 %v1706, %v1694
      %v1715 = vsel %vm1698, %v1667, %v1707
      %v1716 = vsel %vm1699, %v1670, %v1708
      %v1717 = vsel %vm1700, %v1675, %v1709
      %v1718 = vsel %vm1701, %v1678, %v1710
      %v1719 = vsel %vm1702, %v1683, %v1711
      %v1720 = vsel %vm1703, %v1686, %v1712
      %v1721 = vsel %vm1704, %v1691, %v1713
      %v1722 = vsel %vm1705, %v1694, %v1714
      %v1723 = vpack.c.bf16 %v1715, %v1715
      %v1724 = vpack.c.bf16 %v1716, %v1716
      %v1725 = vpack.c.bf16 %v1717, %v1717
      %v1726 = vpack.c.bf16 %v1718, %v1718
      %v1727 = vpack.c.bf16 %v1719, %v1719
      %v1728 = vpack.c.bf16 %v1720, %v1720
      %v1729 = vpack.c.bf16 %v1721, %v1721
      %v1730 = vpack.c.bf16 %v1722, %v1722
      %1731 = vst [vmem:[%s421] sm:$0xf] %v1723
      %1732 = vst [vmem:[%s421 + $0x4] sm:$0xf] %v1724
      %1733 = vst [vmem:[%s421 + $0x8] sm:$0xf] %v1725
      %1734 = vst [vmem:[%s421 + $0xc] sm:$0xf] %v1726
      %1735 = vst [vmem:[%s421 + $0x10] sm:$0xf] %v1727
      %1736 = vst [vmem:[%s421 + $0x14] sm:$0xf] %v1728
      %1737 = vst [vmem:[%s421 + $0x18] sm:$0xf] %v1729
      %1738 = vst [vmem:[%s421 + $0x1c] sm:$0xf] %v1730
      %s1739 = smul.u32 8, %s23
      %p1740 = scmp.lt.s32.totalorder %s22, 1
      %s1741 = scalar_select %p1740, %s22, 1
      %p1742 = scmp.lt.s32.totalorder %s1739, 7
      %s1743 = scalar_select %p1742, %s1739, 7
      %s1744 = smul.addr %s1741, 8
      %s1745 = sadd.s32 %s1743, %s1744
      %s1746 = smul.addr %s1745, 4
      %s1747 = scalar_lea.vmem %s6, %s1746
      // Predicated region
      $region45: #{srresnet_decoder_forward.2} parent=43 // pred_check
        %p1748 = pneg %p207
      $region46: #{srresnet_decoder_forward.2} parent=43 // pred_check_branch
        %1750 = sbr.rel (%p1748) target = $region48
      $region47: #{srresnet_decoder_forward.2} parent=43 // pred_region
        %s1751 = smul.u32 8, %s23
      $region48: #{srresnet_decoder_forward.2} parent=43 // pred_fallthru
        _
    $region44: #{srresnet_decoder_forward.2} parent=5 // pred_fallthru
      _
    %p1752 = scmp.le.s32.totalorder 2, %s13
    // Predicated region
    $region49: #{srresnet_decoder_forward.2} parent=5 // pred_check
      %p1753 = pneg %p1752
    $region50: #{srresnet_decoder_forward.2} parent=5 // pred_check_branch
      %1755 = sbr.rel (%p1753) target = $region52
    $region51: #{srresnet_decoder_forward.2} parent=5 // pred_region
      %s1756 = ssub.s32 %s13, 2
      // Predicated region
      $region53: #{srresnet_decoder_forward.2} parent=51 // pred_check
        %p1757 = pneg %p213
      $region54: #{srresnet_decoder_forward.2} parent=51 // pred_check_branch
        %1759 = sbr.rel (%p1757) target = $region56
      $region55: #{srresnet_decoder_forward.2} parent=51 // pred_region
        %s1760 = smul.u32 8, %s25
        %p1761 = scmp.lt.s32.totalorder %s24, 1
        %s1762 = scalar_select %p1761, %s24, 1
        %p1763 = scmp.lt.s32.totalorder %s1760, 7
        %s1764 = scalar_select %p1763, %s1760, 7
        %s1765 = smul.addr %s1762, 8
        %s1766 = sadd.s32 %s1764, %s1765
        %s1767 = smul.addr %s1766, 4
        %s1768 = scalar_lea.vmem %s6, %s1767
      $region56: #{srresnet_decoder_forward.2} parent=51 // pred_fallthru
        _
    $region52: #{srresnet_decoder_forward.2} parent=5 // pred_fallthru
      _
  $region6: #{srresnet_decoder_forward.2} parent=0 // loop_footer
    %s17 = sadd.s32 1, %s13
  $region7: #{srresnet_decoder_forward.2} parent=0 // loop_footer_branch
    %12 = sbr.rel target = $region3
  $region8: #{srresnet_decoder_forward.2} parent=0 // loop_exit
    _

// kernel: srresnet_decoder_forward.3
$region0: #{srresnet_decoder_forward.3}
  #allocation0 [shape = 'u32[]', space=smem, size = 0x4, offset = 0x4, fixed_abs, tag = 'smem constant byte address 0x4 - core index']
  #allocation1 [shape = 'u32[144,128]{1,0:T(1,128)}', space=vmem, size = 0x12000, scoped, tag = 'internal scratch']
  #allocation2 [shape = 'bf16[18,18,32]{2,1,0:T(8,128)(2,1)}', space=vmem, size = 0x1b000, scoped, tag = 'scratch operand']
  #allocation3 [shape = 'bf16[16,16,288]{2,1,0:T(16,128)(2,1)}', space=vmem, size = 0x30000, scoped, tag = 'scratch operand']
  #allocation4 [shape = 'f32[1,1]{1,0:T(1,128)S(6)}', space=smem, size = 0x200, scoped, tag = 'scoped memory for srresnet_decoder_forward.3']
  %s0 = inlined_call_operand.vmem [shape: bf16[2,18,18,32], index: 0, kind: input, shape index: {}, may-alias: {0,1,2}]
  %s1 = inlined_call_operand.vmem [shape: bf16[2,18,18,32], index: 1, kind: input, shape index: {}, may-alias: {0,1,2}]
  %s2 = inlined_call_operand.vmem [shape: bf16[2,18,18,32], index: 2, kind: input, shape index: {}, may-alias: {0,1,2}]
  %s3 = inlined_call_operand.vmem [shape: bf16[288,8], index: 3, kind: input, shape index: {}]
  %s4 = inlined_call_operand.vmem [shape: f32[1,8], index: 4, kind: input, shape index: {}]
  %s5 = inlined_call_operand.<no memory space> [shape: f32[1,1], index: 5, kind: input, shape index: {}]
  %s6 = inlined_call_operand.vmem [shape: f32[2,3,256], index: 6, kind: output, shape index: {}]
  %s7 = sld [smem:[#allocation0]]
  $region57: #{srresnet_decoder_forward.3} parent=0
    _
  %s9 = ssub.s32 1, %s7
  %s10 = scalar_select 0, %s9, %s7
  %11 = sst [smem:[#allocation4]] %s5
  loop: start=0, step=1, limit=4
  $region2: #{srresnet_decoder_forward.3} parent=0 // loop_pre_header
    _
  $region3: #{srresnet_decoder_forward.3} parent=0 // loop_header
    %s13 = sphi 0, %s17
    %p14 = scmp.ge.s32.totalorder %s13, 4
    %s20 = sphi 0, %s32
    %s21 = sphi 0, %s28
    %s22 = sphi 0, %s20
    %s23 = sphi 0, %s21
    %s24 = sphi 0, %s22
    %s25 = sphi 0, %s23
    %s37 = sphi 0, %s39
    %s40 = sphi 0, %s37
    %s41 = sphi 0, %s40
    %s57 = sphi 0, %s41
    %s69 = sphi 0, %s71
    %s72 = sphi 0, %s69
    %s73 = sphi 0, %s72
    %s89 = sphi 0, %s73
    %s103 = sphi 0, %s105
    %s106 = sphi 0, %s103
    %s107 = sphi 0, %s106
    %s123 = sphi 0, %s107
    %s127 = sphi 0, %s127
    %s129 = sphi 0, %s127
    %s130 = sphi 0, %s129
    %s144 = sphi 0, %s130
    %s148 = sphi 0, %s148
    %s150 = sphi 0, %s148
    %s151 = sphi 0, %s150
    %s165 = sphi 0, %s151
    %s169 = sphi 0, %s169
    %s171 = sphi 0, %s169
    %s172 = sphi 0, %s171
    %s186 = sphi 0, %s172
    %s194 = sphi 0, %s196
    %s197 = sphi 0, %s194
    %s198 = sphi 0, %s197
    %s214 = sphi 0, %s198
  $region4: #{srresnet_decoder_forward.3} parent=0 // loop_header_branch
    %16 = sbr.rel (%p14) target = $region8
  $region5: #{srresnet_decoder_forward.3} parent=0 // loop_body
    %s18 = ssub.s32 %s13, 1
    %s19 = ssub.s32 %s13, 2
    %s26 = sadd.s32 1, %s21
    %p27 = scmp.ge.s32.totalorder %s26, 1
    %s28 = scalar_select %p27, 0, %s26
    %s29 = sadd.s32 1, %s20
    %s30 = scalar_select %p27, %s29, %s20
    %p31 = scmp.ge.s32.totalorder %s30, 2
    %s32 = scalar_select %p31, 0, %s30
    %s33 = ssub.s32 %s20, %s32
    %s34 = ssub.s32 %s21, %s28
    %s35 = sor.u32 %s33, %s34
    %p36 = scmp.eq.s32.totalorder %s35, 0
    %s38 = sadd.s32 %s37, 1
    %s39 = scalar_select %p36, %s37, %s38
    %p42 = pneg %p36
    %p43 = scmp.eq.s32.totalorder %s13, 1
    %p44 = por %p42, %p43
    %p45 = scmp.ne.s32.totalorder %s37, %s40
    %p46 = scmp.eq.s32.totalorder %s13, 0
    %p47 = por %p45, %p46
    %p48 = scmp.ne.s32.totalorder %s37, %s40
    %p49 = scmp.eq.s32.totalorder %s18, 1
    %p50 = por %p48, %p49
    %p51 = scmp.ne.s32.totalorder %s40, %s41
    %p52 = scmp.eq.s32.totalorder %s18, 0
    %p53 = por %p51, %p52
    %p54 = scmp.ne.s32.totalorder %s40, %s41
    %p55 = scmp.eq.s32.totalorder %s19, 1
    %p56 = por %p54, %p55
    %p58 = scmp.ne.s32.totalorder %s41, %s57
    %p59 = scmp.eq.s32.totalorder %s19, 0
    %p60 = por %p58, %p59
    %s61 = sadd.s32 %s21, 1
    %s62 = smul.u32 %s61, 16
    %s63 = sadd.s32 %s28, 1
    %s64 = smul.u32 %s63, 16
    %s65 = ssub.s32 %s20, %s32
    %s66 = ssub.s32 %s62, %s64
    %s67 = sor.u32 %s65, %s66
    %p68 = scmp.eq.s32.totalorder %s67, 0
    %s70 = sadd.s32 %s69, 1
    %s71 = scalar_select %p68, %s69, %s70
    %p74 = pneg %p68
    %p75 = scmp.eq.s32.totalorder %s13, 1
    %p76 = por %p74, %p75
    %p77 = scmp.ne.s32.totalorder %s69, %s72
    %p78 = scmp.eq.s32.totalorder %s13, 0
    %p79 = por %p77, %p78
    %p80 = scmp.ne.s32.totalorder %s69, %s72
    %p81 = scmp.eq.s32.totalorder %s18, 1
    %p82 = por %p80, %p81
    %p83 = scmp.ne.s32.totalorder %s72, %s73
    %p84 = scmp.eq.s32.totalorder %s18, 0
    %p85 = por %p83, %p84
    %p86 = scmp.ne.s32.totalorder %s72, %s73
    %p87 = scmp.eq.s32.totalorder %s19, 1
    %p88 = por %p86, %p87
    %p90 = scmp.ne.s32.totalorder %s73, %s89
    %p91 = scmp.eq.s32.totalorder %s19, 0
    %p92 = por %p90, %p91
    %s93 = sadd.s32 %s21, 1
    %s94 = smul.u32 %s93, 16
    %s95 = sadd.s32 %s94, 1
    %s96 = sadd.s32 %s28, 1
    %s97 = smul.u32 %s96, 16
    %s98 = sadd.s32 %s97, 1
    %s99 = ssub.s32 %s20, %s32
    %s100 = ssub.s32 %s95, %s98
    %s101 = sor.u32 %s99, %s100
    %p102 = scmp.eq.s32.totalorder %s101, 0
    %s104 = sadd.s32 %s103, 1
    %s105 = scalar_select %p102, %s103, %s104
    %p108 = pneg %p102
    %p109 = scmp.eq.s32.totalorder %s13, 1
    %p110 = por %p108, %p109
    %p111 = scmp.ne.s32.totalorder %s103, %s106
    %p112 = scmp.eq.s32.totalorder %s13, 0
    %p113 = por %p111, %p112
    %p114 = scmp.ne.s32.totalorder %s103, %s106
    %p115 = scmp.eq.s32.totalorder %s18, 1
    %p116 = por %p114, %p115
    %p117 = scmp.ne.s32.totalorder %s106, %s107
    %p118 = scmp.eq.s32.totalorder %s18, 0
    %p119 = por %p117, %p118
    %p120 = scmp.ne.s32.totalorder %s106, %s107
    %p121 = scmp.eq.s32.totalorder %s19, 1
    %p122 = por %p120, %p121
    %p124 = scmp.ne.s32.totalorder %s107, %s123
    %p125 = scmp.eq.s32.totalorder %s19, 0
    %p126 = por %p124, %p125
    %s128 = sadd.s32 %s127, 1
    %p131 = scmp.eq.s32.totalorder %s13, 1
    %p132 = scmp.ne.s32.totalorder %s127, %s129
    %p133 = scmp.eq.s32.totalorder %s13, 0
    %p134 = por %p132, %p133
    %p135 = scmp.ne.s32.totalorder %s127, %s129
    %p136 = scmp.eq.s32.totalorder %s18, 1
    %p137 = por %p135, %p136
    %p138 = scmp.ne.s32.totalorder %s129, %s130
    %p139 = scmp.eq.s32.totalorder %s18, 0
    %p140 = por %p138, %p139
    %p141 = scmp.ne.s32.totalorder %s129, %s130
    %p142 = scmp.eq.s32.totalorder %s19, 1
    %p143 = por %p141, %p142
    %p145 = scmp.ne.s32.totalorder %s130, %s144
    %p146 = scmp.eq.s32.totalorder %s19, 0
    %p147 = por %p145, %p146
    %s149 = sadd.s32 %s148, 1
    %p152 = scmp.eq.s32.totalorder %s13, 1
    %p153 = scmp.ne.s32.totalorder %s148, %s150
    %p154 = scmp.eq.s32.totalorder %s13, 0
    %p155 = por %p153, %p154
    %p156 = scmp.ne.s32.totalorder %s148, %s150
    %p157 = scmp.eq.s32.totalorder %s18, 1
    %p158 = por %p156, %p157
    %p159 = scmp.ne.s32.totalorder %s150, %s151
    %p160 = scmp.eq.s32.totalorder %s18, 0
    %p161 = por %p159, %p160
    %p162 = scmp.ne.s32.totalorder %s150, %s151
    %p163 = scmp.eq.s32.totalorder %s19, 1
    %p164 = por %p162, %p163
    %p166 = scmp.ne.s32.totalorder %s151, %s165
    %p167 = scmp.eq.s32.totalorder %s19, 0
    %p168 = por %p166, %p167
    %s170 = sadd.s32 %s169, 1
    %p173 = scmp.eq.s32.totalorder %s13, 1
    %p174 = scmp.ne.s32.totalorder %s169, %s171
    %p175 = scmp.eq.s32.totalorder %s13, 0
    %p176 = por %p174, %p175
    %p177 = scmp.ne.s32.totalorder %s169, %s171
    %p178 = scmp.eq.s32.totalorder %s18, 1
    %p179 = por %p177, %p178
    %p180 = scmp.ne.s32.totalorder %s171, %s172
    %p181 = scmp.eq.s32.totalorder %s18, 0
    %p182 = por %p180, %p181
    %p183 = scmp.ne.s32.totalorder %s171, %s172
    %p184 = scmp.eq.s32.totalorder %s19, 1
    %p185 = por %p183, %p184
    %p187 = scmp.ne.s32.totalorder %s172, %s186
    %p188 = scmp.eq.s32.totalorder %s19, 0
    %p189 = por %p187, %p188
    %s190 = ssub.s32 %s20, %s32
    %s191 = ssub.s32 %s21, %s28
    %s192 = sor.u32 %s190, %s191
    %p193 = scmp.eq.s32.totalorder %s192, 0
    %s195 = sadd.s32 %s194, 1
    %s196 = scalar_select %p193, %s194, %s195
    %p199 = pneg %p193
    %p200 = scmp.eq.s32.totalorder %s13, 1
    %p201 = por %p199, %p200
    %p202 = scmp.ne.s32.totalorder %s194, %s197
    %p203 = scmp.eq.s32.totalorder %s13, 0
    %p204 = por %p202, %p203
    %p205 = scmp.ne.s32.totalorder %s194, %s197
    %p206 = scmp.eq.s32.totalorder %s18, 1
    %p207 = por %p205, %p206
    %p208 = scmp.ne.s32.totalorder %s197, %s198
    %p209 = scmp.eq.s32.totalorder %s18, 0
    %p210 = por %p208, %p209
    %p211 = scmp.ne.s32.totalorder %s197, %s198
    %p212 = scmp.eq.s32.totalorder %s19, 1
    %p213 = por %p211, %p212
    %p215 = scmp.ne.s32.totalorder %s198, %s214
    %p216 = scmp.eq.s32.totalorder %s19, 0
    %p217 = por %p215, %p216
    %p218 = scmp.le.s32.totalorder 1, %s13
    %p219 = scmp.lt.s32.totalorder %s13, 3
    %p220 = pnand %p218, %p219
    %p221 = pneg %p220
    // Predicated region
    $region9: #{srresnet_decoder_forward.3} parent=5 // pred_check
      _
    $region10: #{srresnet_decoder_forward.3} parent=5 // pred_check_branch
      %223 = sbr.rel (%p220) target = $region12
    $region11: #{srresnet_decoder_forward.3} parent=5 // pred_region
      %s224 = ssub.s32 %s13, 1
      // Predicated region
      $region13: #{srresnet_decoder_forward.3} parent=11 // pred_check
        %p225 = pneg %p140
      $region14: #{srresnet_decoder_forward.3} parent=11 // pred_check_branch
        %227 = sbr.rel (%p225) target = $region16
      $region15: #{srresnet_decoder_forward.3} parent=11 // pred_region
        _
      $region16: #{srresnet_decoder_forward.3} parent=11 // pred_fallthru
        _
      // Predicated region
      $region17: #{srresnet_decoder_forward.3} parent=11 // pred_check
        %p228 = pneg %p161
      $region18: #{srresnet_decoder_forward.3} parent=11 // pred_check_branch
        %230 = sbr.rel (%p228) target = $region20
      $region19: #{srresnet_decoder_forward.3} parent=11 // pred_region
        _
      $region20: #{srresnet_decoder_forward.3} parent=11 // pred_fallthru
        _
      // Predicated region
      $region21: #{srresnet_decoder_forward.3} parent=11 // pred_check
        %p231 = pneg %p182
      $region22: #{srresnet_decoder_forward.3} parent=11 // pred_check_branch
        %233 = sbr.rel (%p231) target = $region24
      $region23: #{srresnet_decoder_forward.3} parent=11 // pred_region
        _
      $region24: #{srresnet_decoder_forward.3} parent=11 // pred_fallthru
        _
    $region12: #{srresnet_decoder_forward.3} parent=5 // pred_fallthru
      _
    %p234 = scmp.lt.s32.totalorder %s13, 2
    // Predicated region
    $region25: #{srresnet_decoder_forward.3} parent=5 // pred_check
      %p235 = pneg %p234
    $region26: #{srresnet_decoder_forward.3} parent=5 // pred_check_branch
      %237 = sbr.rel (%p235) target = $region28
    $region27: #{srresnet_decoder_forward.3} parent=5 // pred_region
      // Predicated region
      $region29: #{srresnet_decoder_forward.3} parent=27 // pred_check
        %p238 = pneg %p47
      $region30: #{srresnet_decoder_forward.3} parent=27 // pred_check_branch
        %240 = sbr.rel (%p238) target = $region32
      $region31: #{srresnet_decoder_forward.3} parent=27 // pred_region
        %s241 = smul.u32 16, %s21
        %s242 = ssub.s32 18, %s241
        %p243 = scmp.lt.s32.totalorder %s242, 16
        %s244 = scalar_select %p243, %s242, 16
        %s245 = smul.u32 64, %s244
        %s246 = smul.u32 %s245, 3
        %p247 = scmp.lt.s32.totalorder %s20, 1
        %s248 = scalar_select %p247, %s20, 1
        %p249 = scmp.lt.s32.totalorder %s241, 17
        %s250 = scalar_select %p249, %s241, 17
        %s251 = smul.addr %s250, 3
        %s252 = smul.addr %s248, 54
        %s253 = sadd.s32 %s251, %s252
        %s254 = smul.addr %s253, 4
        %s255 = scalar_lea.vmem %s0, %s254
        %s256 = smul.u32 16, %s21
        %s257 = ssub.s32 18, %s256
        %p258 = scmp.lt.s32.totalorder %s257, 16
        %s259 = scalar_select %p258, %s257, 16
        %s260 = smul.u32 64, %s259
        %s261 = smul.u32 %s260, 3
      $region32: #{srresnet_decoder_forward.3} parent=27 // pred_fallthru
        _
      // Predicated region
      $region33: #{srresnet_decoder_forward.3} parent=27 // pred_check
        %p262 = pneg %p79
      $region34: #{srresnet_decoder_forward.3} parent=27 // pred_check_branch
        %264 = sbr.rel (%p262) target = $region36
      $region35: #{srresnet_decoder_forward.3} parent=27 // pred_region
        %s265 = sadd.s32 %s21, 1
        %s266 = smul.u32 %s265, 16
        %p267 = scmp.lt.s32.totalorder %s20, 1
        %s268 = scalar_select %p267, %s20, 1
        %p269 = scmp.lt.s32.totalorder %s266, 17
        %s270 = scalar_select %p269, %s266, 17
        %s271 = smul.addr %s270, 3
        %s272 = smul.addr %s268, 54
        %s273 = sadd.s32 %s271, %s272
        %s274 = smul.addr %s273, 4
        %s275 = scalar_lea.vmem %s1, %s274
        %s276 = sadd.s32 %s21, 1
        %s277 = smul.u32 %s276, 16
      $region36: #{srresnet_decoder_forward.3} parent=27 // pred_fallthru
        _
      // Predicated region
      $region37: #{srresnet_decoder_forward.3} parent=27 // pred_check
        %p278 = pneg %p113
      $region38: #{srresnet_decoder_forward.3} parent=27 // pred_check_branch
        %280 = sbr.rel (%p278) target = $region40
      $region39: #{srresnet_decoder_forward.3} parent=27 // pred_region
        %s281 = sadd.s32 %s21, 1
        %s282 = smul.u32 %s281, 16
        %s283 = sadd.s32 %s282, 1
        %p284 = scmp.lt.s32.totalorder %s20, 1
        %s285 = scalar_select %p284, %s20, 1
        %p286 = scmp.lt.s32.totalorder %s283, 17
        %s287 = scalar_select %p286, %s283, 17
        %s288 = smul.addr %s287, 3
        %s289 = smul.addr %s285, 54
        %s290 = sadd.s32 %s288, %s289
        %s291 = smul.addr %s290, 4
        %s292 = scalar_lea.vmem %s2, %s291
        %s293 = sadd.s32 %s21, 1
        %s294 = smul.u32 %s293, 16
        %s295 = sadd.s32 %s294, 1
      $region40: #{srresnet_decoder_forward.3} parent=27 // pred_fallthru
        _
    $region28: #{srresnet_decoder_forward.3} parent=5 // pred_fallthru
      _
    %p296 = scmp.le.s32.totalorder 1, %s13
    %p297 = scmp.lt.s32.totalorder %s13, 3
    %p298 = pnand %p296, %p297
    %p299 = pneg %p298
    // Predicated region
    $region41: #{srresnet_decoder_forward.3} parent=5 // pred_check
      _
    $region42: #{srresnet_decoder_forward.3} parent=5 // pred_check_branch
      %301 = sbr.rel (%p298) target = $region44
    $region43: #{srresnet_decoder_forward.3} parent=5 // pred_region
      %s302 = ssub.s32 %s13, 1
      %s303 = smul.u32 16, %s23
      %s304 = ssub.s32 18, %s303
      %p305 = scmp.lt.s32.totalorder %s304, 16
      %s306 = scalar_select %p305, %s304, 16
      %s307 = smul.u32 64, %s306
      %s308 = smul.u32 %s307, 3
      %p309 = scmp.lt.s32.totalorder %s22, 1
      %s310 = scalar_select %p309, %s22, 1
      %p311 = scmp.lt.s32.totalorder %s303, 17
      %s312 = scalar_select %p311, %s303, 17
      %s313 = smul.addr %s312, 3
      %s314 = smul.addr %s310, 54
      %s315 = sadd.s32 %s313, %s314
      %s316 = smul.addr %s315, 4
      %s317 = scalar_lea.vmem %s0, %s316
      %p318 = pneg %p53
      %p319 = pneg %p50
      %s320 = sadd.s32 %s23, 1
      %s321 = smul.u32 %s320, 16
      %p322 = scmp.lt.s32.totalorder %s22, 1
      %s323 = scalar_select %p322, %s22, 1
      %p324 = scmp.lt.s32.totalorder %s321, 17
      %s325 = scalar_select %p324, %s321, 17
      %s326 = smul.addr %s325, 3
      %s327 = smul.addr %s323, 54
      %s328 = sadd.s32 %s326, %s327
      %s329 = smul.addr %s328, 4
      %s330 = scalar_lea.vmem %s1, %s329
      %p331 = pneg %p85
      %p332 = pneg %p82
      %s333 = sadd.s32 %s23, 1
      %s334 = smul.u32 %s333, 16
      %s335 = sadd.s32 %s334, 1
      %p336 = scmp.lt.s32.totalorder %s22, 1
      %s337 = scalar_select %p336, %s22, 1
      %p338 = scmp.lt.s32.totalorder %s335, 17
      %s339 = scalar_select %p338, %s335, 17
      %s340 = smul.addr %s339, 3
      %s341 = smul.addr %s337, 54
      %s342 = sadd.s32 %s340, %s341
      %s343 = smul.addr %s342, 4
      %s344 = scalar_lea.vmem %s2, %s343
      %p345 = pneg %p119
      %p346 = pneg %p116
      %p347 = pneg %p140
      %p348 = pneg %p137
      %p349 = pneg %p161
      %p350 = pneg %p158
      %p351 = pneg %p182
      %p352 = pneg %p179
      %p353 = pneg %p210
      %p354 = pneg %p207
      %s355 = smul.u32 2, %s23
      %p356 = scmp.lt.s32.totalorder %s22, 1
      %s357 = scalar_select %p356, %s22, 1
      %p358 = scmp.lt.s32.totalorder %s355, 1
      %s359 = scalar_select %p358, %s355, 1
      %s360 = smul.addr %s357, 2
      %s361 = sadd.s32 %s359, %s360
      %s362 = smul.addr %s361, 4
      %s363 = scalar_lea.vmem %s6, %s362
      %s364 = smul.u32 16, %s23
      %s365 = ssub.s32 18, %s364
      %p366 = scmp.lt.s32.totalorder %s365, 16
      %s367 = scalar_select %p366, %s365, 16
      %s368 = smul.u32 64, %s367
      %s369 = smul.u32 %s368, 3
      %p370 = scmp.lt.s32.totalorder %s22, 1
      %s371 = scalar_select %p370, %s22, 1
      %p372 = scmp.lt.s32.totalorder %s364, 17
      %s373 = scalar_select %p372, %s364, 17
      %s374 = smul.addr %s373, 3
      %s375 = smul.addr %s371, 54
      %s376 = sadd.s32 %s374, %s375
      %s377 = smul.addr %s376, 4
      %s378 = scalar_lea.vmem %s0, %s377
      %s379 = smul.u32 16, %s23
      %s380 = ssub.s32 18, %s379
      %p381 = scmp.lt.s32.totalorder %s380, 16
      %s382 = scalar_select %p381, %s380, 16
      %s383 = smul.u32 64, %s382
      %s384 = smul.u32 %s383, 3
      %s385 = sadd.s32 %s23, 1
      %s386 = smul.u32 %s385, 16
      %p387 = scmp.lt.s32.totalorder %s22, 1
      %s388 = scalar_select %p387, %s22, 1
      %p389 = scmp.lt.s32.totalorder %s386, 17
      %s390 = scalar_select %p389, %s386, 17
      %s391 = smul.addr %s390, 3
      %s392 = smul.addr %s388, 54
      %s393 = sadd.s32 %s391, %s392
      %s394 = smul.addr %s393, 4
      %s395 = scalar_lea.vmem %s1, %s394
      %s396 = sadd.s32 %s23, 1
      %s397 = smul.u32 %s396, 16
      %s398 = sadd.s32 %s23, 1
      %s399 = smul.u32 %s398, 16
      %s400 = sadd.s32 %s399, 1
      %p401 = scmp.lt.s32.totalorder %s22, 1
      %s402 = scalar_select %p401, %s22, 1
      %p403 = scmp.lt.s32.totalorder %s400, 17
      %s404 = scalar_select %p403, %s400, 17
      %s405 = smul.addr %s404, 3
      %s406 = smul.addr %s402, 54
      %s407 = sadd.s32 %s405, %s406
      %s408 = smul.addr %s407, 4
      %s409 = scalar_lea.vmem %s2, %s408
      %s410 = sadd.s32 %s23, 1
      %s411 = smul.u32 %s410, 16
      %s412 = sadd.s32 %s411, 1
      %s413 = smul.u32 2, %s23
      %p414 = scmp.lt.s32.totalorder %s22, 1
      %s415 = scalar_select %p414, %s22, 1
      %p416 = scmp.lt.s32.totalorder %s413, 1
      %s417 = scalar_select %p416, %s413, 1
      %s418 = smul.addr %s415, 2
      %s419 = sadd.s32 %s417, %s418
      %s420 = smul.addr %s419, 4
      %s421 = scalar_lea.vmem %s6, %s420
      %s422 = smul.u32 2, %s23
      %v424 = vld [vmem:[%s378] sm:$0xf]
      %v425 = vld [vmem:[%s378 + $0x4] sm:$0xf]
      %v426 = vld [vmem:[%s378 + $0x8] sm:$0x1]
      %v427 = vld [vmem:[%s378 + $0xc] sm:$0xf]
      %v428 = vld [vmem:[%s378 + $0x10] sm:$0xf]
      %v429 = vld [vmem:[%s378 + $0x14] sm:$0x1]
      %v430 = vld [vmem:[%s378 + $0x18] sm:$0xf]
      %v431 = vld [vmem:[%s378 + $0x1c] sm:$0xf]
      %v432 = vld [vmem:[%s378 + $0x20] sm:$0x1]
      %v433 = vld [vmem:[%s378 + $0x24] sm:$0xf]
      %v434 = vld [vmem:[%s378 + $0x28] sm:$0xf]
      %v435 = vld [vmem:[%s378 + $0x2c] sm:$0x1]
      %v436 = vld [vmem:[%s378 + $0x30] sm:$0xf]
      %v437 = vld [vmem:[%s378 + $0x34] sm:$0xf]
      %v438 = vld [vmem:[%s378 + $0x38] sm:$0x1]
      %v439 = vld [vmem:[%s378 + $0x3c] sm:$0xf]
      %v440 = vld [vmem:[%s378 + $0x40] sm:$0xf]
      %v441 = vld [vmem:[%s378 + $0x44] sm:$0x1]
      %v442 = vld [vmem:[%s378 + $0x48] sm:$0xf]
      %v443 = vld [vmem:[%s378 + $0x4c] sm:$0xf]
      %v444 = vld [vmem:[%s378 + $0x50] sm:$0x1]
      %v445 = vld [vmem:[%s378 + $0x54] sm:$0xf]
      %v446 = vld [vmem:[%s378 + $0x58] sm:$0xf]
      %v447 = vld [vmem:[%s378 + $0x5c] sm:$0x1]
      %v448 = vld [vmem:[%s378 + $0x60] sm:$0xf]
      %v449 = vld [vmem:[%s378 + $0x64] sm:$0xf]
      %v450 = vld [vmem:[%s378 + $0x68] sm:$0x1]
      %v451 = vld [vmem:[%s378 + $0x6c] sm:$0xf]
      %v452 = vld [vmem:[%s378 + $0x70] sm:$0xf]
      %v453 = vld [vmem:[%s378 + $0x74] sm:$0x1]
      %v454 = vld [vmem:[%s378 + $0x78] sm:$0xf]
      %v455 = vld [vmem:[%s378 + $0x7c] sm:$0xf]
      %v456 = vld [vmem:[%s378 + $0x80] sm:$0x1]
      %v457 = vld [vmem:[%s378 + $0x84] sm:$0xf]
      %v458 = vld [vmem:[%s378 + $0x88] sm:$0xf]
      %v459 = vld [vmem:[%s378 + $0x8c] sm:$0x1]
      %v460 = vld [vmem:[%s378 + $0x90] sm:$0xf]
      %v461 = vld [vmem:[%s378 + $0x94] sm:$0xf]
      %v462 = vld [vmem:[%s378 + $0x98] sm:$0x1]
      %v463 = vld [vmem:[%s378 + $0x9c] sm:$0xf]
      %v464 = vld [vmem:[%s378 + $0xa0] sm:$0xf]
      %v465 = vld [vmem:[%s378 + $0xa4] sm:$0x1]
      %v466 = vld [vmem:[%s378 + $0xa8] sm:$0xf]
      %v467 = vld [vmem:[%s378 + $0xac] sm:$0xf]
      %v468 = vld [vmem:[%s378 + $0xb0] sm:$0x1]
      %v469 = vld [vmem:[%s378 + $0xb4] sm:$0xf]
      %v470 = vld [vmem:[%s378 + $0xb8] sm:$0xf]
      %v471 = vld [vmem:[%s378 + $0xbc] sm:$0x1]
      %vm472 = vcmask 257024
      %473 = vst.msk [vmem:[#allocation2] sm:$0xf] %vm472, %v424
      %474 = vst.msk [vmem:[#allocation2 + $0x4] sm:$0xf] %vm472, %v425
      %vm475 = vcmask 253952
      %476 = vst.msk [vmem:[#allocation2 + $0x8] sm:$0x1] %vm475, %v426
      %477 = vst.msk [vmem:[#allocation2 + $0xc] sm:$0xf] %vm472, %v427
      %478 = vst.msk [vmem:[#allocation2 + $0x10] sm:$0xf] %vm472, %v428
      %479 = vst.msk [vmem:[#allocation2 + $0x14] sm:$0x1] %vm475, %v429
      %480 = vst.msk [vmem:[#allocation2 + $0x18] sm:$0xf] %vm472, %v430
      %481 = vst.msk [vmem:[#allocation2 + $0x1c] sm:$0xf] %vm472, %v431
      %482 = vst.msk [vmem:[#allocation2 + $0x20] sm:$0x1] %vm475, %v432
      %483 = vst.msk [vmem:[#allocation2 + $0x24] sm:$0xf] %vm472, %v433
      %484 = vst.msk [vmem:[#allocation2 + $0x28] sm:$0xf] %vm472, %v434
      %485 = vst.msk [vmem:[#allocation2 + $0x2c] sm:$0x1] %vm475, %v435
      %486 = vst.msk [vmem:[#allocation2 + $0x30] sm:$0xf] %vm472, %v436
      %487 = vst.msk [vmem:[#allocation2 + $0x34] sm:$0xf] %vm472, %v437
      %488 = vst.msk [vmem:[#allocation2 + $0x38] sm:$0x1] %vm475, %v438
      %489 = vst.msk [vmem:[#allocation2 + $0x3c] sm:$0xf] %vm472, %v439
      %490 = vst.msk [vmem:[#allocation2 + $0x40] sm:$0xf] %vm472, %v440
      %491 = vst.msk [vmem:[#allocation2 + $0x44] sm:$0x1] %vm475, %v441
      %492 = vst.msk [vmem:[#allocation2 + $0x48] sm:$0xf] %vm472, %v442
      %493 = vst.msk [vmem:[#allocation2 + $0x4c] sm:$0xf] %vm472, %v443
      %494 = vst.msk [vmem:[#allocation2 + $0x50] sm:$0x1] %vm475, %v444
      %495 = vst.msk [vmem:[#allocation2 + $0x54] sm:$0xf] %vm472, %v445
      %496 = vst.msk [vmem:[#allocation2 + $0x58] sm:$0xf] %vm472, %v446
      %497 = vst.msk [vmem:[#allocation2 + $0x5c] sm:$0x1] %vm475, %v447
      %498 = vst.msk [vmem:[#allocation2 + $0x60] sm:$0xf] %vm472, %v448
      %499 = vst.msk [vmem:[#allocation2 + $0x64] sm:$0xf] %vm472, %v449
      %500 = vst.msk [vmem:[#allocation2 + $0x68] sm:$0x1] %vm475, %v450
      %501 = vst.msk [vmem:[#allocation2 + $0x6c] sm:$0xf] %vm472, %v451
      %502 = vst.msk [vmem:[#allocation2 + $0x70] sm:$0xf] %vm472, %v452
      %503 = vst.msk [vmem:[#allocation2 + $0x74] sm:$0x1] %vm475, %v453
      %504 = vst.msk [vmem:[#allocation2 + $0x78] sm:$0xf] %vm472, %v454
      %505 = vst.msk [vmem:[#allocation2 + $0x7c] sm:$0xf] %vm472, %v455
      %506 = vst.msk [vmem:[#allocation2 + $0x80] sm:$0x1] %vm475, %v456
      %507 = vst.msk [vmem:[#allocation2 + $0x84] sm:$0xf] %vm472, %v457
      %508 = vst.msk [vmem:[#allocation2 + $0x88] sm:$0xf] %vm472, %v458
      %509 = vst.msk [vmem:[#allocation2 + $0x8c] sm:$0x1] %vm475, %v459
      %510 = vst.msk [vmem:[#allocation2 + $0x90] sm:$0xf] %vm472, %v460
      %511 = vst.msk [vmem:[#allocation2 + $0x94] sm:$0xf] %vm472, %v461
      %512 = vst.msk [vmem:[#allocation2 + $0x98] sm:$0x1] %vm475, %v462
      %513 = vst.msk [vmem:[#allocation2 + $0x9c] sm:$0xf] %vm472, %v463
      %514 = vst.msk [vmem:[#allocation2 + $0xa0] sm:$0xf] %vm472, %v464
      %515 = vst.msk [vmem:[#allocation2 + $0xa4] sm:$0x1] %vm475, %v465
      %516 = vst.msk [vmem:[#allocation2 + $0xa8] sm:$0xf] %vm472, %v466
      %517 = vst.msk [vmem:[#allocation2 + $0xac] sm:$0xf] %vm472, %v467
      %518 = vst.msk [vmem:[#allocation2 + $0xb0] sm:$0x1] %vm475, %v468
      %519 = vst.msk [vmem:[#allocation2 + $0xb4] sm:$0xf] %vm472, %v469
      %520 = vst.msk [vmem:[#allocation2 + $0xb8] sm:$0xf] %vm472, %v470
      %521 = vst.msk [vmem:[#allocation2 + $0xbc] sm:$0x1] %vm475, %v471
      %v522 = vld [vmem:[%s395] sm:$0xf]
      %v523 = vld [vmem:[%s395 + $0x4] sm:$0xf]
      %v524 = vld [vmem:[%s395 + $0x8] sm:$0x1]
      %s525 = scalar_lea.vmem [#allocation2], 192
      %526 = vst.msk [vmem:[%s525] sm:$0xf] %vm472, %v522
      %527 = vst.msk [vmem:[%s525 + $0x4] sm:$0xf] %vm472, %v523
      %528 = vst.msk [vmem:[%s525 + $0x8] sm:$0x1] %vm475, %v524
      %v529 = vld [vmem:[%s409] sm:$0xf]
      %v530 = vld [vmem:[%s409 + $0x4] sm:$0xf]
      %v531 = vld [vmem:[%s409 + $0x8] sm:$0x1]
      %s532 = scalar_lea.vmem [#allocation2], 204
      %533 = vst.msk [vmem:[%s532] sm:$0xf] %vm472, %v529
      %534 = vst.msk [vmem:[%s532 + $0x4] sm:$0xf] %vm472, %v530
      %535 = vst.msk [vmem:[%s532 + $0x8] sm:$0x1] %vm475, %v531
      %v536 = vld [vmem:[#allocation2] sm:$0xf]
      %v537 = vld [vmem:[#allocation2 + $0x4] sm:$0xf]
      %v538 = vld [vmem:[#allocation2 + $0xc] sm:$0xf]
      %v539 = vld [vmem:[#allocation2 + $0x10] sm:$0xf]
      %v540 = vld [vmem:[#allocation2 + $0x18] sm:$0xf]
      %v541 = vld [vmem:[#allocation2 + $0x1c] sm:$0xf]
      %v542 = vld [vmem:[#allocation2 + $0x24] sm:$0xf]
      %v543 = vld [vmem:[#allocation2 + $0x28] sm:$0xf]
      %v544 = vld [vmem:[#allocation2 + $0x30] sm:$0xf]
      %v545 = vld [vmem:[#allocation2 + $0x34] sm:$0xf]
      %v546 = vld [vmem:[#allocation2 + $0x3c] sm:$0xf]
      %v547 = vld [vmem:[#allocation2 + $0x40] sm:$0xf]
      %v548 = vld [vmem:[#allocation2 + $0x48] sm:$0xf]
      %v549 = vld [vmem:[#allocation2 + $0x4c] sm:$0xf]
      %v550 = vld [vmem:[#allocation2 + $0x54] sm:$0xf]
      %v551 = vld [vmem:[#allocation2 + $0x58] sm:$0xf]
      %v552 = vld [vmem:[#allocation2 + $0x60] sm:$0xf]
      %v553 = vld [vmem:[#allocation2 + $0x64] sm:$0xf]
      %v554 = vld [vmem:[#allocation2 + $0x6c] sm:$0xf]
      %v555 = vld [vmem:[#allocation2 + $0x70] sm:$0xf]
      %v556 = vld [vmem:[#allocation2 + $0x78] sm:$0xf]
      %v557 = vld [vmem:[#allocation2 + $0x7c] sm:$0xf]
      %v558 = vld [vmem:[#allocation2 + $0x84] sm:$0xf]
      %v559 = vld [vmem:[#allocation2 + $0x88] sm:$0xf]
      %v560 = vld [vmem:[#allocation2 + $0x90] sm:$0xf]
      %v561 = vld [vmem:[#allocation2 + $0x94] sm:$0xf]
      %v562 = vld [vmem:[#allocation2 + $0x9c] sm:$0xf]
      %v563 = vld [vmem:[#allocation2 + $0xa0] sm:$0xf]
      %v564 = vld [vmem:[#allocation2 + $0xa8] sm:$0xf]
      %v565 = vld [vmem:[#allocation2 + $0xac] sm:$0xf]
      %v566 = vld [vmem:[#allocation2 + $0xb4] sm:$0xf]
      %v567 = vld [vmem:[#allocation2 + $0xb8] sm:$0xf]
      %v600 = vunpack.c.l.b16 %v536
      %v601 = vunpack.c.l.b16 %v537
      %v602 = vunpack.c.l.b16 %v538
      %v603 = vunpack.c.l.b16 %v539
      %v604 = vunpack.c.l.b16 %v540
      %v605 = vunpack.c.l.b16 %v541
      %v606 = vunpack.c.l.b16 %v542
      %v607 = vunpack.c.l.b16 %v543
      %v608 = vunpack.c.l.b16 %v544
      %v609 = vunpack.c.l.b16 %v545
      %v610 = vunpack.c.l.b16 %v546
      %v611 = vunpack.c.l.b16 %v547
      %v612 = vunpack.c.l.b16 %v548
      %v613 = vunpack.c.l.b16 %v549
      %v614 = vunpack.c.l.b16 %v550
      %v615 = vunpack.c.l.b16 %v551
      %v616 = vunpack.c.l.b16 %v552
      %v617 = vunpack.c.l.b16 %v553
      %v618 = vunpack.c.l.b16 %v554
      %v619 = vunpack.c.l.b16 %v555
      %v620 = vunpack.c.l.b16 %v556
      %v621 = vunpack.c.l.b16 %v557
      %v622 = vunpack.c.l.b16 %v558
      %v623 = vunpack.c.l.b16 %v559
      %v624 = vunpack.c.l.b16 %v560
      %v625 = vunpack.c.l.b16 %v561
      %v626 = vunpack.c.l.b16 %v562
      %v627 = vunpack.c.l.b16 %v563
      %v628 = vunpack.c.l.b16 %v564
      %v629 = vunpack.c.l.b16 %v565
      %v630 = vunpack.c.l.b16 %v566
      %v631 = vunpack.c.l.b16 %v567
      %v632 = vpack.c.b16 %v601, %v600
      %v633 = vpack.c.b16 %v603, %v602
      %v634 = vpack.c.b16 %v605, %v604
      %v635 = vpack.c.b16 %v607, %v606
      %v636 = vpack.c.b16 %v609, %v608
      %v637 = vpack.c.b16 %v611, %v610
      %v638 = vpack.c.b16 %v613, %v612
      %v639 = vpack.c.b16 %v615, %v614
      %v640 = vpack.c.b16 %v617, %v616
      %v641 = vpack.c.b16 %v619, %v618
      %v642 = vpack.c.b16 %v621, %v620
      %v643 = vpack.c.b16 %v623, %v622
      %v644 = vpack.c.b16 %v625, %v624
      %v645 = vpack.c.b16 %v627, %v626
      %v646 = vpack.c.b16 %v629, %v628
      %v647 = vpack.c.b16 %v631, %v630
      %vm664 = vcmask 261120
      %665 = vst.msk [vmem:[#allocation3] sm:$0xff] %vm664, %v632
      %666 = vst.msk [vmem:[#allocation3 + $0x18] sm:$0xff] %vm664, %v633
      %667 = vst.msk [vmem:[#allocation3 + $0x30] sm:$0xff] %vm664, %v634
      %668 = vst.msk [vmem:[#allocation3 + $0x48] sm:$0xff] %vm664, %v635
      %669 = vst.msk [vmem:[#allocation3 + $0x60] sm:$0xff] %vm664, %v636
      %670 = vst.msk [vmem:[#allocation3 + $0x78] sm:$0xff] %vm664, %v637
      %671 = vst.msk [vmem:[#allocation3 + $0x90] sm:$0xff] %vm664, %v638
      %672 = vst.msk [vmem:[#allocation3 + $0xa8] sm:$0xff] %vm664, %v639
      %673 = vst.msk [vmem:[#allocation3 + $0xc0] sm:$0xff] %vm664, %v640
      %674 = vst.msk [vmem:[#allocation3 + $0xd8] sm:$0xff] %vm664, %v641
      %675 = vst.msk [vmem:[#allocation3 + $0xf0] sm:$0xff] %vm664, %v642
      %676 = vst.msk [vmem:[#allocation3 + $0x108] sm:$0xff] %vm664, %v643
      %677 = vst.msk [vmem:[#allocation3 + $0x120] sm:$0xff] %vm664, %v644
      %678 = vst.msk [vmem:[#allocation3 + $0x138] sm:$0xff] %vm664, %v645
      %679 = vst.msk [vmem:[#allocation3 + $0x150] sm:$0xff] %vm664, %v646
      %680 = vst.msk [vmem:[#allocation3 + $0x168] sm:$0xff] %vm664, %v647
      %v681 = vld [vmem:[#allocation2] sm:$0xf]
      %v682 = vld [vmem:[#allocation2 + $0x4] sm:$0xf]
      %v683 = vld [vmem:[#allocation2 + $0x8] sm:$0x1]
      %v684 = vld [vmem:[#allocation2 + $0xc] sm:$0xf]
      %v685 = vld [vmem:[#allocation2 + $0x10] sm:$0xf]
      %v686 = vld [vmem:[#allocation2 + $0x14] sm:$0x1]
      %v687 = vld [vmem:[#allocation2 + $0x18] sm:$0xf]
      %v688 = vld [vmem:[#allocation2 + $0x1c] sm:$0xf]
      %v689 = vld [vmem:[#allocation2 + $0x20] sm:$0x1]
      %v690 = vld [vmem:[#allocation2 + $0x24] sm:$0xf]
      %v691 = vld [vmem:[#allocation2 + $0x28] sm:$0xf]
      %v692 = vld [vmem:[#allocation2 + $0x2c] sm:$0x1]
      %v693 = vld [vmem:[#allocation2 + $0x30] sm:$0xf]
      %v694 = vld [vmem:[#allocation2 + $0x34] sm:$0xf]
      %v695 = vld [vmem:[#allocation2 + $0x38] sm:$0x1]
      %v696 = vld [vmem:[#allocation2 + $0x3c] sm:$0xf]
      %v697 = vld [vmem:[#allocation2 + $0x40] sm:$0xf]
      %v698 = vld [vmem:[#allocation2 + $0x44] sm:$0x1]
      %v699 = vld [vmem:[#allocation2 + $0x48] sm:$0xf]
      %v700 = vld [vmem:[#allocation2 + $0x4c] sm:$0xf]
      %v701 = vld [vmem:[#allocation2 + $0x50] sm:$0x1]
      %v702 = vld [vmem:[#allocation2 + $0x54] sm:$0xf]
      %v703 = vld [vmem:[#allocation2 + $0x58] sm:$0xf]
      %v704 = vld [vmem:[#allocation2 + $0x5c] sm:$0x1]
      %v705 = vld [vmem:[#allocation2 + $0x60] sm:$0xf]
      %v706 = vld [vmem:[#allocation2 + $0x64] sm:$0xf]
      %v707 = vld [vmem:[#allocation2 + $0x68] sm:$0x1]
      %v708 = vld [vmem:[#allocation2 + $0x6c] sm:$0xf]
      %v709 = vld [vmem:[#allocation2 + $0x70] sm:$0xf]
      %v710 = vld [vmem:[#allocation2 + $0x74] sm:$0x1]
      %v711 = vld [vmem:[#allocation2 + $0x78] sm:$0xf]
      %v712 = vld [vmem:[#allocation2 + $0x7c] sm:$0xf]
      %v713 = vld [vmem:[#allocation2 + $0x80] sm:$0x1]
      %v714 = vld [vmem:[#allocation2 + $0x84] sm:$0xf]
      %v715 = vld [vmem:[#allocation2 + $0x88] sm:$0xf]
      %v716 = vld [vmem:[#allocation2 + $0x8c] sm:$0x1]
      %v717 = vld [vmem:[#allocation2 + $0x90] sm:$0xf]
      %v718 = vld [vmem:[#allocation2 + $0x94] sm:$0xf]
      %v719 = vld [vmem:[#allocation2 + $0x98] sm:$0x1]
      %v720 = vld [vmem:[#allocation2 + $0x9c] sm:$0xf]
      %v721 = vld [vmem:[#allocation2 + $0xa0] sm:$0xf]
      %v722 = vld [vmem:[#allocation2 + $0xa4] sm:$0x1]
      %v723 = vld [vmem:[#allocation2 + $0xa8] sm:$0xf]
      %v724 = vld [vmem:[#allocation2 + $0xac] sm:$0xf]
      %v725 = vld [vmem:[#allocation2 + $0xb0] sm:$0x1]
      %v726 = vld [vmem:[#allocation2 + $0xb4] sm:$0xf]
      %v727 = vld [vmem:[#allocation2 + $0xb8] sm:$0xf]
      %v728 = vld [vmem:[#allocation2 + $0xbc] sm:$0x1]
      %v777 = vunpack.c.l.b16 %v681
      %v778 = vunpack.c.l.b16 %v682
      %v779 = vunpack.c.l.b16 %v683
      %v780 = vunpack.c.l.b16 %v684
      %v781 = vunpack.c.l.b16 %v685
      %v782 = vunpack.c.l.b16 %v686
      %v783 = vunpack.c.l.b16 %v687
      %v784 = vunpack.c.l.b16 %v688
      %v785 = vunpack.c.l.b16 %v689
      %v786 = vunpack.c.l.b16 %v690
      %v787 = vunpack.c.l.b16 %v691
      %v788 = vunpack.c.l.b16 %v692
      %v789 = vunpack.c.l.b16 %v693
      %v790 = vunpack.c.l.b16 %v694
      %v791 = vunpack.c.l.b16 %v695
      %v792 = vunpack.c.l.b16 %v696
      %v793 = vunpack.c.l.b16 %v697
      %v794 = vunpack.c.l.b16 %v698
      %v795 = vunpack.c.l.b16 %v699
      %v796 = vunpack.c.l.b16 %v700
      %v797 = vunpack.c.l.b16 %v701
      %v798 = vunpack.c.l.b16 %v702
      %v799 = vunpack.c.l.b16 %v703
      %v800 = vunpack.c.l.b16 %v704
      %v801 = vunpack.c.l.b16 %v705
      %v802 = vunpack.c.l.b16 %v706
      %v803 = vunpack.c.l.b16 %v707
      %v804 = vunpack.c.l.b16 %v708
      %v805 = vunpack.c.l.b16 %v709
      %v806 = vunpack.c.l.b16 %v710
      %v807 = vunpack.c.l.b16 %v711
      %v808 = vunpack.c.l.b16 %v712
      %v809 = vunpack.c.l.b16 %v713
      %v810 = vunpack.c.l.b16 %v714
      %v811 = vunpack.c.l.b16 %v715
      %v812 = vunpack.c.l.b16 %v716
      %v813 = vunpack.c.l.b16 %v717
      %v814 = vunpack.c.l.b16 %v718
      %v815 = vunpack.c.l.b16 %v719
      %v816 = vunpack.c.l.b16 %v720
      %v817 = vunpack.c.l.b16 %v721
      %v818 = vunpack.c.l.b16 %v722
      %v819 = vunpack.c.l.b16 %v723
      %v820 = vunpack.c.l.b16 %v724
      %v821 = vunpack.c.l.b16 %v725
      %v822 = vunpack.c.l.b16 %v726
      %v823 = vunpack.c.l.b16 %v727
      %v824 = vunpack.c.l.b16 %v728
      %v825 = vpack.c.b16 %v778, %v777
      %v826 = vpack.c.b16 %v779, %v779
      %v827 = vpack.c.b16 %v781, %v780
      %v828 = vpack.c.b16 %v782, %v782
      %v829 = vpack.c.b16 %v784, %v783
      %v830 = vpack.c.b16 %v785, %v785
      %v831 = vpack.c.b16 %v787, %v786
      %v832 = vpack.c.b16 %v788, %v788
      %v833 = vpack.c.b16 %v790, %v789
      %v834 = vpack.c.b16 %v791, %v791
      %v835 = vpack.c.b16 %v793, %v792
      %v836 = vpack.c.b16 %v794, %v794
      %v837 = vpack.c.b16 %v796, %v795
      %v838 = vpack.c.b16 %v797, %v797
      %v839 = vpack.c.b16 %v799, %v798
      %v840 = vpack.c.b16 %v800, %v800
      %v841 = vpack.c.b16 %v802, %v801
      %v842 = vpack.c.b16 %v803, %v803
      %v843 = vpack.c.b16 %v805, %v804
      %v844 = vpack.c.b16 %v806, %v806
      %v845 = vpack.c.b16 %v808, %v807
      %v846 = vpack.c.b16 %v809, %v809
      %v847 = vpack.c.b16 %v811, %v810
      %v848 = vpack.c.b16 %v812, %v812
      %v849 = vpack.c.b16 %v814, %v813
      %v850 = vpack.c.b16 %v815, %v815
      %v851 = vpack.c.b16 %v817, %v816
      %v852 = vpack.c.b16 %v818, %v818
      %v853 = vpack.c.b16 %v820, %v819
      %v854 = vpack.c.b16 %v821, %v821
      %v855 = vpack.c.b16 %v823, %v822
      %v856 = vpack.c.b16 %v824, %v824
      %vm857 = vsmask.f32 7424
      %v859 = vshrl.u32 %v825, 16
      %v861 = vshll.u32 %v825, 16
      %v863 = vrot.slane %v861, 1
      %v864 = vor.u32 %v859, %v863
      %v866 = vshll.u32 %v826, 16
      %v868 = vrot.slane %v866, 1
      %v869 = vsel %vm857, %v864, %v868
      %v871 = vshrl.u32 %v827, 16
      %v873 = vshll.u32 %v827, 16
      %v875 = vrot.slane %v873, 1
      %v876 = vor.u32 %v871, %v875
      %v878 = vshll.u32 %v828, 16
      %v880 = vrot.slane %v878, 1
      %v881 = vsel %vm857, %v876, %v880
      %v883 = vshrl.u32 %v829, 16
      %v885 = vshll.u32 %v829, 16
      %v887 = vrot.slane %v885, 1
      %v888 = vor.u32 %v883, %v887
      %v890 = vshll.u32 %v830, 16
      %v892 = vrot.slane %v890, 1
      %v893 = vsel %vm857, %v888, %v892
      %v895 = vshrl.u32 %v831, 16
      %v897 = vshll.u32 %v831, 16
      %v899 = vrot.slane %v897, 1
      %v900 = vor.u32 %v895, %v899
      %v902 = vshll.u32 %v832, 16
      %v904 = vrot.slane %v902, 1
      %v905 = vsel %vm857, %v900, %v904
      %v907 = vshrl.u32 %v833, 16
      %v909 = vshll.u32 %v833, 16
      %v911 = vrot.slane %v909, 1
      %v912 = vor.u32 %v907, %v911
      %v914 = vshll.u32 %v834, 16
      %v916 = vrot.slane %v914, 1
      %v917 = vsel %vm857, %v912, %v916
      %v919 = vshrl.u32 %v835, 16
      %v921 = vshll.u32 %v835, 16
      %v923 = vrot.slane %v921, 1
      %v924 = vor.u32 %v919, %v923
      %v926 = vshll.u32 %v836, 16
      %v928 = vrot.slane %v926, 1
      %v929 = vsel %vm857, %v924, %v928
      %v931 = vshrl.u32 %v837, 16
      %v933 = vshll.u32 %v837, 16
      %v935 = vrot.slane %v933, 1
      %v936 = vor.u32 %v931, %v935
      %v938 = vshll.u32 %v838, 16
      %v940 = vrot.slane %v938, 1
      %v941 = vsel %vm857, %v936, %v940
      %v943 = vshrl.u32 %v839, 16
      %v945 = vshll.u32 %v839, 16
      %v947 = vrot.slane %v945, 1
      %v948 = vor.u32 %v943, %v947
      %v950 = vshll.u32 %v840, 16
      %v952 = vrot.slane %v950, 1
      %v953 = vsel %vm857, %v948, %v952
      %v955 = vshrl.u32 %v841, 16
      %v957 = vshll.u32 %v841, 16
      %v959 = vrot.slane %v957, 1
      %v960 = vor.u32 %v955, %v959
      %v962 = vshll.u32 %v842, 16
      %v964 = vrot.slane %v962, 1
      %v965 = vsel %vm857, %v960, %v964
      %v967 = vshrl.u32 %v843, 16
      %v969 = vshll.u32 %v843, 16
      %v971 = vrot.slane %v969, 1
      %v972 = vor.u32 %v967, %v971
      %v974 = vshll.u32 %v844, 16
      %v976 = vrot.slane %v974, 1
      %v977 = vsel %vm857, %v972, %v976
      %v979 = vshrl.u32 %v845, 16
      %v981 = vshll.u32 %v845, 16
      %v983 = vrot.slane %v981, 1
      %v984 = vor.u32 %v979, %v983
      %v986 = vshll.u32 %v846, 16
      %v988 = vrot.slane %v986, 1
      %v989 = vsel %vm857, %v984, %v988
      %v991 = vshrl.u32 %v847, 16
      %v993 = vshll.u32 %v847, 16
      %v995 = vrot.slane %v993, 1
      %v996 = vor.u32 %v991, %v995
      %v998 = vshll.u32 %v848, 16
      %v1000 = vrot.slane %v998, 1
      %v1001 = vsel %vm857, %v996, %v1000
      %v1003 = vshrl.u32 %v849, 16
      %v1005 = vshll.u32 %v849, 16
      %v1007 = vrot.slane %v1005, 1
      %v1008 = vor.u32 %v1003, %v1007
      %v1010 = vshll.u32 %v850, 16
      %v1012 = vrot.slane %v1010, 1
      %v1013 = vsel %vm857, %v1008, %v1012
      %v1015 = vshrl.u32 %v851, 16
      %v1017 = vshll.u32 %v851, 16
      %v1019 = vrot.slane %v1017, 1
      %v1020 = vor.u32 %v1015, %v1019
      %v1022 = vshll.u32 %v852, 16
      %v1024 = vrot.slane %v1022, 1
      %v1025 = vsel %vm857, %v1020, %v1024
      %v1027 = vshrl.u32 %v853, 16
      %v1029 = vshll.u32 %v853, 16
      %v1031 = vrot.slane %v1029, 1
      %v1032 = vor.u32 %v1027, %v1031
      %v1034 = vshll.u32 %v854, 16
      %v1036 = vrot.slane %v1034, 1
      %v1037 = vsel %vm857, %v1032, %v1036
      %v1039 = vshrl.u32 %v855, 16
      %v1041 = vshll.u32 %v855, 16
      %v1043 = vrot.slane %v1041, 1
      %v1044 = vor.u32 %v1039, %v1043
      %v1046 = vshll.u32 %v856, 16
      %v1048 = vrot.slane %v1046, 1
      %v1049 = vsel %vm857, %v1044, %v1048
      %1050 = vrot.lane.b32.xlu0 %v869, 32
      %v1051 = vpop.permute.xlu0 %1050
      %1052 = vrot.lane.b32.xlu0 %v881, 32
      %v1053 = vpop.permute.xlu0 %1052
      %1054 = vrot.lane.b32.xlu0 %v893, 32
      %v1055 = vpop.permute.xlu0 %1054
      %1056 = vrot.lane.b32.xlu0 %v905, 32
      %v1057 = vpop.permute.xlu0 %1056
      %1058 = vrot.lane.b32.xlu0 %v917, 32
      %v1059 = vpop.permute.xlu0 %1058
      %1060 = vrot.lane.b32.xlu0 %v929, 32
      %v1061 = vpop.permute.xlu0 %1060
      %1062 = vrot.lane.b32.xlu0 %v941, 32
      %v1063 = vpop.permute.xlu0 %1062
      %1064 = vrot.lane.b32.xlu0 %v953, 32
      %v1065 = vpop.permute.xlu0 %1064
      %1066 = vrot.lane.b32.xlu0 %v965, 32
      %v1067 = vpop.permute.xlu0 %1066
      %1068 = vrot.lane.b32.xlu0 %v977, 32
      %v1069 = vpop.permute.xlu0 %1068
      %1070 = vrot.lane.b32.xlu0 %v989, 32
      %v1071 = vpop.permute.xlu0 %1070
      %1072 = vrot.lane.b32.xlu0 %v1001, 32
      %v1073 = vpop.permute.xlu0 %1072
      %1074 = vrot.lane.b32.xlu0 %v1013, 32
      %v1075 = vpop.permute.xlu0 %1074
      %1076 = vrot.lane.b32.xlu0 %v1025, 32
      %v1077 = vpop.permute.xlu0 %1076
      %1078 = vrot.lane.b32.xlu0 %v1037, 32
      %v1079 = vpop.permute.xlu0 %1078
      %1080 = vrot.lane.b32.xlu0 %v1049, 32
      %v1081 = vpop.permute.xlu0 %1080
      %vm1098 = vcmask 523520
      %1099 = vst.msk [vmem:[#allocation3] sm:$0xff] %vm1098, %v1051
      %1100 = vst.msk [vmem:[#allocation3 + $0x18] sm:$0xff] %vm1098, %v1053
      %1101 = vst.msk [vmem:[#allocation3 + $0x30] sm:$0xff] %vm1098, %v1055
      %1102 = vst.msk [vmem:[#allocation3 + $0x48] sm:$0xff] %vm1098, %v1057
      %1103 = vst.msk [vmem:[#allocation3 + $0x60] sm:$0xff] %vm1098, %v1059
      %1104 = vst.msk [vmem:[#allocation3 + $0x78] sm:$0xff] %vm1098, %v1061
      %1105 = vst.msk [vmem:[#allocation3 + $0x90] sm:$0xff] %vm1098, %v1063
      %1106 = vst.msk [vmem:[#allocation3 + $0xa8] sm:$0xff] %vm1098, %v1065
      %1107 = vst.msk [vmem:[#allocation3 + $0xc0] sm:$0xff] %vm1098, %v1067
      %1108 = vst.msk [vmem:[#allocation3 + $0xd8] sm:$0xff] %vm1098, %v1069
      %1109 = vst.msk [vmem:[#allocation3 + $0xf0] sm:$0xff] %vm1098, %v1071
      %1110 = vst.msk [vmem:[#allocation3 + $0x108] sm:$0xff] %vm1098, %v1073
      %1111 = vst.msk [vmem:[#allocation3 + $0x120] sm:$0xff] %vm1098, %v1075
      %1112 = vst.msk [vmem:[#allocation3 + $0x138] sm:$0xff] %vm1098, %v1077
      %1113 = vst.msk [vmem:[#allocation3 + $0x150] sm:$0xff] %vm1098, %v1079
      %1114 = vst.msk [vmem:[#allocation3 + $0x168] sm:$0xff] %vm1098, %v1081
      %v1115 = vld [vmem:[#allocation2] sm:$0xe]
      %v1116 = vld [vmem:[#allocation2 + $0x4] sm:$0xf]
      %v1117 = vld [vmem:[#allocation2 + $0x8] sm:$0x1]
      %v1118 = vld [vmem:[#allocation2 + $0xc] sm:$0xe]
      %v1119 = vld [vmem:[#allocation2 + $0x10] sm:$0xf]
      %v1120 = vld [vmem:[#allocation2 + $0x14] sm:$0x1]
      %v1121 = vld [vmem:[#allocation2 + $0x18] sm:$0xe]
      %v1122 = vld [vmem:[#allocation2 + $0x1c] sm:$0xf]
      %v1123 = vld [vmem:[#allocation2 + $0x20] sm:$0x1]
      %v1124 = vld [vmem:[#allocation2 + $0x24] sm:$0xe]
      %v1125 = vld [vmem:[#allocation2 + $0x28] sm:$0xf]
      %v1126 = vld [vmem:[#allocation2 + $0x2c] sm:$0x1]
      %v1127 = vld [vmem:[#allocation2 + $0x30] sm:$0xe]
      %v1128 = vld [vmem:[#allocation2 + $0x34] sm:$0xf]
      %v1129 = vld [vmem:[#allocation2 + $0x38] sm:$0x1]
      %v1130 = vld [vmem:[#allocation2 + $0x3c] sm:$0xe]
      %v1131 = vld [vmem:[#allocation2 + $0x40] sm:$0xf]
      %v1132 = vld [vmem:[#allocation2 + $0x44] sm:$0x1]
      %v1133 = vld [vmem:[#allocation2 + $0x48] sm:$0xe]
      %v1134 = vld [vmem:[#allocation2 + $0x4c] sm:$0xf]
      %v1135 = vld [vmem:[#allocation2 + $0x50] sm:$0x1]
      %v1136 = vld [vmem:[#allocation2 + $0x54] sm:$0xe]
      %v1137 = vld [vmem:[#allocation2 + $0x58] sm:$0xf]
      %v1138 = vld [vmem:[#allocation2 + $0x5c] sm:$0x1]
      %v1139 = vld [vmem:[#allocation2 + $0x60] sm:$0xe]
      %v1140 = vld [vmem:[#allocation2 + $0x64] sm:$0xf]
      %v1141 = vld [vmem:[#allocation2 + $0x68] sm:$0x1]
      %v1142 = vld [vmem:[#allocation2 + $0x6c] sm:$0xe]
      %v1143 = vld [vmem:[#allocation2 + $0x70] sm:$0xf]
      %v1144 = vld [vmem:[#allocation2 + $0x74] sm:$0x1]
      %v1145 = vld [vmem:[#allocation2 + $0x78] sm:$0xe]
      %v1146 = vld [vmem:[#allocation2 + $0x7c] sm:$0xf]
      %v1147 = vld [vmem:[#allocation2 + $0x80] sm:$0x1]
      %v1148 = vld [vmem:[#allocation2 + $0x84] sm:$0xe]
      %v1149 = vld [vmem:[#allocation2 + $0x88] sm:$0xf]
      %v1150 = vld [vmem:[#allocation2 + $0x8c] sm:$0x1]
      %v1151 = vld [vmem:[#allocation2 + $0x90] sm:$0xe]
      %v1152 = vld [vmem:[#allocation2 + $0x94] sm:$0xf]
      %v1153 = vld [vmem:[#allocation2 + $0x98] sm:$0x1]
      %v1154 = vld [vmem:[#allocation2 + $0x9c] sm:$0xe]
      %v1155 = vld [vmem:[#allocation2 + $0xa0] sm:$0xf]
      %v1156 = vld [vmem:[#allocation2 + $0xa4] sm:$0x1]
      %v1157 = vld [vmem:[#allocation2 + $0xa8] sm:$0xe]
      %v1158 = vld [vmem:[#allocation2 + $0xac] sm:$0xf]
      %v1159 = vld [vmem:[#allocation2 + $0xb0] sm:$0x1]
      %v1160 = vld [vmem:[#allocation2 + $0xb4] sm:$0xe]
      %v1161 = vld [vmem:[#allocation2 + $0xb8] sm:$0xf]
      %v1162 = vld [vmem:[#allocation2 + $0xbc] sm:$0x1]
      %v1211 = vunpack.c.l.b16 %v1115
      %v1212 = vunpack.c.l.b16 %v1116
      %v1213 = vunpack.c.l.b16 %v1117
      %v1214 = vunpack.c.l.b16 %v1118
      %v1215 = vunpack.c.l.b16 %v1119
      %v1216 = vunpack.c.l.b16 %v1120
      %v1217 = vunpack.c.l.b16 %v1121
      %v1218 = vunpack.c.l.b16 %v1122
      %v1219 = vunpack.c.l.b16 %v1123
      %v1220 = vunpack.c.l.b16 %v1124
      %v1221 = vunpack.c.l.b16 %v1125
      %v1222 = vunpack.c.l.b16 %v1126
      %v1223 = vunpack.c.l.b16 %v1127
      %v1224 = vunpack.c.l.b16 %v1128
      %v1225 = vunpack.c.l.b16 %v1129
      %v1226 = vunpack.c.l.b16 %v1130
      %v1227 = vunpack.c.l.b16 %v1131
      %v1228 = vunpack.c.l.b16 %v1132
      %v1229 = vunpack.c.l.b16 %v1133
      %v1230 = vunpack.c.l.b16 %v1134
      %v1231 = vunpack.c.l.b16 %v1135
      %v1232 = vunpack.c.l.b16 %v1136
      %v1233 = vunpack.c.l.b16 %v1137
      %v1234 = vunpack.c.l.b16 %v1138
      %v1235 = vunpack.c.l.b16 %v1139
      %v1236 = vunpack.c.l.b16 %v1140
      %v1237 = vunpack.c.l.b16 %v1141
      %v1238 = vunpack.c.l.b16 %v1142
      %v1239 = vunpack.c.l.b16 %v1143
      %v1240 = vunpack.c.l.b16 %v1144
      %v1241 = vunpack.c.l.b16 %v1145
      %v1242 = vunpack.c.l.b16 %v1146
      %v1243 = vunpack.c.l.b16 %v1147
      %v1244 = vunpack.c.l.b16 %v1148
      %v1245 = vunpack.c.l.b16 %v1149
      %v1246 = vunpack.c.l.b16 %v1150
      %v1247 = vunpack.c.l.b16 %v1151
      %v1248 = vunpack.c.l.b16 %v1152
      %v1249 = vunpack.c.l.b16 %v1153
      %v1250 = vunpack.c.l.b16 %v1154
      %v1251 = vunpack.c.l.b16 %v1155
      %v1252 = vunpack.c.l.b16 %v1156
      %v1253 = vunpack.c.l.b16 %v1157
      %v1254 = vunpack.c.l.b16 %v1158
      %v1255 = vunpack.c.l.b16 %v1159
      %v1256 = vunpack.c.l.b16 %v1160
      %v1257 = vunpack.c.l.b16 %v1161
      %v1258 = vunpack.c.l.b16 %v1162
      %v1259 = vpack.c.b16 %v1212, %v1211
      %v1260 = vpack.c.b16 %v1213, %v1213
      %v1261 = vpack.c.b16 %v1215, %v1214
      %v1262 = vpack.c.b16 %v1216, %v1216
      %v1263 = vpack.c.b16 %v1218, %v1217
      %v1264 = vpack.c.b16 %v1219, %v1219
      %v1265 = vpack.c.b16 %v1221, %v1220
      %v1266 = vpack.c.b16 %v1222, %v1222
      %v1267 = vpack.c.b16 %v1224, %v1223
      %v1268 = vpack.c.b16 %v1225, %v1225
      %v1269 = vpack.c.b16 %v1227, %v1226
      %v1270 = vpack.c.b16 %v1228, %v1228
      %v1271 = vpack.c.b16 %v1230, %v1229
      %v1272 = vpack.c.b16 %v1231, %v1231
      %v1273 = vpack.c.b16 %v1233, %v1232
      %v1274 = vpack.c.b16 %v1234, %v1234
      %v1275 = vpack.c.b16 %v1236, %v1235
      %v1276 = vpack.c.b16 %v1237, %v1237
      %v1277 = vpack.c.b16 %v1239, %v1238
      %v1278 = vpack.c.b16 %v1240, %v1240
      %v1279 = vpack.c.b16 %v1242, %v1241
      %v1280 = vpack.c.b16 %v1243, %v1243
      %v1281 = vpack.c.b16 %v1245, %v1244
      %v1282 = vpack.c.b16 %v1246, %v1246
      %v1283 = vpack.c.b16 %v1248, %v1247
      %v1284 = vpack.c.b16 %v1249, %v1249
      %v1285 = vpack.c.b16 %v1251, %v1250
      %v1286 = vpack.c.b16 %v1252, %v1252
      %v1287 = vpack.c.b16 %v1254, %v1253
      %v1288 = vpack.c.b16 %v1255, %v1255
      %v1289 = vpack.c.b16 %v1257, %v1256
      %v1290 = vpack.c.b16 %v1258, %v1258
      %vm1291 = vcmask 1046528
      %v1292 = vrot.slane %v1259, 1
      %v1293 = vrot.slane %v1260, 1
      %v1294 = vsel %vm1291, %v1292, %v1293
      %v1295 = vrot.slane %v1261, 1
      %v1296 = vrot.slane %v1262, 1
      %v1297 = vsel %vm1291, %v1295, %v1296
      %v1298 = vrot.slane %v1263, 1
      %v1299 = vrot.slane %v1264, 1
      %v1300 = vsel %vm1291, %v1298, %v1299
      %v1301 = vrot.slane %v1265, 1
      %v1302 = vrot.slane %v1266, 1
      %v1303 = vsel %vm1291, %v1301, %v1302
      %v1304 = vrot.slane %v1267, 1
      %v1305 = vrot.slane %v1268, 1
      %v1306 = vsel %vm1291, %v1304, %v1305
      %v1307 = vrot.slane %v1269, 1
      %v1308 = vrot.slane %v1270, 1
      %v1309 = vsel %vm1291, %v1307, %v1308
      %v1310 = vrot.slane %v1271, 1
      %v1311 = vrot.slane %v1272, 1
      %v1312 = vsel %vm1291, %v1310, %v1311
      %v1313 = vrot.slane %v1273, 1
      %v1314 = vrot.slane %v1274, 1
      %v1315 = vsel %vm1291, %v1313, %v1314
      %v1316 = vrot.slane %v1275, 1
      %v1317 = vrot.slane %v1276, 1
      %v1318 = vsel %vm1291, %v1316, %v1317
      %v1319 = vrot.slane %v1277, 1
      %v1320 = vrot.slane %v1278, 1
      %v1321 = vsel %vm1291, %v1319, %v1320
      %v1322 = vrot.slane %v1279, 1
      %v1323 = vrot.slane %v1280, 1
      %v1324 = vsel %vm1291, %v1322, %v1323
      %v1325 = vrot.slane %v1281, 1
      %v1326 = vrot.slane %v1282, 1
      %v1327 = vsel %vm1291, %v1325, %v1326
      %v1328 = vrot.slane %v1283, 1
      %v1329 = vrot.slane %v1284, 1
      %v1330 = vsel %vm1291, %v1328, %v1329
      %v1331 = vrot.slane %v1285, 1
      %v1332 = vrot.slane %v1286, 1
      %v1333 = vsel %vm1291, %v1331, %v1332
      %v1334 = vrot.slane %v1287, 1
      %v1335 = vrot.slane %v1288, 1
      %v1336 = vsel %vm1291, %v1334, %v1335
      %v1337 = vrot.slane %v1289, 1
      %v1338 = vrot.slane %v1290, 1
      %v1339 = vsel %vm1291, %v1337, %v1338
      %1340 = vrot.lane.b32.xlu0 %v1294, 64
      %v1341 = vpop.permute.xlu0 %1340
      %1342 = vrot.lane.b32.xlu0 %v1297, 64
      %v1343 = vpop.permute.xlu0 %1342
      %1344 = vrot.lane.b32.xlu0 %v1300, 64
      %v1345 = vpop.permute.xlu0 %1344
      %1346 = vrot.lane.b32.xlu0 %v1303, 64
      %v1347 = vpop.permute.xlu0 %1346
      %1348 = vrot.lane.b32.xlu0 %v1306, 64
      %v1349 = vpop.permute.xlu0 %1348
      %1350 = vrot.lane.b32.xlu0 %v1309, 64
      %v1351 = vpop.permute.xlu0 %1350
      %1352 = vrot.lane.b32.xlu0 %v1312, 64
      %v1353 = vpop.permute.xlu0 %1352
      %1354 = vrot.lane.b32.xlu0 %v1315, 64
      %v1355 = vpop.permute.xlu0 %1354
      %1356 = vrot.lane.b32.xlu0 %v1318, 64
      %v1357 = vpop.permute.xlu0 %1356
      %1358 = vrot.lane.b32.xlu0 %v1321, 64
      %v1359 = vpop.permute.xlu0 %1358
      %1360 = vrot.lane.b32.xlu0 %v1324, 64
      %v1361 = vpop.permute.xlu0 %1360
      %1362 = vrot.lane.b32.xlu0 %v1327, 64
      %v1363 = vpop.permute.xlu0 %1362
      %1364 = vrot.lane.b32.xlu0 %v1330, 64
      %v1365 = vpop.permute.xlu0 %1364
      %1366 = vrot.lane.b32.xlu0 %v1333, 64
      %v1367 = vpop.permute.xlu0 %1366
      %1368 = vrot.lane.b32.xlu0 %v1336, 64
      %v1369 = vpop.permute.xlu0 %1368
      %1370 = vrot.lane.b32.xlu0 %v1339, 64
      %v1371 = vpop.permute.xlu0 %1370
      %vm1388 = vcmask 785920
      %1389 = vst.msk [vmem:[#allocation3] sm:$0xff] %vm1388, %v1341
      %1390 = vst.msk [vmem:[#allocation3 + $0x18] sm:$0xff] %vm1388, %v1343
      %1391 = vst.msk [vmem:[#allocation3 + $0x30] sm:$0xff] %vm1388, %v1345
      %1392 = vst.msk [vmem:[#allocation3 + $0x48] sm:$0xff] %vm1388, %v1347
      %1393 = vst.msk [vmem:[#allocation3 + $0x60] sm:$0xff] %vm1388, %v1349
      %1394 = vst.msk [vmem:[#allocation3 + $0x78] sm:$0xff] %vm1388, %v1351
      %1395 = vst.msk [vmem:[#allocation3 + $0x90] sm:$0xff] %vm1388, %v1353
      %1396 = vst.msk [vmem:[#allocation3 + $0xa8] sm:$0xff] %vm1388, %v1355
      %1397 = vst.msk [vmem:[#allocation3 + $0xc0] sm:$0xff] %vm1388, %v1357
      %1398 = vst.msk [vmem:[#allocation3 + $0xd8] sm:$0xff] %vm1388, %v1359
      %1399 = vst.msk [vmem:[#allocation3 + $0xf0] sm:$0xff] %vm1388, %v1361
      %1400 = vst.msk [vmem:[#allocation3 + $0x108] sm:$0xff] %vm1388, %v1363
      %1401 = vst.msk [vmem:[#allocation3 + $0x120] sm:$0xff] %vm1388, %v1365
      %1402 = vst.msk [vmem:[#allocation3 + $0x138] sm:$0xff] %vm1388, %v1367
      %1403 = vst.msk [vmem:[#allocation3 + $0x150] sm:$0xff] %vm1388, %v1369
      %1404 = vst.msk [vmem:[#allocation3 + $0x168] sm:$0xff] %vm1388, %v1371
      %s1405 = scalar_lea.vmem [#allocation2], 12
      %v1406 = vld [vmem:[%s1405] sm:$0xf]
      %v1407 = vld [vmem:[%s1405 + $0x4] sm:$0xf]
      %v1408 = vld [vmem:[%s1405 + $0xc] sm:$0xf]
      %v1409 = vld [vmem:[%s1405 + $0x10] sm:$0xf]
      %v1410 = vld [vmem:[%s1405 + $0x18] sm:$0xf]
      %v1411 = vld [vmem:[%s1405 + $0x1c] sm:$0xf]
      %v1412 = vld [vmem:[%s1405 + $0x24] sm:$0xf]
      %v1413 = vld [vmem:[%s1405 + $0x28] sm:$0xf]
      %v1414 = vld [vmem:[%s1405 + $0x30] sm:$0xf]
      %v1415 = vld [vmem:[%s1405 + $0x34] sm:$0xf]
      %v1416 = vld [vmem:[%s1405 + $0x3c] sm:$0xf]
      %v1417 = vld [vmem:[%s1405 + $0x40] sm:$0xf]
      %v1418 = vld [vmem:[%s1405 + $0x48] sm:$0xf]
      %v1419 = vld [vmem:[%s1405 + $0x4c] sm:$0xf]
      %v1420 = vld [vmem:[%s1405 + $0x54] sm:$0xf]
      %v1421 = vld [vmem:[%s1405 + $0x58] sm:$0xf]
      %v1422 = vld [vmem:[%s1405 + $0x60] sm:$0xf]
      %v1423 = vld [vmem:[%s1405 + $0x64] sm:$0xf]
      %v1424 = vld [vmem:[%s1405 + $0x6c] sm:$0xf]
      %v1425 = vld [vmem:[%s1405 + $0x70] sm:$0xf]
      %v1426 = vld [vmem:[%s1405 + $0x78] sm:$0xf]
      %v1427 = vld [vmem:[%s1405 + $0x7c] sm:$0xf]
      %v1428 = vld [vmem:[%s1405 + $0x84] sm:$0xf]
      %v1429 = vld [vmem:[%s1405 + $0x88] sm:$0xf]
      %v1430 = vld [vmem:[%s1405 + $0x90] sm:$0xf]
      %v1431 = vld [vmem:[%s1405 + $0x94] sm:$0xf]
      %v1432 = vld [vmem:[%s1405 + $0x9c] sm:$0xf]
      %v1433 = vld [vmem:[%s1405 + $0xa0] sm:$0xf]
      %v1434 = vld [vmem:[%s1405 + $0xa8] sm:$0xf]
      %v1435 = vld [vmem:[%s1405 + $0xac] sm:$0xf]
      %v1436 = vld [vmem:[%s1405 + $0xb4] sm:$0xf]
      %v1437 = vld [vmem:[%s1405 + $0xb8] sm:$0xf]
      %v1470 = vunpack.c.l.b16 %v1406
      %v1471 = vunpack.c.l.b16 %v1407
      %v1472 = vunpack.c.l.b16 %v1408
      %v1473 = vunpack.c.l.b16 %v1409
      %v1474 = vunpack.c.l.b16 %v1410
      %v1475 = vunpack.c.l.b16 %v1411
      %v1476 = vunpack.c.l.b16 %v1412
      %v1477 = vunpack.c.l.b16 %v1413
      %v1478 = vunpack.c.l.b16 %v1414
      %v1479 = vunpack.c.l.b16 %v1415
      %v1480 = vunpack.c.l.b16 %v1416
      %v1481 = vunpack.c.l.b16 %v1417
      %v1482 = vunpack.c.l.b16 %v1418
      %v1483 = vunpack.c.l.b16 %v1419
      %v1484 = vunpack.c.l.b16 %v1420
      %v1485 = vunpack.c.l.b16 %v1421
      %v1486 = vunpack.c.l.b16 %v1422
      %v1487 = vunpack.c.l.b16 %v1423
      %v1488 = vunpack.c.l.b16 %v1424
      %v1489 = vunpack.c.l.b16 %v1425
      %v1490 = vunpack.c.l.b16 %v1426
      %v1491 = vunpack.c.l.b16 %v1427
      %v1492 = vunpack.c.l.b16 %v1428
      %v1493 = vunpack.c.l.b16 %v1429
      %v1494 = vunpack.c.l.b16 %v1430
      %v1495 = vunpack.c.l.b16 %v1431
      %v1496 = vunpack.c.l.b16 %v1432
      %v1497 = vunpack.c.l.b16 %v1433
      %v1498 = vunpack.c.l.b16 %v1434
      %v1499 = vunpack.c.l.b16 %v1435
      %v1500 = vunpack.c.l.b16 %v1436
      %v1501 = vunpack.c.l.b16 %v1437
      %v1502 = vpack.c.b16 %v1471, %v1470
      %v1503 = vpack.c.b16 %v1473, %v1472
      %v1504 = vpack.c.b16 %v1475, %v1474
      %v1505 = vpack.c.b16 %v1477, %v1476
      %v1506 = vpack.c.b16 %v1479, %v1478
      %v1507 = vpack.c.b16 %v1481, %v1480
      %v1508 = vpack.c.b16 %v1483, %v1482
      %v1509 = vpack.c.b16 %v1485, %v1484
      %v1510 = vpack.c.b16 %v1487, %v1486
      %v1511 = vpack.c.b16 %v1489, %v1488
      %v1512 = vpack.c.b16 %v1491, %v1490
      %v1513 = vpack.c.b16 %v1493, %v1492
      %v1514 = vpack.c.b16 %v1495, %v1494
      %v1515 = vpack.c.b16 %v1497, %v1496
      %v1516 = vpack.c.b16 %v1499, %v1498
      %v1517 = vpack.c.b16 %v1501, %v1500
      %1518 = vrot.lane.b32.xlu0 %v1502, 96
      %v1519 = vpop.permute.xlu0 %1518
      %1520 = vrot.lane.b32.xlu0 %v1503, 96
      %v1521 = vpop.permute.xlu0 %1520
      %1522 = vrot.lane.b32.xlu0 %v1504, 96
      %v1523 = vpop.permute.xlu0 %1522
      %1524 = vrot.lane.b32.xlu0 %v1505, 96
      %v1525 = vpop.permute.xlu0 %1524
      %1526 = vrot.lane.b32.xlu0 %v1506, 96
      %v1527 = vpop.permute.xlu0 %1526
      %1528 = vrot.lane.b32.xlu0 %v1507, 96
      %v1529 = vpop.permute.xlu0 %1528
      %1530 = vrot.lane.b32.xlu0 %v1508, 96
      %v1531 = vpop.permute.xlu0 %1530
      %1532 = vrot.lane.b32.xlu0 %v1509, 96
      %v1533 = vpop.permute.xlu0 %1532
      %1534 = vrot.lane.b32.xlu0 %v1510, 96
      %v1535 = vpop.permute.xlu0 %1534
      %1536 = vrot.lane.b32.xlu0 %v1511, 96
      %v1537 = vpop.permute.xlu0 %1536
      %1538 = vrot.lane.b32.xlu0 %v1512, 96
      %v1539 = vpop.permute.xlu0 %1538
      %1540 = vrot.lane.b32.xlu0 %v1513, 96
      %v1541 = vpop.permute.xlu0 %1540
      %1542 = vrot.lane.b32.xlu0 %v1514, 96
      %v1543 = vpop.permute.xlu0 %1542
      %1544 = vrot.lane.b32.xlu0 %v1515, 96
      %v1545 = vpop.permute.xlu0 %1544
      %1546 = vrot.lane.b32.xlu0 %v1516, 96
      %v1547 = vpop.permute.xlu0 %1546
      %1548 = vrot.lane.b32.xlu0 %v1517, 96
      %v1549 = vpop.permute.xlu0 %1548
      %vm1566 = vcmask 1048320
      %1567 = vst.msk [vmem:[#allocation3] sm:$0xff] %vm1566, %v1519
      %1568 = vst.msk [vmem:[#allocation3 + $0x18] sm:$0xff] %vm1566, %v1521
      %1569 = vst.msk [vmem:[#allocation3 + $0x30] sm:$0xff] %vm1566, %v1523
      %1570 = vst.msk [vmem:[#allocation3 + $0x48] sm:$0xff] %vm1566, %v1525
      %1571 = vst.msk [vmem:[#allocation3 + $0x60] sm:$0xff] %vm1566, %v1527
      %1572 = vst.msk [vmem:[#allocation3 + $0x78] sm:$0xff] %vm1566, %v1529
      %1573 = vst.msk [vmem:[#allocation3 + $0x90] sm:$0xff] %vm1566, %v1531
      %1574 = vst.msk [vmem:[#allocation3 + $0xa8] sm:$0xff] %vm1566, %v1533
      %1575 = vst.msk [vmem:[#allocation3 + $0xc0] sm:$0xff] %vm1566, %v1535
      %1576 = vst.msk [vmem:[#allocation3 + $0xd8] sm:$0xff] %vm1566, %v1537
      %1577 = vst.msk [vmem:[#allocation3 + $0xf0] sm:$0xff] %vm1566, %v1539
      %1578 = vst.msk [vmem:[#allocation3 + $0x108] sm:$0xff] %vm1566, %v1541
      %1579 = vst.msk [vmem:[#allocation3 + $0x120] sm:$0xff] %vm1566, %v1543
      %1580 = vst.msk [vmem:[#allocation3 + $0x138] sm:$0xff] %vm1566, %v1545
      %1581 = vst.msk [vmem:[#allocation3 + $0x150] sm:$0xff] %vm1566, %v1547
      %1582 = vst.msk [vmem:[#allocation3 + $0x168] sm:$0xff] %vm1566, %v1549
      %v1583 = vld [vmem:[%s1405] sm:$0xf]
      %v1584 = vld [vmem:[%s1405 + $0x4] sm:$0xf]
      %v1585 = vld [vmem:[%s1405 + $0x8] sm:$0x1]
      %v1586 = vld [vmem:[%s1405 + $0xc] sm:$0xf]
      %v1587 = vld [vmem:[%s1405 + $0x10] sm:$0xf]
      %v1588 = vld [vmem:[%s1405 + $0x14] sm:$0x1]
      %v1589 = vld [vmem:[%s1405 + $0x18] sm:$0xf]
      %v1590 = vld [vmem:[%s1405 + $0x1c] sm:$0xf]
      %v1591 = vld [vmem:[%s1405 + $0x20] sm:$0x1]
      %v1592 = vld [vmem:[%s1405 + $0x24] sm:$0xf]
      %v1593 = vld [vmem:[%s1405 + $0x28] sm:$0xf]
      %v1594 = vld [vmem:[%s1405 + $0x2c] sm:$0x1]
      %v1595 = vld [vmem:[%s1405 + $0x30] sm:$0xf]
      %v1596 = vld [vmem:[%s1405 + $0x34] sm:$0xf]
      %v1597 = vld [vmem:[%s1405 + $0x38] sm:$0x1]
      %v1598 = vld [vmem:[%s1405 + $0x3c] sm:$0xf]
      %v1599 = vld [vmem:[%s1405 + $0x40] sm:$0xf]
      %v1600 = vld [vmem:[%s1405 + $0x44] sm:$0x1]
      %v1601 = vld [vmem:[%s1405 + $0x48] sm:$0xf]
      %v1602 = vld [vmem:[%s1405 + $0x4c] sm:$0xf]
      %v1603 = vld [vmem:[%s1405 + $0x50] sm:$0x1]
      %v1604 = vld [vmem:[%s1405 + $0x54] sm:$0xf]
      %v1605 = vld [vmem:[%s1405 + $0x58] sm:$0xf]
      %v1606 = vld [vmem:[%s1405 + $0x5c] sm:$0x1]
      %v1607 = vld [vmem:[%s1405 + $0x60] sm:$0xf]
      %v1608 = vld [vmem:[%s1405 + $0x64] sm:$0xf]
      %v1609 = vld [vmem:[%s1405 + $0x68] sm:$0x1]
      %v1610 = vld [vmem:[%s1405 + $0x6c] sm:$0xf]
      %v1611 = vld [vmem:[%s1405 + $0x70] sm:$0xf]
      %v1612 = vld [vmem:[%s1405 + $0x74] sm:$0x1]
      %v1613 = vld [vmem:[%s1405 + $0x78] sm:$0xf]
      %v1614 = vld [vmem:[%s1405 + $0x7c] sm:$0xf]
      %v1615 = vld [vmem:[%s1405 + $0x80] sm:$0x1]
      %v1616 = vld [vmem:[%s1405 + $0x84] sm:$0xf]
      %v1617 = vld [vmem:[%s1405 + $0x88] sm:$0xf]
      %v1618 = vld [vmem:[%s1405 + $0x8c] sm:$0x1]
      %v1619 = vld [vmem:[%s1405 + $0x90] sm:$0xf]
      %v1620 = vld [vmem:[%s1405 + $0x94] sm:$0xf]
      %v1621 = vld [vmem:[%s1405 + $0x98] sm:$0x1]
      %v1622 = vld [vmem:[%s1405 + $0x9c] sm:$0xf]
      %v1623 = vld [vmem:[%s1405 + $0xa0] sm:$0xf]
      %v1624 = vld [vmem:[%s1405 + $0xa4] sm:$0x1]
      %v1625 = vld [vmem:[%s1405 + $0xa8] sm:$0xf]
      %v1626 = vld [vmem:[%s1405 + $0xac] sm:$0xf]
      %v1627 = vld [vmem:[%s1405 + $0xb0] sm:$0x1]
      %v1628 = vld [vmem:[%s1405 + $0xb4] sm:$0xf]
      %v1629 = vld [vmem:[%s1405 + $0xb8] sm:$0xf]
      %v1630 = vld [vmem:[%s1405 + $0xbc] sm:$0x1]
      %v1679 = vunpack.c.l.b16 %v1583
      %v1680 = vunpack.c.l.b16 %v1584
      %v1681 = vunpack.c.l.b16 %v1585
      %v1682 = vunpack.c.l.b16 %v1586
      %v1683 = vunpack.c.l.b16 %v1587
      %v1684 = vunpack.c.l.b16 %v1588
      %v1685 = vunpack.c.l.b16 %v1589
      %v1686 = vunpack.c.l.b16 %v1590
      %v1687 = vunpack.c.l.b16 %v1591
      %v1688 = vunpack.c.l.b16 %v1592
      %v1689 = vunpack.c.l.b16 %v1593
      %v1690 = vunpack.c.l.b16 %v1594
      %v1691 = vunpack.c.l.b16 %v1595
      %v1692 = vunpack.c.l.b16 %v1596
      %v1693 = vunpack.c.l.b16 %v1597
      %v1694 = vunpack.c.l.b16 %v1598
      %v1695 = vunpack.c.l.b16 %v1599
      %v1696 = vunpack.c.l.b16 %v1600
      %v1697 = vunpack.c.l.b16 %v1601
      %v1698 = vunpack.c.l.b16 %v1602
      %v1699 = vunpack.c.l.b16 %v1603
      %v1700 = vunpack.c.l.b16 %v1604
      %v1701 = vunpack.c.l.b16 %v1605
      %v1702 = vunpack.c.l.b16 %v1606
      %v1703 = vunpack.c.l.b16 %v1607
      %v1704 = vunpack.c.l.b16 %v1608
      %v1705 = vunpack.c.l.b16 %v1609
      %v1706 = vunpack.c.l.b16 %v1610
      %v1707 = vunpack.c.l.b16 %v1611
      %v1708 = vunpack.c.l.b16 %v1612
      %v1709 = vunpack.c.l.b16 %v1613
      %v1710 = vunpack.c.l.b16 %v1614
      %v1711 = vunpack.c.l.b16 %v1615
      %v1712 = vunpack.c.l.b16 %v1616
      %v1713 = vunpack.c.l.b16 %v1617
      %v1714 = vunpack.c.l.b16 %v1618
      %v1715 = vunpack.c.l.b16 %v1619
      %v1716 = vunpack.c.l.b16 %v1620
      %v1717 = vunpack.c.l.b16 %v1621
      %v1718 = vunpack.c.l.b16 %v1622
      %v1719 = vunpack.c.l.b16 %v1623
      %v1720 = vunpack.c.l.b16 %v1624
      %v1721 = vunpack.c.l.b16 %v1625
      %v1722 = vunpack.c.l.b16 %v1626
      %v1723 = vunpack.c.l.b16 %v1627
      %v1724 = vunpack.c.l.b16 %v1628
      %v1725 = vunpack.c.l.b16 %v1629
      %v1726 = vunpack.c.l.b16 %v1630
      %v1727 = vpack.c.b16 %v1680, %v1679
      %v1728 = vpack.c.b16 %v1681, %v1681
      %v1729 = vpack.c.b16 %v1683, %v1682
      %v1730 = vpack.c.b16 %v1684, %v1684
      %v1731 = vpack.c.b16 %v1686, %v1685
      %v1732 = vpack.c.b16 %v1687, %v1687
      %v1733 = vpack.c.b16 %v1689, %v1688
      %v1734 = vpack.c.b16 %v1690, %v1690
      %v1735 = vpack.c.b16 %v1692, %v1691
      %v1736 = vpack.c.b16 %v1693, %v1693
      %v1737 = vpack.c.b16 %v1695, %v1694
      %v1738 = vpack.c.b16 %v1696, %v1696
      %v1739 = vpack.c.b16 %v1698, %v1697
      %v1740 = vpack.c.b16 %v1699, %v1699
      %v1741 = vpack.c.b16 %v1701, %v1700
      %v1742 = vpack.c.b16 %v1702, %v1702
      %v1743 = vpack.c.b16 %v1704, %v1703
      %v1744 = vpack.c.b16 %v1705, %v1705
      %v1745 = vpack.c.b16 %v1707, %v1706
      %v1746 = vpack.c.b16 %v1708, %v1708
      %v1747 = vpack.c.b16 %v1710, %v1709
      %v1748 = vpack.c.b16 %v1711, %v1711
      %v1749 = vpack.c.b16 %v1713, %v1712
      %v1750 = vpack.c.b16 %v1714, %v1714
      %v1751 = vpack.c.b16 %v1716, %v1715
      %v1752 = vpack.c.b16 %v1717, %v1717
      %v1753 = vpack.c.b16 %v1719, %v1718
      %v1754 = vpack.c.b16 %v1720, %v1720
      %v1755 = vpack.c.b16 %v1722, %v1721
      %v1756 = vpack.c.b16 %v1723, %v1723
      %v1757 = vpack.c.b16 %v1725, %v1724
      %v1758 = vpack.c.b16 %v1726, %v1726
      %v1760 = vshrl.u32 %v1727, 16
      %v1762 = vshll.u32 %v1727, 16
      %v1764 = vrot.slane %v1762, 1
      %v1765 = vor.u32 %v1760, %v1764
      %v1767 = vshll.u32 %v1728, 16
      %v1769 = vrot.slane %v1767, 1
      %v1770 = vsel %vm857, %v1765, %v1769
      %v1772 = vshrl.u32 %v1729, 16
      %v1774 = vshll.u32 %v1729, 16
      %v1776 = vrot.slane %v1774, 1
      %v1777 = vor.u32 %v1772, %v1776
      %v1779 = vshll.u32 %v1730, 16
      %v1781 = vrot.slane %v1779, 1
      %v1782 = vsel %vm857, %v1777, %v1781
      %v1784 = vshrl.u32 %v1731, 16
      %v1786 = vshll.u32 %v1731, 16
      %v1788 = vrot.slane %v1786, 1
      %v1789 = vor.u32 %v1784, %v1788
      %v1791 = vshll.u32 %v1732, 16
      %v1793 = vrot.slane %v1791, 1
      %v1794 = vsel %vm857, %v1789, %v1793
      %v1796 = vshrl.u32 %v1733, 16
      %v1798 = vshll.u32 %v1733, 16
      %v1800 = vrot.slane %v1798, 1
      %v1801 = vor.u32 %v1796, %v1800
      %v1803 = vshll.u32 %v1734, 16
      %v1805 = vrot.slane %v1803, 1
      %v1806 = vsel %vm857, %v1801, %v1805
      %v1808 = vshrl.u32 %v1735, 16
      %v1810 = vshll.u32 %v1735, 16
      %v1812 = vrot.slane %v1810, 1
      %v1813 = vor.u32 %v1808, %v1812
      %v1815 = vshll.u32 %v1736, 16
      %v1817 = vrot.slane %v1815, 1
      %v1818 = vsel %vm857, %v1813, %v1817
      %v1820 = vshrl.u32 %v1737, 16
      %v1822 = vshll.u32 %v1737, 16
      %v1824 = vrot.slane %v1822, 1
      %v1825 = vor.u32 %v1820, %v1824
      %v1827 = vshll.u32 %v1738, 16
      %v1829 = vrot.slane %v1827, 1
      %v1830 = vsel %vm857, %v1825, %v1829
      %v1832 = vshrl.u32 %v1739, 16
      %v1834 = vshll.u32 %v1739, 16
      %v1836 = vrot.slane %v1834, 1
      %v1837 = vor.u32 %v1832, %v1836
      %v1839 = vshll.u32 %v1740, 16
      %v1841 = vrot.slane %v1839, 1
      %v1842 = vsel %vm857, %v1837, %v1841
      %v1844 = vshrl.u32 %v1741, 16
      %v1846 = vshll.u32 %v1741, 16
      %v1848 = vrot.slane %v1846, 1
      %v1849 = vor.u32 %v1844, %v1848
      %v1851 = vshll.u32 %v1742, 16
      %v1853 = vrot.slane %v1851, 1
      %v1854 = vsel %vm857, %v1849, %v1853
      %v1856 = vshrl.u32 %v1743, 16
      %v1858 = vshll.u32 %v1743, 16
      %v1860 = vrot.slane %v1858, 1
      %v1861 = vor.u32 %v1856, %v1860
      %v1863 = vshll.u32 %v1744, 16
      %v1865 = vrot.slane %v1863, 1
      %v1866 = vsel %vm857, %v1861, %v1865
      %v1868 = vshrl.u32 %v1745, 16
      %v1870 = vshll.u32 %v1745, 16
      %v1872 = vrot.slane %v1870, 1
      %v1873 = vor.u32 %v1868, %v1872
      %v1875 = vshll.u32 %v1746, 16
      %v1877 = vrot.slane %v1875, 1
      %v1878 = vsel %vm857, %v1873, %v1877
      %v1880 = vshrl.u32 %v1747, 16
      %v1882 = vshll.u32 %v1747, 16
      %v1884 = vrot.slane %v1882, 1
      %v1885 = vor.u32 %v1880, %v1884
      %v1887 = vshll.u32 %v1748, 16
      %v1889 = vrot.slane %v1887, 1
      %v1890 = vsel %vm857, %v1885, %v1889
      %v1892 = vshrl.u32 %v1749, 16
      %v1894 = vshll.u32 %v1749, 16
      %v1896 = vrot.slane %v1894, 1
      %v1897 = vor.u32 %v1892, %v1896
      %v1899 = vshll.u32 %v1750, 16
      %v1901 = vrot.slane %v1899, 1
      %v1902 = vsel %vm857, %v1897, %v1901
      %v1904 = vshrl.u32 %v1751, 16
      %v1906 = vshll.u32 %v1751, 16
      %v1908 = vrot.slane %v1906, 1
      %v1909 = vor.u32 %v1904, %v1908
      %v1911 = vshll.u32 %v1752, 16
      %v1913 = vrot.slane %v1911, 1
      %v1914 = vsel %vm857, %v1909, %v1913
      %v1916 = vshrl.u32 %v1753, 16
      %v1918 = vshll.u32 %v1753, 16
      %v1920 = vrot.slane %v1918, 1
      %v1921 = vor.u32 %v1916, %v1920
      %v1923 = vshll.u32 %v1754, 16
      %v1925 = vrot.slane %v1923, 1
      %v1926 = vsel %vm857, %v1921, %v1925
      %v1928 = vshrl.u32 %v1755, 16
      %v1930 = vshll.u32 %v1755, 16
      %v1932 = vrot.slane %v1930, 1
      %v1933 = vor.u32 %v1928, %v1932
      %v1935 = vshll.u32 %v1756, 16
      %v1937 = vrot.slane %v1935, 1
      %v1938 = vsel %vm857, %v1933, %v1937
      %v1940 = vshrl.u32 %v1757, 16
      %v1942 = vshll.u32 %v1757, 16
      %v1944 = vrot.slane %v1942, 1
      %v1945 = vor.u32 %v1940, %v1944
      %v1947 = vshll.u32 %v1758, 16
      %v1949 = vrot.slane %v1947, 1
      %v1950 = vsel %vm857, %v1945, %v1949
      %1967 = vst.msk [vmem:[#allocation3 + $0x8] sm:$0xff] %vm664, %v1770
      %1968 = vst.msk [vmem:[#allocation3 + $0x20] sm:$0xff] %vm664, %v1782
      %1969 = vst.msk [vmem:[#allocation3 + $0x38] sm:$0xff] %vm664, %v1794
      %1970 = vst.msk [vmem:[#allocation3 + $0x50] sm:$0xff] %vm664, %v1806
      %1971 = vst.msk [vmem:[#allocation3 + $0x68] sm:$0xff] %vm664, %v1818
      %1972 = vst.msk [vmem:[#allocation3 + $0x80] sm:$0xff] %vm664, %v1830
      %1973 = vst.msk [vmem:[#allocation3 + $0x98] sm:$0xff] %vm664, %v1842
      %1974 = vst.msk [vmem:[#allocation3 + $0xb0] sm:$0xff] %vm664, %v1854
      %1975 = vst.msk [vmem:[#allocation3 + $0xc8] sm:$0xff] %vm664, %v1866
      %1976 = vst.msk [vmem:[#allocation3 + $0xe0] sm:$0xff] %vm664, %v1878
      %1977 = vst.msk [vmem:[#allocation3 + $0xf8] sm:$0xff] %vm664, %v1890
      %1978 = vst.msk [vmem:[#allocation3 + $0x110] sm:$0xff] %vm664, %v1902
      %1979 = vst.msk [vmem:[#allocation3 + $0x128] sm:$0xff] %vm664, %v1914
      %1980 = vst.msk [vmem:[#allocation3 + $0x140] sm:$0xff] %vm664, %v1926
      %1981 = vst.msk [vmem:[#allocation3 + $0x158] sm:$0xff] %vm664, %v1938
      %1982 = vst.msk [vmem:[#allocation3 + $0x170] sm:$0xff] %vm664, %v1950
      %v1983 = vld [vmem:[%s1405] sm:$0xe]
      %v1984 = vld [vmem:[%s1405 + $0x4] sm:$0xf]
      %v1985 = vld [vmem:[%s1405 + $0x8] sm:$0x1]
      %v1986 = vld [vmem:[%s1405 + $0xc] sm:$0xe]
      %v1987 = vld [vmem:[%s1405 + $0x10] sm:$0xf]
      %v1988 = vld [vmem:[%s1405 + $0x14] sm:$0x1]
      %v1989 = vld [vmem:[%s1405 + $0x18] sm:$0xe]
      %v1990 = vld [vmem:[%s1405 + $0x1c] sm:$0xf]
      %v1991 = vld [vmem:[%s1405 + $0x20] sm:$0x1]
      %v1992 = vld [vmem:[%s1405 + $0x24] sm:$0xe]
      %v1993 = vld [vmem:[%s1405 + $0x28] sm:$0xf]
      %v1994 = vld [vmem:[%s1405 + $0x2c] sm:$0x1]
      %v1995 = vld [vmem:[%s1405 + $0x30] sm:$0xe]
      %v1996 = vld [vmem:[%s1405 + $0x34] sm:$0xf]
      %v1997 = vld [vmem:[%s1405 + $0x38] sm:$0x1]
      %v1998 = vld [vmem:[%s1405 + $0x3c] sm:$0xe]
      %v1999 = vld [vmem:[%s1405 + $0x40] sm:$0xf]
      %v2000 = vld [vmem:[%s1405 + $0x44] sm:$0x1]
      %v2001 = vld [vmem:[%s1405 + $0x48] sm:$0xe]
      %v2002 = vld [vmem:[%s1405 + $0x4c] sm:$0xf]
      %v2003 = vld [vmem:[%s1405 + $0x50] sm:$0x1]
      %v2004 = vld [vmem:[%s1405 + $0x54] sm:$0xe]
      %v2005 = vld [vmem:[%s1405 + $0x58] sm:$0xf]
      %v2006 = vld [vmem:[%s1405 + $0x5c] sm:$0x1]
      %v2007 = vld [vmem:[%s1405 + $0x60] sm:$0xe]
      %v2008 = vld [vmem:[%s1405 + $0x64] sm:$0xf]
      %v2009 = vld [vmem:[%s1405 + $0x68] sm:$0x1]
      %v2010 = vld [vmem:[%s1405 + $0x6c] sm:$0xe]
      %v2011 = vld [vmem:[%s1405 + $0x70] sm:$0xf]
      %v2012 = vld [vmem:[%s1405 + $0x74] sm:$0x1]
      %v2013 = vld [vmem:[%s1405 + $0x78] sm:$0xe]
      %v2014 = vld [vmem:[%s1405 + $0x7c] sm:$0xf]
      %v2015 = vld [vmem:[%s1405 + $0x80] sm:$0x1]
      %v2016 = vld [vmem:[%s1405 + $0x84] sm:$0xe]
      %v2017 = vld [vmem:[%s1405 + $0x88] sm:$0xf]
      %v2018 = vld [vmem:[%s1405 + $0x8c] sm:$0x1]
      %v2019 = vld [vmem:[%s1405 + $0x90] sm:$0xe]
      %v2020 = vld [vmem:[%s1405 + $0x94] sm:$0xf]
      %v2021 = vld [vmem:[%s1405 + $0x98] sm:$0x1]
      %v2022 = vld [vmem:[%s1405 + $0x9c] sm:$0xe]
      %v2023 = vld [vmem:[%s1405 + $0xa0] sm:$0xf]
      %v2024 = vld [vmem:[%s1405 + $0xa4] sm:$0x1]
      %v2025 = vld [vmem:[%s1405 + $0xa8] sm:$0xe]
      %v2026 = vld [vmem:[%s1405 + $0xac] sm:$0xf]
      %v2027 = vld [vmem:[%s1405 + $0xb0] sm:$0x1]
      %v2028 = vld [vmem:[%s1405 + $0xb4] sm:$0xe]
      %v2029 = vld [vmem:[%s1405 + $0xb8] sm:$0xf]
      %v2030 = vld [vmem:[%s1405 + $0xbc] sm:$0x1]
      %v2079 = vunpack.c.l.b16 %v1983
      %v2080 = vunpack.c.l.b16 %v1984
      %v2081 = vunpack.c.l.b16 %v1985
      %v2082 = vunpack.c.l.b16 %v1986
      %v2083 = vunpack.c.l.b16 %v1987
      %v2084 = vunpack.c.l.b16 %v1988
      %v2085 = vunpack.c.l.b16 %v1989
      %v2086 = vunpack.c.l.b16 %v1990
      %v2087 = vunpack.c.l.b16 %v1991
      %v2088 = vunpack.c.l.b16 %v1992
      %v2089 = vunpack.c.l.b16 %v1993
      %v2090 = vunpack.c.l.b16 %v1994
      %v2091 = vunpack.c.l.b16 %v1995
      %v2092 = vunpack.c.l.b16 %v1996
      %v2093 = vunpack.c.l.b16 %v1997
      %v2094 = vunpack.c.l.b16 %v1998
      %v2095 = vunpack.c.l.b16 %v1999
      %v2096 = vunpack.c.l.b16 %v2000
      %v2097 = vunpack.c.l.b16 %v2001
      %v2098 = vunpack.c.l.b16 %v2002
      %v2099 = vunpack.c.l.b16 %v2003
      %v2100 = vunpack.c.l.b16 %v2004
      %v2101 = vunpack.c.l.b16 %v2005
      %v2102 = vunpack.c.l.b16 %v2006
      %v2103 = vunpack.c.l.b16 %v2007
      %v2104 = vunpack.c.l.b16 %v2008
      %v2105 = vunpack.c.l.b16 %v2009
      %v2106 = vunpack.c.l.b16 %v2010
      %v2107 = vunpack.c.l.b16 %v2011
      %v2108 = vunpack.c.l.b16 %v2012
      %v2109 = vunpack.c.l.b16 %v2013
      %v2110 = vunpack.c.l.b16 %v2014
      %v2111 = vunpack.c.l.b16 %v2015
      %v2112 = vunpack.c.l.b16 %v2016
      %v2113 = vunpack.c.l.b16 %v2017
      %v2114 = vunpack.c.l.b16 %v2018
      %v2115 = vunpack.c.l.b16 %v2019
      %v2116 = vunpack.c.l.b16 %v2020
      %v2117 = vunpack.c.l.b16 %v2021
      %v2118 = vunpack.c.l.b16 %v2022
      %v2119 = vunpack.c.l.b16 %v2023
      %v2120 = vunpack.c.l.b16 %v2024
      %v2121 = vunpack.c.l.b16 %v2025
      %v2122 = vunpack.c.l.b16 %v2026
      %v2123 = vunpack.c.l.b16 %v2027
      %v2124 = vunpack.c.l.b16 %v2028
      %v2125 = vunpack.c.l.b16 %v2029
      %v2126 = vunpack.c.l.b16 %v2030
      %v2127 = vpack.c.b16 %v2080, %v2079
      %v2128 = vpack.c.b16 %v2081, %v2081
      %v2129 = vpack.c.b16 %v2083, %v2082
      %v2130 = vpack.c.b16 %v2084, %v2084
      %v2131 = vpack.c.b16 %v2086, %v2085
      %v2132 = vpack.c.b16 %v2087, %v2087
      %v2133 = vpack.c.b16 %v2089, %v2088
      %v2134 = vpack.c.b16 %v2090, %v2090
      %v2135 = vpack.c.b16 %v2092, %v2091
      %v2136 = vpack.c.b16 %v2093, %v2093
      %v2137 = vpack.c.b16 %v2095, %v2094
      %v2138 = vpack.c.b16 %v2096, %v2096
      %v2139 = vpack.c.b16 %v2098, %v2097
      %v2140 = vpack.c.b16 %v2099, %v2099
      %v2141 = vpack.c.b16 %v2101, %v2100
      %v2142 = vpack.c.b16 %v2102, %v2102
      %v2143 = vpack.c.b16 %v2104, %v2103
      %v2144 = vpack.c.b16 %v2105, %v2105
      %v2145 = vpack.c.b16 %v2107, %v2106
      %v2146 = vpack.c.b16 %v2108, %v2108
      %v2147 = vpack.c.b16 %v2110, %v2109
      %v2148 = vpack.c.b16 %v2111, %v2111
      %v2149 = vpack.c.b16 %v2113, %v2112
      %v2150 = vpack.c.b16 %v2114, %v2114
      %v2151 = vpack.c.b16 %v2116, %v2115
      %v2152 = vpack.c.b16 %v2117, %v2117
      %v2153 = vpack.c.b16 %v2119, %v2118
      %v2154 = vpack.c.b16 %v2120, %v2120
      %v2155 = vpack.c.b16 %v2122, %v2121
      %v2156 = vpack.c.b16 %v2123, %v2123
      %v2157 = vpack.c.b16 %v2125, %v2124
      %v2158 = vpack.c.b16 %v2126, %v2126
      %v2159 = vrot.slane %v2127, 1
      %v2160 = vrot.slane %v2128, 1
      %v2161 = vsel %vm1291, %v2159, %v2160
      %v2162 = vrot.slane %v2129, 1
      %v2163 = vrot.slane %v2130, 1
      %v2164 = vsel %vm1291, %v2162, %v2163
      %v2165 = vrot.slane %v2131, 1
      %v2166 = vrot.slane %v2132, 1
      %v2167 = vsel %vm1291, %v2165, %v2166
      %v2168 = vrot.slane %v2133, 1
      %v2169 = vrot.slane %v2134, 1
      %v2170 = vsel %vm1291, %v2168, %v2169
      %v2171 = vrot.slane %v2135, 1
      %v2172 = vrot.slane %v2136, 1
      %v2173 = vsel %vm1291, %v2171, %v2172
      %v2174 = vrot.slane %v2137, 1
      %v2175 = vrot.slane %v2138, 1
      %v2176 = vsel %vm1291, %v2174, %v2175
      %v2177 = vrot.slane %v2139, 1
      %v2178 = vrot.slane %v2140, 1
      %v2179 = vsel %vm1291, %v2177, %v2178
      %v2180 = vrot.slane %v2141, 1
      %v2181 = vrot.slane %v2142, 1
      %v2182 = vsel %vm1291, %v2180, %v2181
      %v2183 = vrot.slane %v2143, 1
      %v2184 = vrot.slane %v2144, 1
      %v2185 = vsel %vm1291, %v2183, %v2184
      %v2186 = vrot.slane %v2145, 1
      %v2187 = vrot.slane %v2146, 1
      %v2188 = vsel %vm1291, %v2186, %v2187
      %v2189 = vrot.slane %v2147, 1
      %v2190 = vrot.slane %v2148, 1
      %v2191 = vsel %vm1291, %v2189, %v2190
      %v2192 = vrot.slane %v2149, 1
      %v2193 = vrot.slane %v2150, 1
      %v2194 = vsel %vm1291, %v2192, %v2193
      %v2195 = vrot.slane %v2151, 1
      %v2196 = vrot.slane %v2152, 1
      %v2197 = vsel %vm1291, %v2195, %v2196
      %v2198 = vrot.slane %v2153, 1
      %v2199 = vrot.slane %v2154, 1
      %v2200 = vsel %vm1291, %v2198, %v2199
      %v2201 = vrot.slane %v2155, 1
      %v2202 = vrot.slane %v2156, 1
      %v2203 = vsel %vm1291, %v2201, %v2202
      %v2204 = vrot.slane %v2157, 1
      %v2205 = vrot.slane %v2158, 1
      %v2206 = vsel %vm1291, %v2204, %v2205
      %2207 = vrot.lane.b32.xlu0 %v2161, 32
      %v2208 = vpop.permute.xlu0 %2207
      %2209 = vrot.lane.b32.xlu0 %v2164, 32
      %v2210 = vpop.permute.xlu0 %2209
      %2211 = vrot.lane.b32.xlu0 %v2167, 32
      %v2212 = vpop.permute.xlu0 %2211
      %2213 = vrot.lane.b32.xlu0 %v2170, 32
      %v2214 = vpop.permute.xlu0 %2213
      %2215 = vrot.lane.b32.xlu0 %v2173, 32
      %v2216 = vpop.permute.xlu0 %2215
      %2217 = vrot.lane.b32.xlu0 %v2176, 32
      %v2218 = vpop.permute.xlu0 %2217
      %2219 = vrot.lane.b32.xlu0 %v2179, 32
      %v2220 = vpop.permute.xlu0 %2219
      %2221 = vrot.lane.b32.xlu0 %v2182, 32
      %v2222 = vpop.permute.xlu0 %2221
      %2223 = vrot.lane.b32.xlu0 %v2185, 32
      %v2224 = vpop.permute.xlu0 %2223
      %2225 = vrot.lane.b32.xlu0 %v2188, 32
      %v2226 = vpop.permute.xlu0 %2225
      %2227 = vrot.lane.b32.xlu0 %v2191, 32
      %v2228 = vpop.permute.xlu0 %2227
      %2229 = vrot.lane.b32.xlu0 %v2194, 32
      %v2230 = vpop.permute.xlu0 %2229
      %2231 = vrot.lane.b32.xlu0 %v2197, 32
      %v2232 = vpop.permute.xlu0 %2231
      %2233 = vrot.lane.b32.xlu0 %v2200, 32
      %v2234 = vpop.permute.xlu0 %2233
      %2235 = vrot.lane.b32.xlu0 %v2203, 32
      %v2236 = vpop.permute.xlu0 %2235
      %2237 = vrot.lane.b32.xlu0 %v2206, 32
      %v2238 = vpop.permute.xlu0 %2237
      %2255 = vst.msk [vmem:[#allocation3 + $0x8] sm:$0xff] %vm1098, %v2208
      %2256 = vst.msk [vmem:[#allocation3 + $0x20] sm:$0xff] %vm1098, %v2210
      %2257 = vst.msk [vmem:[#allocation3 + $0x38] sm:$0xff] %vm1098, %v2212
      %2258 = vst.msk [vmem:[#allocation3 + $0x50] sm:$0xff] %vm1098, %v2214
      %2259 = vst.msk [vmem:[#allocation3 + $0x68] sm:$0xff] %vm1098, %v2216
      %2260 = vst.msk [vmem:[#allocation3 + $0x80] sm:$0xff] %vm1098, %v2218
      %2261 = vst.msk [vmem:[#allocation3 + $0x98] sm:$0xff] %vm1098, %v2220
      %2262 = vst.msk [vmem:[#allocation3 + $0xb0] sm:$0xff] %vm1098, %v2222
      %2263 = vst.msk [vmem:[#allocation3 + $0xc8] sm:$0xff] %vm1098, %v2224
      %2264 = vst.msk [vmem:[#allocation3 + $0xe0] sm:$0xff] %vm1098, %v2226
      %2265 = vst.msk [vmem:[#allocation3 + $0xf8] sm:$0xff] %vm1098, %v2228
      %2266 = vst.msk [vmem:[#allocation3 + $0x110] sm:$0xff] %vm1098, %v2230
      %2267 = vst.msk [vmem:[#allocation3 + $0x128] sm:$0xff] %vm1098, %v2232
      %2268 = vst.msk [vmem:[#allocation3 + $0x140] sm:$0xff] %vm1098, %v2234
      %2269 = vst.msk [vmem:[#allocation3 + $0x158] sm:$0xff] %vm1098, %v2236
      %2270 = vst.msk [vmem:[#allocation3 + $0x170] sm:$0xff] %vm1098, %v2238
      %s2271 = scalar_lea.vmem [#allocation2], 24
      %v2272 = vld [vmem:[%s2271] sm:$0xf]
      %v2273 = vld [vmem:[%s2271 + $0x4] sm:$0xf]
      %v2274 = vld [vmem:[%s2271 + $0xc] sm:$0xf]
      %v2275 = vld [vmem:[%s2271 + $0x10] sm:$0xf]
      %v2276 = vld [vmem:[%s2271 + $0x18] sm:$0xf]
      %v2277 = vld [vmem:[%s2271 + $0x1c] sm:$0xf]
      %v2278 = vld [vmem:[%s2271 + $0x24] sm:$0xf]
      %v2279 = vld [vmem:[%s2271 + $0x28] sm:$0xf]
      %v2280 = vld [vmem:[%s2271 + $0x30] sm:$0xf]
      %v2281 = vld [vmem:[%s2271 + $0x34] sm:$0xf]
      %v2282 = vld [vmem:[%s2271 + $0x3c] sm:$0xf]
      %v2283 = vld [vmem:[%s2271 + $0x40] sm:$0xf]
      %v2284 = vld [vmem:[%s2271 + $0x48] sm:$0xf]
      %v2285 = vld [vmem:[%s2271 + $0x4c] sm:$0xf]
      %v2286 = vld [vmem:[%s2271 + $0x54] sm:$0xf]
      %v2287 = vld [vmem:[%s2271 + $0x58] sm:$0xf]
      %v2288 = vld [vmem:[%s2271 + $0x60] sm:$0xf]
      %v2289 = vld [vmem:[%s2271 + $0x64] sm:$0xf]
      %v2290 = vld [vmem:[%s2271 + $0x6c] sm:$0xf]
      %v2291 = vld [vmem:[%s2271 + $0x70] sm:$0xf]
      %v2292 = vld [vmem:[%s2271 + $0x78] sm:$0xf]
      %v2293 = vld [vmem:[%s2271 + $0x7c] sm:$0xf]
      %v2294 = vld [vmem:[%s2271 + $0x84] sm:$0xf]
      %v2295 = vld [vmem:[%s2271 + $0x88] sm:$0xf]
      %v2296 = vld [vmem:[%s2271 + $0x90] sm:$0xf]
      %v2297 = vld [vmem:[%s2271 + $0x94] sm:$0xf]
      %v2298 = vld [vmem:[%s2271 + $0x9c] sm:$0xf]
      %v2299 = vld [vmem:[%s2271 + $0xa0] sm:$0xf]
      %v2300 = vld [vmem:[%s2271 + $0xa8] sm:$0xf]
      %v2301 = vld [vmem:[%s2271 + $0xac] sm:$0xf]
      %v2302 = vld [vmem:[%s2271 + $0xb4] sm:$0xf]
      %v2303 = vld [vmem:[%s2271 + $0xb8] sm:$0xf]
      %v2336 = vunpack.c.l.b16 %v2272
      %v2337 = vunpack.c.l.b16 %v2273
      %v2338 = vunpack.c.l.b16 %v2274
      %v2339 = vunpack.c.l.b16 %v2275
      %v2340 = vunpack.c.l.b16 %v2276
      %v2341 = vunpack.c.l.b16 %v2277
      %v2342 = vunpack.c.l.b16 %v2278
      %v2343 = vunpack.c.l.b16 %v2279
      %v2344 = vunpack.c.l.b16 %v2280
      %v2345 = vunpack.c.l.b16 %v2281
      %v2346 = vunpack.c.l.b16 %v2282
      %v2347 = vunpack.c.l.b16 %v2283
      %v2348 = vunpack.c.l.b16 %v2284
      %v2349 = vunpack.c.l.b16 %v2285
      %v2350 = vunpack.c.l.b16 %v2286
      %v2351 = vunpack.c.l.b16 %v2287
      %v2352 = vunpack.c.l.b16 %v2288
      %v2353 = vunpack.c.l.b16 %v2289
      %v2354 = vunpack.c.l.b16 %v2290
      %v2355 = vunpack.c.l.b16 %v2291
      %v2356 = vunpack.c.l.b16 %v2292
      %v2357 = vunpack.c.l.b16 %v2293
      %v2358 = vunpack.c.l.b16 %v2294
      %v2359 = vunpack.c.l.b16 %v2295
      %v2360 = vunpack.c.l.b16 %v2296
      %v2361 = vunpack.c.l.b16 %v2297
      %v2362 = vunpack.c.l.b16 %v2298
      %v2363 = vunpack.c.l.b16 %v2299
      %v2364 = vunpack.c.l.b16 %v2300
      %v2365 = vunpack.c.l.b16 %v2301
      %v2366 = vunpack.c.l.b16 %v2302
      %v2367 = vunpack.c.l.b16 %v2303
      %v2368 = vpack.c.b16 %v2337, %v2336
      %v2369 = vpack.c.b16 %v2339, %v2338
      %v2370 = vpack.c.b16 %v2341, %v2340
      %v2371 = vpack.c.b16 %v2343, %v2342
      %v2372 = vpack.c.b16 %v2345, %v2344
      %v2373 = vpack.c.b16 %v2347, %v2346
      %v2374 = vpack.c.b16 %v2349, %v2348
      %v2375 = vpack.c.b16 %v2351, %v2350
      %v2376 = vpack.c.b16 %v2353, %v2352
      %v2377 = vpack.c.b16 %v2355, %v2354
      %v2378 = vpack.c.b16 %v2357, %v2356
      %v2379 = vpack.c.b16 %v2359, %v2358
      %v2380 = vpack.c.b16 %v2361, %v2360
      %v2381 = vpack.c.b16 %v2363, %v2362
      %v2382 = vpack.c.b16 %v2365, %v2364
      %v2383 = vpack.c.b16 %v2367, %v2366
      %2384 = vrot.lane.b32.xlu0 %v2368, 64
      %v2385 = vpop.permute.xlu0 %2384
      %2386 = vrot.lane.b32.xlu0 %v2369, 64
      %v2387 = vpop.permute.xlu0 %2386
      %2388 = vrot.lane.b32.xlu0 %v2370, 64
      %v2389 = vpop.permute.xlu0 %2388
      %2390 = vrot.lane.b32.xlu0 %v2371, 64
      %v2391 = vpop.permute.xlu0 %2390
      %2392 = vrot.lane.b32.xlu0 %v2372, 64
      %v2393 = vpop.permute.xlu0 %2392
      %2394 = vrot.lane.b32.xlu0 %v2373, 64
      %v2395 = vpop.permute.xlu0 %2394
      %2396 = vrot.lane.b32.xlu0 %v2374, 64
      %v2397 = vpop.permute.xlu0 %2396
      %2398 = vrot.lane.b32.xlu0 %v2375, 64
      %v2399 = vpop.permute.xlu0 %2398
      %2400 = vrot.lane.b32.xlu0 %v2376, 64
      %v2401 = vpop.permute.xlu0 %2400
      %2402 = vrot.lane.b32.xlu0 %v2377, 64
      %v2403 = vpop.permute.xlu0 %2402
      %2404 = vrot.lane.b32.xlu0 %v2378, 64
      %v2405 = vpop.permute.xlu0 %2404
      %2406 = vrot.lane.b32.xlu0 %v2379, 64
      %v2407 = vpop.permute.xlu0 %2406
      %2408 = vrot.lane.b32.xlu0 %v2380, 64
      %v2409 = vpop.permute.xlu0 %2408
      %2410 = vrot.lane.b32.xlu0 %v2381, 64
      %v2411 = vpop.permute.xlu0 %2410
      %2412 = vrot.lane.b32.xlu0 %v2382, 64
      %v2413 = vpop.permute.xlu0 %2412
      %2414 = vrot.lane.b32.xlu0 %v2383, 64
      %v2415 = vpop.permute.xlu0 %2414
      %2432 = vst.msk [vmem:[#allocation3 + $0x8] sm:$0xff] %vm1388, %v2385
      %2433 = vst.msk [vmem:[#allocation3 + $0x20] sm:$0xff] %vm1388, %v2387
      %2434 = vst.msk [vmem:[#allocation3 + $0x38] sm:$0xff] %vm1388, %v2389
      %2435 = vst.msk [vmem:[#allocation3 + $0x50] sm:$0xff] %vm1388, %v2391
      %2436 = vst.msk [vmem:[#allocation3 + $0x68] sm:$0xff] %vm1388, %v2393
      %2437 = vst.msk [vmem:[#allocation3 + $0x80] sm:$0xff] %vm1388, %v2395
      %2438 = vst.msk [vmem:[#allocation3 + $0x98] sm:$0xff] %vm1388, %v2397
      %2439 = vst.msk [vmem:[#allocation3 + $0xb0] sm:$0xff] %vm1388, %v2399
      %2440 = vst.msk [vmem:[#allocation3 + $0xc8] sm:$0xff] %vm1388, %v2401
      %2441 = vst.msk [vmem:[#allocation3 + $0xe0] sm:$0xff] %vm1388, %v2403
      %2442 = vst.msk [vmem:[#allocation3 + $0xf8] sm:$0xff] %vm1388, %v2405
      %2443 = vst.msk [vmem:[#allocation3 + $0x110] sm:$0xff] %vm1388, %v2407
      %2444 = vst.msk [vmem:[#allocation3 + $0x128] sm:$0xff] %vm1388, %v2409
      %2445 = vst.msk [vmem:[#allocation3 + $0x140] sm:$0xff] %vm1388, %v2411
      %2446 = vst.msk [vmem:[#allocation3 + $0x158] sm:$0xff] %vm1388, %v2413
      %2447 = vst.msk [vmem:[#allocation3 + $0x170] sm:$0xff] %vm1388, %v2415
      %v2448 = vld [vmem:[%s2271] sm:$0xf]
      %v2449 = vld [vmem:[%s2271 + $0x4] sm:$0xf]
      %v2450 = vld [vmem:[%s2271 + $0x8] sm:$0x1]
      %v2451 = vld [vmem:[%s2271 + $0xc] sm:$0xf]
      %v2452 = vld [vmem:[%s2271 + $0x10] sm:$0xf]
      %v2453 = vld [vmem:[%s2271 + $0x14] sm:$0x1]
      %v2454 = vld [vmem:[%s2271 + $0x18] sm:$0xf]
      %v2455 = vld [vmem:[%s2271 + $0x1c] sm:$0xf]
      %v2456 = vld [vmem:[%s2271 + $0x20] sm:$0x1]
      %v2457 = vld [vmem:[%s2271 + $0x24] sm:$0xf]
      %v2458 = vld [vmem:[%s2271 + $0x28] sm:$0xf]
      %v2459 = vld [vmem:[%s2271 + $0x2c] sm:$0x1]
      %v2460 = vld [vmem:[%s2271 + $0x30] sm:$0xf]
      %v2461 = vld [vmem:[%s2271 + $0x34] sm:$0xf]
      %v2462 = vld [vmem:[%s2271 + $0x38] sm:$0x1]
      %v2463 = vld [vmem:[%s2271 + $0x3c] sm:$0xf]
      %v2464 = vld [vmem:[%s2271 + $0x40] sm:$0xf]
      %v2465 = vld [vmem:[%s2271 + $0x44] sm:$0x1]
      %v2466 = vld [vmem:[%s2271 + $0x48] sm:$0xf]
      %v2467 = vld [vmem:[%s2271 + $0x4c] sm:$0xf]
      %v2468 = vld [vmem:[%s2271 + $0x50] sm:$0x1]
      %v2469 = vld [vmem:[%s2271 + $0x54] sm:$0xf]
      %v2470 = vld [vmem:[%s2271 + $0x58] sm:$0xf]
      %v2471 = vld [vmem:[%s2271 + $0x5c] sm:$0x1]
      %v2472 = vld [vmem:[%s2271 + $0x60] sm:$0xf]
      %v2473 = vld [vmem:[%s2271 + $0x64] sm:$0xf]
      %v2474 = vld [vmem:[%s2271 + $0x68] sm:$0x1]
      %v2475 = vld [vmem:[%s2271 + $0x6c] sm:$0xf]
      %v2476 = vld [vmem:[%s2271 + $0x70] sm:$0xf]
      %v2477 = vld [vmem:[%s2271 + $0x74] sm:$0x1]
      %v2478 = vld [vmem:[%s2271 + $0x78] sm:$0xf]
      %v2479 = vld [vmem:[%s2271 + $0x7c] sm:$0xf]
      %v2480 = vld [vmem:[%s2271 + $0x80] sm:$0x1]
      %v2481 = vld [vmem:[%s2271 + $0x84] sm:$0xf]
      %v2482 = vld [vmem:[%s2271 + $0x88] sm:$0xf]
      %v2483 = vld [vmem:[%s2271 + $0x8c] sm:$0x1]
      %v2484 = vld [vmem:[%s2271 + $0x90] sm:$0xf]
      %v2485 = vld [vmem:[%s2271 + $0x94] sm:$0xf]
      %v2486 = vld [vmem:[%s2271 + $0x98] sm:$0x1]
      %v2487 = vld [vmem:[%s2271 + $0x9c] sm:$0xf]
      %v2488 = vld [vmem:[%s2271 + $0xa0] sm:$0xf]
      %v2489 = vld [vmem:[%s2271 + $0xa4] sm:$0x1]
      %v2490 = vld [vmem:[%s2271 + $0xa8] sm:$0xf]
      %v2491 = vld [vmem:[%s2271 + $0xac] sm:$0xf]
      %v2492 = vld [vmem:[%s2271 + $0xb0] sm:$0x1]
      %v2493 = vld [vmem:[%s2271 + $0xb4] sm:$0xf]
      %v2494 = vld [vmem:[%s2271 + $0xb8] sm:$0xf]
      %v2495 = vld [vmem:[%s2271 + $0xbc] sm:$0x1]
      %v2544 = vunpack.c.l.b16 %v2448
      %v2545 = vunpack.c.l.b16 %v2449
      %v2546 = vunpack.c.l.b16 %v2450
      %v2547 = vunpack.c.l.b16 %v2451
      %v2548 = vunpack.c.l.b16 %v2452
      %v2549 = vunpack.c.l.b16 %v2453
      %v2550 = vunpack.c.l.b16 %v2454
      %v2551 = vunpack.c.l.b16 %v2455
      %v2552 = vunpack.c.l.b16 %v2456
      %v2553 = vunpack.c.l.b16 %v2457
      %v2554 = vunpack.c.l.b16 %v2458
      %v2555 = vunpack.c.l.b16 %v2459
      %v2556 = vunpack.c.l.b16 %v2460
      %v2557 = vunpack.c.l.b16 %v2461
      %v2558 = vunpack.c.l.b16 %v2462
      %v2559 = vunpack.c.l.b16 %v2463
      %v2560 = vunpack.c.l.b16 %v2464
      %v2561 = vunpack.c.l.b16 %v2465
      %v2562 = vunpack.c.l.b16 %v2466
      %v2563 = vunpack.c.l.b16 %v2467
      %v2564 = vunpack.c.l.b16 %v2468
      %v2565 = vunpack.c.l.b16 %v2469
      %v2566 = vunpack.c.l.b16 %v2470
      %v2567 = vunpack.c.l.b16 %v2471
      %v2568 = vunpack.c.l.b16 %v2472
      %v2569 = vunpack.c.l.b16 %v2473
      %v2570 = vunpack.c.l.b16 %v2474
      %v2571 = vunpack.c.l.b16 %v2475
      %v2572 = vunpack.c.l.b16 %v2476
      %v2573 = vunpack.c.l.b16 %v2477
      %v2574 = vunpack.c.l.b16 %v2478
      %v2575 = vunpack.c.l.b16 %v2479
      %v2576 = vunpack.c.l.b16 %v2480
      %v2577 = vunpack.c.l.b16 %v2481
      %v2578 = vunpack.c.l.b16 %v2482
      %v2579 = vunpack.c.l.b16 %v2483
      %v2580 = vunpack.c.l.b16 %v2484
      %v2581 = vunpack.c.l.b16 %v2485
      %v2582 = vunpack.c.l.b16 %v2486
      %v2583 = vunpack.c.l.b16 %v2487
      %v2584 = vunpack.c.l.b16 %v2488
      %v2585 = vunpack.c.l.b16 %v2489
      %v2586 = vunpack.c.l.b16 %v2490
      %v2587 = vunpack.c.l.b16 %v2491
      %v2588 = vunpack.c.l.b16 %v2492
      %v2589 = vunpack.c.l.b16 %v2493
      %v2590 = vunpack.c.l.b16 %v2494
      %v2591 = vunpack.c.l.b16 %v2495
      %v2592 = vpack.c.b16 %v2545, %v2544
      %v2593 = vpack.c.b16 %v2546, %v2546
      %v2594 = vpack.c.b16 %v2548, %v2547
      %v2595 = vpack.c.b16 %v2549, %v2549
      %v2596 = vpack.c.b16 %v2551, %v2550
      %v2597 = vpack.c.b16 %v2552, %v2552
      %v2598 = vpack.c.b16 %v2554, %v2553
      %v2599 = vpack.c.b16 %v2555, %v2555
      %v2600 = vpack.c.b16 %v2557, %v2556
      %v2601 = vpack.c.b16 %v2558, %v2558
      %v2602 = vpack.c.b16 %v2560, %v2559
      %v2603 = vpack.c.b16 %v2561, %v2561
      %v2604 = vpack.c.b16 %v2563, %v2562
      %v2605 = vpack.c.b16 %v2564, %v2564
      %v2606 = vpack.c.b16 %v2566, %v2565
      %v2607 = vpack.c.b16 %v2567, %v2567
      %v2608 = vpack.c.b16 %v2569, %v2568
      %v2609 = vpack.c.b16 %v2570, %v2570
      %v2610 = vpack.c.b16 %v2572, %v2571
      %v2611 = vpack.c.b16 %v2573, %v2573
      %v2612 = vpack.c.b16 %v2575, %v2574
      %v2613 = vpack.c.b16 %v2576, %v2576
      %v2614 = vpack.c.b16 %v2578, %v2577
      %v2615 = vpack.c.b16 %v2579, %v2579
      %v2616 = vpack.c.b16 %v2581, %v2580
      %v2617 = vpack.c.b16 %v2582, %v2582
      %v2618 = vpack.c.b16 %v2584, %v2583
      %v2619 = vpack.c.b16 %v2585, %v2585
      %v2620 = vpack.c.b16 %v2587, %v2586
      %v2621 = vpack.c.b16 %v2588, %v2588
      %v2622 = vpack.c.b16 %v2590, %v2589
      %v2623 = vpack.c.b16 %v2591, %v2591
      %v2625 = vshrl.u32 %v2592, 16
      %v2627 = vshll.u32 %v2592, 16
      %v2629 = vrot.slane %v2627, 1
      %v2630 = vor.u32 %v2625, %v2629
      %v2632 = vshll.u32 %v2593, 16
      %v2634 = vrot.slane %v2632, 1
      %v2635 = vsel %vm857, %v2630, %v2634
      %v2637 = vshrl.u32 %v2594, 16
      %v2639 = vshll.u32 %v2594, 16
      %v2641 = vrot.slane %v2639, 1
      %v2642 = vor.u32 %v2637, %v2641
      %v2644 = vshll.u32 %v2595, 16
      %v2646 = vrot.slane %v2644, 1
      %v2647 = vsel %vm857, %v2642, %v2646
      %v2649 = vshrl.u32 %v2596, 16
      %v2651 = vshll.u32 %v2596, 16
      %v2653 = vrot.slane %v2651, 1
      %v2654 = vor.u32 %v2649, %v2653
      %v2656 = vshll.u32 %v2597, 16
      %v2658 = vrot.slane %v2656, 1
      %v2659 = vsel %vm857, %v2654, %v2658
      %v2661 = vshrl.u32 %v2598, 16
      %v2663 = vshll.u32 %v2598, 16
      %v2665 = vrot.slane %v2663, 1
      %v2666 = vor.u32 %v2661, %v2665
      %v2668 = vshll.u32 %v2599, 16
      %v2670 = vrot.slane %v2668, 1
      %v2671 = vsel %vm857, %v2666, %v2670
      %v2673 = vshrl.u32 %v2600, 16
      %v2675 = vshll.u32 %v2600, 16
      %v2677 = vrot.slane %v2675, 1
      %v2678 = vor.u32 %v2673, %v2677
      %v2680 = vshll.u32 %v2601, 16
      %v2682 = vrot.slane %v2680, 1
      %v2683 = vsel %vm857, %v2678, %v2682
      %v2685 = vshrl.u32 %v2602, 16
      %v2687 = vshll.u32 %v2602, 16
      %v2689 = vrot.slane %v2687, 1
      %v2690 = vor.u32 %v2685, %v2689
      %v2692 = vshll.u32 %v2603, 16
      %v2694 = vrot.slane %v2692, 1
      %v2695 = vsel %vm857, %v2690, %v2694
      %v2697 = vshrl.u32 %v2604, 16
      %v2699 = vshll.u32 %v2604, 16
      %v2701 = vrot.slane %v2699, 1
      %v2702 = vor.u32 %v2697, %v2701
      %v2704 = vshll.u32 %v2605, 16
      %v2706 = vrot.slane %v2704, 1
      %v2707 = vsel %vm857, %v2702, %v2706
      %v2709 = vshrl.u32 %v2606, 16
      %v2711 = vshll.u32 %v2606, 16
      %v2713 = vrot.slane %v2711, 1
      %v2714 = vor.u32 %v2709, %v2713
      %v2716 = vshll.u32 %v2607, 16
      %v2718 = vrot.slane %v2716, 1
      %v2719 = vsel %vm857, %v2714, %v2718
      %v2721 = vshrl.u32 %v2608, 16
      %v2723 = vshll.u32 %v2608, 16
      %v2725 = vrot.slane %v2723, 1
      %v2726 = vor.u32 %v2721, %v2725
      %v2728 = vshll.u32 %v2609, 16
      %v2730 = vrot.slane %v2728, 1
      %v2731 = vsel %vm857, %v2726, %v2730
      %v2733 = vshrl.u32 %v2610, 16
      %v2735 = vshll.u32 %v2610, 16
      %v2737 = vrot.slane %v2735, 1
      %v2738 = vor.u32 %v2733, %v2737
      %v2740 = vshll.u32 %v2611, 16
      %v2742 = vrot.slane %v2740, 1
      %v2743 = vsel %vm857, %v2738, %v2742
      %v2745 = vshrl.u32 %v2612, 16
      %v2747 = vshll.u32 %v2612, 16
      %v2749 = vrot.slane %v2747, 1
      %v2750 = vor.u32 %v2745, %v2749
      %v2752 = vshll.u32 %v2613, 16
      %v2754 = vrot.slane %v2752, 1
      %v2755 = vsel %vm857, %v2750, %v2754
      %v2757 = vshrl.u32 %v2614, 16
      %v2759 = vshll.u32 %v2614, 16
      %v2761 = vrot.slane %v2759, 1
      %v2762 = vor.u32 %v2757, %v2761
      %v2764 = vshll.u32 %v2615, 16
      %v2766 = vrot.slane %v2764, 1
      %v2767 = vsel %vm857, %v2762, %v2766
      %v2769 = vshrl.u32 %v2616, 16
      %v2771 = vshll.u32 %v2616, 16
      %v2773 = vrot.slane %v2771, 1
      %v2774 = vor.u32 %v2769, %v2773
      %v2776 = vshll.u32 %v2617, 16
      %v2778 = vrot.slane %v2776, 1
      %v2779 = vsel %vm857, %v2774, %v2778
      %v2781 = vshrl.u32 %v2618, 16
      %v2783 = vshll.u32 %v2618, 16
      %v2785 = vrot.slane %v2783, 1
      %v2786 = vor.u32 %v2781, %v2785
      %v2788 = vshll.u32 %v2619, 16
      %v2790 = vrot.slane %v2788, 1
      %v2791 = vsel %vm857, %v2786, %v2790
      %v2793 = vshrl.u32 %v2620, 16
      %v2795 = vshll.u32 %v2620, 16
      %v2797 = vrot.slane %v2795, 1
      %v2798 = vor.u32 %v2793, %v2797
      %v2800 = vshll.u32 %v2621, 16
      %v2802 = vrot.slane %v2800, 1
      %v2803 = vsel %vm857, %v2798, %v2802
      %v2805 = vshrl.u32 %v2622, 16
      %v2807 = vshll.u32 %v2622, 16
      %v2809 = vrot.slane %v2807, 1
      %v2810 = vor.u32 %v2805, %v2809
      %v2812 = vshll.u32 %v2623, 16
      %v2814 = vrot.slane %v2812, 1
      %v2815 = vsel %vm857, %v2810, %v2814
      %2816 = vrot.lane.b32.xlu0 %v2635, 96
      %v2817 = vpop.permute.xlu0 %2816
      %2818 = vrot.lane.b32.xlu0 %v2647, 96
      %v2819 = vpop.permute.xlu0 %2818
      %2820 = vrot.lane.b32.xlu0 %v2659, 96
      %v2821 = vpop.permute.xlu0 %2820
      %2822 = vrot.lane.b32.xlu0 %v2671, 96
      %v2823 = vpop.permute.xlu0 %2822
      %2824 = vrot.lane.b32.xlu0 %v2683, 96
      %v2825 = vpop.permute.xlu0 %2824
      %2826 = vrot.lane.b32.xlu0 %v2695, 96
      %v2827 = vpop.permute.xlu0 %2826
      %2828 = vrot.lane.b32.xlu0 %v2707, 96
      %v2829 = vpop.permute.xlu0 %2828
      %2830 = vrot.lane.b32.xlu0 %v2719, 96
      %v2831 = vpop.permute.xlu0 %2830
      %2832 = vrot.lane.b32.xlu0 %v2731, 96
      %v2833 = vpop.permute.xlu0 %2832
      %2834 = vrot.lane.b32.xlu0 %v2743, 96
      %v2835 = vpop.permute.xlu0 %2834
      %2836 = vrot.lane.b32.xlu0 %v2755, 96
      %v2837 = vpop.permute.xlu0 %2836
      %2838 = vrot.lane.b32.xlu0 %v2767, 96
      %v2839 = vpop.permute.xlu0 %2838
      %2840 = vrot.lane.b32.xlu0 %v2779, 96
      %v2841 = vpop.permute.xlu0 %2840
      %2842 = vrot.lane.b32.xlu0 %v2791, 96
      %v2843 = vpop.permute.xlu0 %2842
      %2844 = vrot.lane.b32.xlu0 %v2803, 96
      %v2845 = vpop.permute.xlu0 %2844
      %2846 = vrot.lane.b32.xlu0 %v2815, 96
      %v2847 = vpop.permute.xlu0 %2846
      %2864 = vst.msk [vmem:[#allocation3 + $0x8] sm:$0xff] %vm1566, %v2817
      %2865 = vst.msk [vmem:[#allocation3 + $0x20] sm:$0xff] %vm1566, %v2819
      %2866 = vst.msk [vmem:[#allocation3 + $0x38] sm:$0xff] %vm1566, %v2821
      %2867 = vst.msk [vmem:[#allocation3 + $0x50] sm:$0xff] %vm1566, %v2823
      %2868 = vst.msk [vmem:[#allocation3 + $0x68] sm:$0xff] %vm1566, %v2825
      %2869 = vst.msk [vmem:[#allocation3 + $0x80] sm:$0xff] %vm1566, %v2827
      %2870 = vst.msk [vmem:[#allocation3 + $0x98] sm:$0xff] %vm1566, %v2829
      %2871 = vst.msk [vmem:[#allocation3 + $0xb0] sm:$0xff] %vm1566, %v2831
      %2872 = vst.msk [vmem:[#allocation3 + $0xc8] sm:$0xff] %vm1566, %v2833
      %2873 = vst.msk [vmem:[#allocation3 + $0xe0] sm:$0xff] %vm1566, %v2835
      %2874 = vst.msk [vmem:[#allocation3 + $0xf8] sm:$0xff] %vm1566, %v2837
      %2875 = vst.msk [vmem:[#allocation3 + $0x110] sm:$0xff] %vm1566, %v2839
      %2876 = vst.msk [vmem:[#allocation3 + $0x128] sm:$0xff] %vm1566, %v2841
      %2877 = vst.msk [vmem:[#allocation3 + $0x140] sm:$0xff] %vm1566, %v2843
      %2878 = vst.msk [vmem:[#allocation3 + $0x158] sm:$0xff] %vm1566, %v2845
      %2879 = vst.msk [vmem:[#allocation3 + $0x170] sm:$0xff] %vm1566, %v2847
      %v2880 = vld [vmem:[%s2271] sm:$0xe]
      %v2881 = vld [vmem:[%s2271 + $0x4] sm:$0xf]
      %v2882 = vld [vmem:[%s2271 + $0x8] sm:$0x1]
      %v2883 = vld [vmem:[%s2271 + $0xc] sm:$0xe]
      %v2884 = vld [vmem:[%s2271 + $0x10] sm:$0xf]
      %v2885 = vld [vmem:[%s2271 + $0x14] sm:$0x1]
      %v2886 = vld [vmem:[%s2271 + $0x18] sm:$0xe]
      %v2887 = vld [vmem:[%s2271 + $0x1c] sm:$0xf]
      %v2888 = vld [vmem:[%s2271 + $0x20] sm:$0x1]
      %v2889 = vld [vmem:[%s2271 + $0x24] sm:$0xe]
      %v2890 = vld [vmem:[%s2271 + $0x28] sm:$0xf]
      %v2891 = vld [vmem:[%s2271 + $0x2c] sm:$0x1]
      %v2892 = vld [vmem:[%s2271 + $0x30] sm:$0xe]
      %v2893 = vld [vmem:[%s2271 + $0x34] sm:$0xf]
      %v2894 = vld [vmem:[%s2271 + $0x38] sm:$0x1]
      %v2895 = vld [vmem:[%s2271 + $0x3c] sm:$0xe]
      %v2896 = vld [vmem:[%s2271 + $0x40] sm:$0xf]
      %v2897 = vld [vmem:[%s2271 + $0x44] sm:$0x1]
      %v2898 = vld [vmem:[%s2271 + $0x48] sm:$0xe]
      %v2899 = vld [vmem:[%s2271 + $0x4c] sm:$0xf]
      %v2900 = vld [vmem:[%s2271 + $0x50] sm:$0x1]
      %v2901 = vld [vmem:[%s2271 + $0x54] sm:$0xe]
      %v2902 = vld [vmem:[%s2271 + $0x58] sm:$0xf]
      %v2903 = vld [vmem:[%s2271 + $0x5c] sm:$0x1]
      %v2904 = vld [vmem:[%s2271 + $0x60] sm:$0xe]
      %v2905 = vld [vmem:[%s2271 + $0x64] sm:$0xf]
      %v2906 = vld [vmem:[%s2271 + $0x68] sm:$0x1]
      %v2907 = vld [vmem:[%s2271 + $0x6c] sm:$0xe]
      %v2908 = vld [vmem:[%s2271 + $0x70] sm:$0xf]
      %v2909 = vld [vmem:[%s2271 + $0x74] sm:$0x1]
      %v2910 = vld [vmem:[%s2271 + $0x78] sm:$0xe]
      %v2911 = vld [vmem:[%s2271 + $0x7c] sm:$0xf]
      %v2912 = vld [vmem:[%s2271 + $0x80] sm:$0x1]
      %v2913 = vld [vmem:[%s2271 + $0x84] sm:$0xe]
      %v2914 = vld [vmem:[%s2271 + $0x88] sm:$0xf]
      %v2915 = vld [vmem:[%s2271 + $0x8c] sm:$0x1]
      %v2916 = vld [vmem:[%s2271 + $0x90] sm:$0xe]
      %v2917 = vld [vmem:[%s2271 + $0x94] sm:$0xf]
      %v2918 = vld [vmem:[%s2271 + $0x98] sm:$0x1]
      %v2919 = vld [vmem:[%s2271 + $0x9c] sm:$0xe]
      %v2920 = vld [vmem:[%s2271 + $0xa0] sm:$0xf]
      %v2921 = vld [vmem:[%s2271 + $0xa4] sm:$0x1]
      %v2922 = vld [vmem:[%s2271 + $0xa8] sm:$0xe]
      %v2923 = vld [vmem:[%s2271 + $0xac] sm:$0xf]
      %v2924 = vld [vmem:[%s2271 + $0xb0] sm:$0x1]
      %v2925 = vld [vmem:[%s2271 + $0xb4] sm:$0xe]
      %v2926 = vld [vmem:[%s2271 + $0xb8] sm:$0xf]
      %v2927 = vld [vmem:[%s2271 + $0xbc] sm:$0x1]
      %v2976 = vunpack.c.l.b16 %v2880
      %v2977 = vunpack.c.l.b16 %v2881
      %v2978 = vunpack.c.l.b16 %v2882
      %v2979 = vunpack.c.l.b16 %v2883
      %v2980 = vunpack.c.l.b16 %v2884
      %v2981 = vunpack.c.l.b16 %v2885
      %v2982 = vunpack.c.l.b16 %v2886
      %v2983 = vunpack.c.l.b16 %v2887
      %v2984 = vunpack.c.l.b16 %v2888
      %v2985 = vunpack.c.l.b16 %v2889
      %v2986 = vunpack.c.l.b16 %v2890
      %v2987 = vunpack.c.l.b16 %v2891
      %v2988 = vunpack.c.l.b16 %v2892
      %v2989 = vunpack.c.l.b16 %v2893
      %v2990 = vunpack.c.l.b16 %v2894
      %v2991 = vunpack.c.l.b16 %v2895
      %v2992 = vunpack.c.l.b16 %v2896
      %v2993 = vunpack.c.l.b16 %v2897
      %v2994 = vunpack.c.l.b16 %v2898
      %v2995 = vunpack.c.l.b16 %v2899
      %v2996 = vunpack.c.l.b16 %v2900
      %v2997 = vunpack.c.l.b16 %v2901
      %v2998 = vunpack.c.l.b16 %v2902
      %v2999 = vunpack.c.l.b16 %v2903
      %v3000 = vunpack.c.l.b16 %v2904
      %v3001 = vunpack.c.l.b16 %v2905
      %v3002 = vunpack.c.l.b16 %v2906
      %v3003 = vunpack.c.l.b16 %v2907
      %v3004 = vunpack.c.l.b16 %v2908
      %v3005 = vunpack.c.l.b16 %v2909
      %v3006 = vunpack.c.l.b16 %v2910
      %v3007 = vunpack.c.l.b16 %v2911
      %v3008 = vunpack.c.l.b16 %v2912
      %v3009 = vunpack.c.l.b16 %v2913
      %v3010 = vunpack.c.l.b16 %v2914
      %v3011 = vunpack.c.l.b16 %v2915
      %v3012 = vunpack.c.l.b16 %v2916
      %v3013 = vunpack.c.l.b16 %v2917
      %v3014 = vunpack.c.l.b16 %v2918
      %v3015 = vunpack.c.l.b16 %v2919
      %v3016 = vunpack.c.l.b16 %v2920
      %v3017 = vunpack.c.l.b16 %v2921
      %v3018 = vunpack.c.l.b16 %v2922
      %v3019 = vunpack.c.l.b16 %v2923
      %v3020 = vunpack.c.l.b16 %v2924
      %v3021 = vunpack.c.l.b16 %v2925
      %v3022 = vunpack.c.l.b16 %v2926
      %v3023 = vunpack.c.l.b16 %v2927
      %v3024 = vpack.c.b16 %v2977, %v2976
      %v3025 = vpack.c.b16 %v2978, %v2978
      %v3026 = vpack.c.b16 %v2980, %v2979
      %v3027 = vpack.c.b16 %v2981, %v2981
      %v3028 = vpack.c.b16 %v2983, %v2982
      %v3029 = vpack.c.b16 %v2984, %v2984
      %v3030 = vpack.c.b16 %v2986, %v2985
      %v3031 = vpack.c.b16 %v2987, %v2987
      %v3032 = vpack.c.b16 %v2989, %v2988
      %v3033 = vpack.c.b16 %v2990, %v2990
      %v3034 = vpack.c.b16 %v2992, %v2991
      %v3035 = vpack.c.b16 %v2993, %v2993
      %v3036 = vpack.c.b16 %v2995, %v2994
      %v3037 = vpack.c.b16 %v2996, %v2996
      %v3038 = vpack.c.b16 %v2998, %v2997
      %v3039 = vpack.c.b16 %v2999, %v2999
      %v3040 = vpack.c.b16 %v3001, %v3000
      %v3041 = vpack.c.b16 %v3002, %v3002
      %v3042 = vpack.c.b16 %v3004, %v3003
      %v3043 = vpack.c.b16 %v3005, %v3005
      %v3044 = vpack.c.b16 %v3007, %v3006
      %v3045 = vpack.c.b16 %v3008, %v3008
      %v3046 = vpack.c.b16 %v3010, %v3009
      %v3047 = vpack.c.b16 %v3011, %v3011
      %v3048 = vpack.c.b16 %v3013, %v3012
      %v3049 = vpack.c.b16 %v3014, %v3014
      %v3050 = vpack.c.b16 %v3016, %v3015
      %v3051 = vpack.c.b16 %v3017, %v3017
      %v3052 = vpack.c.b16 %v3019, %v3018
      %v3053 = vpack.c.b16 %v3020, %v3020
      %v3054 = vpack.c.b16 %v3022, %v3021
      %v3055 = vpack.c.b16 %v3023, %v3023
      %v3056 = vrot.slane %v3024, 1
      %v3057 = vrot.slane %v3025, 1
      %v3058 = vsel %vm1291, %v3056, %v3057
      %v3059 = vrot.slane %v3026, 1
      %v3060 = vrot.slane %v3027, 1
      %v3061 = vsel %vm1291, %v3059, %v3060
      %v3062 = vrot.slane %v3028, 1
      %v3063 = vrot.slane %v3029, 1
      %v3064 = vsel %vm1291, %v3062, %v3063
      %v3065 = vrot.slane %v3030, 1
      %v3066 = vrot.slane %v3031, 1
      %v3067 = vsel %vm1291, %v3065, %v3066
      %v3068 = vrot.slane %v3032, 1
      %v3069 = vrot.slane %v3033, 1
      %v3070 = vsel %vm1291, %v3068, %v3069
      %v3071 = vrot.slane %v3034, 1
      %v3072 = vrot.slane %v3035, 1
      %v3073 = vsel %vm1291, %v3071, %v3072
      %v3074 = vrot.slane %v3036, 1
      %v3075 = vrot.slane %v3037, 1
      %v3076 = vsel %vm1291, %v3074, %v3075
      %v3077 = vrot.slane %v3038, 1
      %v3078 = vrot.slane %v3039, 1
      %v3079 = vsel %vm1291, %v3077, %v3078
      %v3080 = vrot.slane %v3040, 1
      %v3081 = vrot.slane %v3041, 1
      %v3082 = vsel %vm1291, %v3080, %v3081
      %v3083 = vrot.slane %v3042, 1
      %v3084 = vrot.slane %v3043, 1
      %v3085 = vsel %vm1291, %v3083, %v3084
      %v3086 = vrot.slane %v3044, 1
      %v3087 = vrot.slane %v3045, 1
      %v3088 = vsel %vm1291, %v3086, %v3087
      %v3089 = vrot.slane %v3046, 1
      %v3090 = vrot.slane %v3047, 1
      %v3091 = vsel %vm1291, %v3089, %v3090
      %v3092 = vrot.slane %v3048, 1
      %v3093 = vrot.slane %v3049, 1
      %v3094 = vsel %vm1291, %v3092, %v3093
      %v3095 = vrot.slane %v3050, 1
      %v3096 = vrot.slane %v3051, 1
      %v3097 = vsel %vm1291, %v3095, %v3096
      %v3098 = vrot.slane %v3052, 1
      %v3099 = vrot.slane %v3053, 1
      %v3100 = vsel %vm1291, %v3098, %v3099
      %v3101 = vrot.slane %v3054, 1
      %v3102 = vrot.slane %v3055, 1
      %v3103 = vsel %vm1291, %v3101, %v3102
      %3120 = vst.msk [vmem:[#allocation3 + $0x10] sm:$0xff] %vm664, %v3058
      %3121 = vst.msk [vmem:[#allocation3 + $0x28] sm:$0xff] %vm664, %v3061
      %3122 = vst.msk [vmem:[#allocation3 + $0x40] sm:$0xff] %vm664, %v3064
      %3123 = vst.msk [vmem:[#allocation3 + $0x58] sm:$0xff] %vm664, %v3067
      %3124 = vst.msk [vmem:[#allocation3 + $0x70] sm:$0xff] %vm664, %v3070
      %3125 = vst.msk [vmem:[#allocation3 + $0x88] sm:$0xff] %vm664, %v3073
      %3126 = vst.msk [vmem:[#allocation3 + $0xa0] sm:$0xff] %vm664, %v3076
      %3127 = vst.msk [vmem:[#allocation3 + $0xb8] sm:$0xff] %vm664, %v3079
      %3128 = vst.msk [vmem:[#allocation3 + $0xd0] sm:$0xff] %vm664, %v3082
      %3129 = vst.msk [vmem:[#allocation3 + $0xe8] sm:$0xff] %vm664, %v3085
      %3130 = vst.msk [vmem:[#allocation3 + $0x100] sm:$0xff] %vm664, %v3088
      %3131 = vst.msk [vmem:[#allocation3 + $0x118] sm:$0xff] %vm664, %v3091
      %3132 = vst.msk [vmem:[#allocation3 + $0x130] sm:$0xff] %vm664, %v3094
      %3133 = vst.msk [vmem:[#allocation3 + $0x148] sm:$0xff] %vm664, %v3097
      %3134 = vst.msk [vmem:[#allocation3 + $0x160] sm:$0xff] %vm664, %v3100
      %3135 = vst.msk [vmem:[#allocation3 + $0x178] sm:$0xff] %vm664, %v3103
      %v3136 = vld [vmem:[#allocation3] sm:$0xff]
      %v3137 = vld [vmem:[#allocation3 + $0x8] sm:$0xff]
      %v3138 = vld [vmem:[#allocation3 + $0x10] sm:$0xff]
      %v3139 = vld [vmem:[#allocation3 + $0x18] sm:$0xff]
      %v3140 = vld [vmem:[#allocation3 + $0x20] sm:$0xff]
      %v3141 = vld [vmem:[#allocation3 + $0x28] sm:$0xff]
      %v3142 = vld [vmem:[#allocation3 + $0x30] sm:$0xff]
      %v3143 = vld [vmem:[#allocation3 + $0x38] sm:$0xff]
      %v3144 = vld [vmem:[#allocation3 + $0x40] sm:$0xff]
      %v3145 = vld [vmem:[#allocation3 + $0x48] sm:$0xff]
      %v3146 = vld [vmem:[#allocation3 + $0x50] sm:$0xff]
      %v3147 = vld [vmem:[#allocation3 + $0x58] sm:$0xff]
      %v3148 = vld [vmem:[#allocation3 + $0x60] sm:$0xff]
      %v3149 = vld [vmem:[#allocation3 + $0x68] sm:$0xff]
      %v3150 = vld [vmem:[#allocation3 + $0x70] sm:$0xff]
      %v3151 = vld [vmem:[#allocation3 + $0x78] sm:$0xff]
      %v3152 = vld [vmem:[#allocation3 + $0x80] sm:$0xff]
      %v3153 = vld [vmem:[#allocation3 + $0x88] sm:$0xff]
      %v3154 = vld [vmem:[#allocation3 + $0x90] sm:$0xff]
      %v3155 = vld [vmem:[#allocation3 + $0x98] sm:$0xff]
      %v3156 = vld [vmem:[#allocation3 + $0xa0] sm:$0xff]
      %v3157 = vld [vmem:[#allocation3 + $0xa8] sm:$0xff]
      %v3158 = vld [vmem:[#allocation3 + $0xb0] sm:$0xff]
      %v3159 = vld [vmem:[#allocation3 + $0xb8] sm:$0xff]
      %v3160 = vld [vmem:[#allocation3 + $0xc0] sm:$0xff]
      %v3161 = vld [vmem:[#allocation3 + $0xc8] sm:$0xff]
      %v3162 = vld [vmem:[#allocation3 + $0xd0] sm:$0xff]
      %v3163 = vld [vmem:[#allocation3 + $0xd8] sm:$0xff]
      %v3164 = vld [vmem:[#allocation3 + $0xe0] sm:$0xff]
      %v3165 = vld [vmem:[#allocation3 + $0xe8] sm:$0xff]
      %v3166 = vld [vmem:[#allocation3 + $0xf0] sm:$0xff]
      %v3167 = vld [vmem:[#allocation3 + $0xf8] sm:$0xff]
      %v3168 = vld [vmem:[#allocation3 + $0x100] sm:$0xff]
      %v3169 = vld [vmem:[#allocation3 + $0x108] sm:$0xff]
      %v3170 = vld [vmem:[#allocation3 + $0x110] sm:$0xff]
      %v3171 = vld [vmem:[#allocation3 + $0x118] sm:$0xff]
      %v3172 = vld [vmem:[#allocation3 + $0x120] sm:$0xff]
      %v3173 = vld [vmem:[#allocation3 + $0x128] sm:$0xff]
      %v3174 = vld [vmem:[#allocation3 + $0x130] sm:$0xff]
      %v3175 = vld [vmem:[#allocation3 + $0x138] sm:$0xff]
      %v3176 = vld [vmem:[#allocation3 + $0x140] sm:$0xff]
      %v3177 = vld [vmem:[#allocation3 + $0x148] sm:$0xff]
      %v3178 = vld [vmem:[#allocation3 + $0x150] sm:$0xff]
      %v3179 = vld [vmem:[#allocation3 + $0x158] sm:$0xff]
      %v3180 = vld [vmem:[#allocation3 + $0x160] sm:$0xff]
      %v3181 = vld [vmem:[#allocation3 + $0x168] sm:$0xff]
      %v3182 = vld [vmem:[#allocation3 + $0x170] sm:$0xff]
      %v3183 = vld [vmem:[#allocation3 + $0x178] sm:$0xff]
      %v3184 = vld [vmem:[%s3] sm:$0xf]
      %v3185 = vld [vmem:[%s3 + $0x4] sm:$0xf]
      %v3186 = vld [vmem:[%s3 + $0x8] sm:$0xf]
      %v3187 = vld [vmem:[%s3 + $0xc] sm:$0xf]
      %v3188 = vld [vmem:[%s3 + $0x10] sm:$0xf]
      %v3189 = vld [vmem:[%s3 + $0x14] sm:$0xf]
      %v3190 = vld [vmem:[%s3 + $0x18] sm:$0xf]
      %v3191 = vld [vmem:[%s3 + $0x1c] sm:$0xf]
      %v3192 = vld [vmem:[%s3 + $0x20] sm:$0xf]
      %v3193 = vld [vmem:[%s3 + $0x24] sm:$0xf]
      %v3194 = vld [vmem:[%s3 + $0x28] sm:$0xf]
      %v3195 = vld [vmem:[%s3 + $0x2c] sm:$0xf]
      %v3196 = vld [vmem:[%s3 + $0x30] sm:$0xf]
      %v3197 = vld [vmem:[%s3 + $0x34] sm:$0xf]
      %v3198 = vld [vmem:[%s3 + $0x38] sm:$0xf]
      %v3199 = vld [vmem:[%s3 + $0x3c] sm:$0xf]
      %v3200 = vld [vmem:[%s3 + $0x40] sm:$0xf]
      %v3201 = vld [vmem:[%s3 + $0x44] sm:$0xf]
      %v3202 = vld [vmem:[%s3 + $0x48] sm:$0xf]
      %v3203 = vld [vmem:[%s3 + $0x4c] sm:$0xf]
      %v3204 = vld [vmem:[%s3 + $0x50] sm:$0xf]
      %v3205 = vld [vmem:[%s3 + $0x54] sm:$0xf]
      %v3206 = vld [vmem:[%s3 + $0x58] sm:$0xf]
      %v3207 = vld [vmem:[%s3 + $0x5c] sm:$0xf]
      %v3208 = vld [vmem:[%s3 + $0x60] sm:$0xf]
      %v3209 = vld [vmem:[%s3 + $0x64] sm:$0xf]
      %v3210 = vld [vmem:[%s3 + $0x68] sm:$0xf]
      %v3211 = vld [vmem:[%s3 + $0x6c] sm:$0xf]
      %v3212 = vld [vmem:[%s3 + $0x70] sm:$0xf]
      %v3213 = vld [vmem:[%s3 + $0x74] sm:$0xf]
      %v3214 = vld [vmem:[%s3 + $0x78] sm:$0xf]
      %v3215 = vld [vmem:[%s3 + $0x7c] sm:$0xf]
      %v3216 = vld [vmem:[%s3 + $0x80] sm:$0xf]
      %v3217 = vld [vmem:[%s3 + $0x84] sm:$0xf]
      %v3218 = vld [vmem:[%s3 + $0x88] sm:$0xf]
      %v3219 = vld [vmem:[%s3 + $0x8c] sm:$0xf]
      %v3220 = vld [vmem:[%s4] sm:$0x1]
      %v3222 = vlaneseq
      %v3223 = vshrl.u32 %v3222, 7
      %v3224 = vsub.s32 0, %v3223
      %v3225 = vrot.slane %v3220, %v3224
      %v3263 = vunpack.c.l.b16 %v3184
      %v3264 = vunpack.c.l.b16 %v3185
      %v3265 = vunpack.c.l.b16 %v3186
      %v3266 = vunpack.c.l.b16 %v3187
      %v3267 = vunpack.c.l.b16 %v3188
      %v3268 = vunpack.c.l.b16 %v3189
      %v3269 = vunpack.c.l.b16 %v3190
      %v3270 = vunpack.c.l.b16 %v3191
      %v3271 = vunpack.c.l.b16 %v3192
      %v3272 = vunpack.c.l.b16 %v3193
      %v3273 = vunpack.c.l.b16 %v3194
      %v3274 = vunpack.c.l.b16 %v3195
      %v3275 = vunpack.c.l.b16 %v3196
      %v3276 = vunpack.c.l.b16 %v3197
      %v3277 = vunpack.c.l.b16 %v3198
      %v3278 = vunpack.c.l.b16 %v3199
      %v3279 = vunpack.c.l.b16 %v3200
      %v3280 = vunpack.c.l.b16 %v3201
      %v3281 = vunpack.c.l.b16 %v3202
      %v3282 = vunpack.c.l.b16 %v3203
      %v3283 = vunpack.c.l.b16 %v3204
      %v3284 = vunpack.c.l.b16 %v3205
      %v3285 = vunpack.c.l.b16 %v3206
      %v3286 = vunpack.c.l.b16 %v3207
      %v3287 = vunpack.c.l.b16 %v3208
      %v3288 = vunpack.c.l.b16 %v3209
      %v3289 = vunpack.c.l.b16 %v3210
      %v3290 = vunpack.c.l.b16 %v3211
      %v3291 = vunpack.c.l.b16 %v3212
      %v3292 = vunpack.c.l.b16 %v3213
      %v3293 = vunpack.c.l.b16 %v3214
      %v3294 = vunpack.c.l.b16 %v3215
      %v3295 = vunpack.c.l.b16 %v3216
      %v3296 = vunpack.c.l.b16 %v3217
      %v3297 = vunpack.c.l.b16 %v3218
      %v3298 = vunpack.c.l.b16 %v3219
      %v3299 = vpack.c.b16 %v3264, %v3263
      %v3300 = vpack.c.b16 %v3266, %v3265
      %v3301 = vpack.c.b16 %v3268, %v3267
      %v3302 = vpack.c.b16 %v3270, %v3269
      %v3303 = vpack.c.b16 %v3272, %v3271
      %v3304 = vpack.c.b16 %v3274, %v3273
      %v3305 = vpack.c.b16 %v3276, %v3275
      %v3306 = vpack.c.b16 %v3278, %v3277
      %v3307 = vpack.c.b16 %v3280, %v3279
      %v3308 = vpack.c.b16 %v3282, %v3281
      %v3309 = vpack.c.b16 %v3284, %v3283
      %v3310 = vpack.c.b16 %v3286, %v3285
      %v3311 = vpack.c.b16 %v3288, %v3287
      %v3312 = vpack.c.b16 %v3290, %v3289
      %v3313 = vpack.c.b16 %v3292, %v3291
      %v3314 = vpack.c.b16 %v3294, %v3293
      %v3315 = vpack.c.b16 %v3296, %v3295
      %v3316 = vpack.c.b16 %v3298, %v3297
      %v3336 = vsel %vm664, %v3138, 0
      %v3339 = vsel %vm664, %v3141, 0
      %v3342 = vsel %vm664, %v3144, 0
      %v3345 = vsel %vm664, %v3147, 0
      %v3348 = vsel %vm664, %v3150, 0
      %v3351 = vsel %vm664, %v3153, 0
      %v3354 = vsel %vm664, %v3156, 0
      %v3357 = vsel %vm664, %v3159, 0
      %v3360 = vsel %vm664, %v3162, 0
      %v3363 = vsel %vm664, %v3165, 0
      %v3366 = vsel %vm664, %v3168, 0
      %v3369 = vsel %vm664, %v3171, 0
      %v3372 = vsel %vm664, %v3174, 0
      %v3375 = vsel %vm664, %v3177, 0
      %v3378 = vsel %vm664, %v3180, 0
      %v3381 = vsel %vm664, %v3183, 0
      %3383 = vmatprep.subr.bf16.mxu0 0
      %3384 = vmatpush1.bf16.msra.mxu0 %v3299
      %3385 = vmatprep.subr.bf16.mxu0 0
      %3386 = vmatpush1.bf16.msra.mxu0 %v3300
      %3387 = vmatprep.subr.bf16.mxu0 0
      %3388 = vmatpush1.bf16.msra.mxu0 %v3301
      %3389 = vmatprep.subr.bf16.mxu0 0
      %3390 = vmatpush1.bf16.msra.mxu0 %v3302
      %3391 = vmatprep.subr.bf16.mxu0 0
      %3392 = vmatpush1.bf16.msra.mxu0 %v3303
      %3393 = vmatprep.subr.bf16.mxu0 0
      %3394 = vmatpush1.bf16.msra.mxu0 %v3304
      %3395 = vmatprep.subr.bf16.mxu0 0
      %3396 = vmatpush1.bf16.msra.mxu0 %v3305
      %3397 = vmatprep.subr.bf16.mxu0 0
      %3398 = vmatpush1.bf16.msra.mxu0 %v3306
      %3399 = vmatprep.subr.bf16.mxu0 0
      %3400 = vmatpush1.bf16.msra.mxu0 %v3307
      %3401 = vmatprep.subr.bf16.mxu0 0
      %3402 = vmatpush1.bf16.msra.mxu0 %v3308
      %3403 = vmatprep.subr.bf16.mxu0 0
      %3404 = vmatpush1.bf16.msra.mxu0 %v3309
      %3405 = vmatprep.subr.bf16.mxu0 0
      %3406 = vmatpush1.bf16.msra.mxu0 %v3310
      %3407 = vmatprep.subr.bf16.mxu0 0
      %3408 = vmatpush1.bf16.msra.mxu0 %v3311
      %3409 = vmatprep.subr.bf16.mxu0 0
      %3410 = vmatpush1.bf16.msra.mxu0 %v3312
      %3411 = vmatprep.subr.bf16.mxu0 0
      %3412 = vmatpush1.bf16.msra.mxu0 %v3313
      %3413 = vmatprep.subr.bf16.mxu0 0
      %3414 = vmatpush1.bf16.msra.mxu0 %v3314
      %3415 = vmatprep.mubr.bf16.mxu0 %v3137
      %3416 = vmatmul.mubr.bf16.gmra.mrb[0].mxu0 %v3136
      %v3417 = vpop.f32.mrb[0].mxu0
      %v3418 = vadd.f32 %v3225, %v3417
      %v3419 = vpop.f32.mrb[0].mxu0
      %v3420 = vpop.f32.mrb[0].mxu0
      %v3421 = vadd.f32 %v3225, %v3420
      %v3422 = vpop.f32.mrb[0].mxu0
      %3423 = vmatprep.mubr.bf16.mxu0 %v3140
      %3424 = vmatmul.mubr.bf16.gmra.mrb[0].mxu0 %v3139
      %v3425 = vpop.f32.mrb[0].mxu0
      %v3426 = vadd.f32 %v3225, %v3425
      %v3427 = vpop.f32.mrb[0].mxu0
      %v3428 = vpop.f32.mrb[0].mxu0
      %v3429 = vadd.f32 %v3225, %v3428
      %v3430 = vpop.f32.mrb[0].mxu0
      %3431 = vmatprep.mubr.bf16.mxu0 %v3143
      %3432 = vmatmul.mubr.bf16.gmra.mrb[0].mxu0 %v3142
      %v3433 = vpop.f32.mrb[0].mxu0
      %v3434 = vadd.f32 %v3225, %v3433
      %v3435 = vpop.f32.mrb[0].mxu0
      %v3436 = vpop.f32.mrb[0].mxu0
      %v3437 = vadd.f32 %v3225, %v3436
      %v3438 = vpop.f32.mrb[0].mxu0
      %3439 = vmatprep.mubr.bf16.mxu0 %v3146
      %3440 = vmatmul.mubr.bf16.gmra.mrb[0].mxu0 %v3145
      %v3441 = vpop.f32.mrb[0].mxu0
      %v3442 = vadd.f32 %v3225, %v3441
      %v3443 = vpop.f32.mrb[0].mxu0
      %v3444 = vpop.f32.mrb[0].mxu0
      %v3445 = vadd.f32 %v3225, %v3444
      %v3446 = vpop.f32.mrb[0].mxu0
      %3447 = vmatprep.mubr.bf16.mxu0 %v3149
      %3448 = vmatmul.mubr.bf16.gmra.mrb[0].mxu0 %v3148
      %v3449 = vpop.f32.mrb[0].mxu0
      %v3450 = vadd.f32 %v3225, %v3449
      %v3451 = vpop.f32.mrb[0].mxu0
      %v3452 = vpop.f32.mrb[0].mxu0
      %v3453 = vadd.f32 %v3225, %v3452
      %v3454 = vpop.f32.mrb[0].mxu0
      %3455 = vmatprep.mubr.bf16.mxu0 %v3152
      %3456 = vmatmul.mubr.bf16.gmra.mrb[0].mxu0 %v3151
      %v3457 = vpop.f32.mrb[0].mxu0
      %v3458 = vadd.f32 %v3225, %v3457
      %v3459 = vpop.f32.mrb[0].mxu0
      %v3460 = vpop.f32.mrb[0].mxu0
      %v3461 = vadd.f32 %v3225, %v3460
      %v3462 = vpop.f32.mrb[0].mxu0
      %3463 = vmatprep.mubr.bf16.mxu0 %v3155
      %3464 = vmatmul.mubr.bf16.gmra.mrb[0].mxu0 %v3154
      %v3465 = vpop.f32.mrb[0].mxu0
      %v3466 = vadd.f32 %v3225, %v3465
      %v3467 = vpop.f32.mrb[0].mxu0
      %v3468 = vpop.f32.mrb[0].mxu0
      %v3469 = vadd.f32 %v3225, %v3468
      %v3470 = vpop.f32.mrb[0].mxu0
      %3471 = vmatprep.mubr.bf16.mxu0 %v3158
      %3472 = vmatmul.mubr.bf16.gmra.mrb[0].mxu0 %v3157
      %v3473 = vpop.f32.mrb[0].mxu0
      %v3474 = vadd.f32 %v3225, %v3473
      %v3475 = vpop.f32.mrb[0].mxu0
      %v3476 = vpop.f32.mrb[0].mxu0
      %v3477 = vadd.f32 %v3225, %v3476
      %v3478 = vpop.f32.mrb[0].mxu0
      %3479 = vmatprep.mubr.bf16.mxu0 %v3161
      %3480 = vmatmul.mubr.bf16.gmra.mrb[0].mxu0 %v3160
      %v3481 = vpop.f32.mrb[0].mxu0
      %v3482 = vadd.f32 %v3225, %v3481
      %v3483 = vpop.f32.mrb[0].mxu0
      %v3484 = vpop.f32.mrb[0].mxu0
      %v3485 = vadd.f32 %v3225, %v3484
      %v3486 = vpop.f32.mrb[0].mxu0
      %3487 = vmatprep.mubr.bf16.mxu0 %v3164
      %3488 = vmatmul.mubr.bf16.gmra.mrb[0].mxu0 %v3163
      %v3489 = vpop.f32.mrb[0].mxu0
      %v3490 = vadd.f32 %v3225, %v3489
      %v3491 = vpop.f32.mrb[0].mxu0
      %v3492 = vpop.f32.mrb[0].mxu0
      %v3493 = vadd.f32 %v3225, %v3492
      %v3494 = vpop.f32.mrb[0].mxu0
      %3495 = vmatprep.mubr.bf16.mxu0 %v3167
      %3496 = vmatmul.mubr.bf16.gmra.mrb[0].mxu0 %v3166
      %v3497 = vpop.f32.mrb[0].mxu0
      %v3498 = vadd.f32 %v3225, %v3497
      %v3499 = vpop.f32.mrb[0].mxu0
      %v3500 = vpop.f32.mrb[0].mxu0
      %v3501 = vadd.f32 %v3225, %v3500
      %v3502 = vpop.f32.mrb[0].mxu0
      %3503 = vmatprep.mubr.bf16.mxu0 %v3170
      %3504 = vmatmul.mubr.bf16.gmra.mrb[0].mxu0 %v3169
      %v3505 = vpop.f32.mrb[0].mxu0
      %v3506 = vadd.f32 %v3225, %v3505
      %v3507 = vpop.f32.mrb[0].mxu0
      %v3508 = vpop.f32.mrb[0].mxu0
      %v3509 = vadd.f32 %v3225, %v3508
      %v3510 = vpop.f32.mrb[0].mxu0
      %3511 = vmatprep.mubr.bf16.mxu0 %v3173
      %3512 = vmatmul.mubr.bf16.gmra.mrb[0].mxu0 %v3172
      %v3513 = vpop.f32.mrb[0].mxu0
      %v3514 = vadd.f32 %v3225, %v3513
      %v3515 = vpop.f32.mrb[0].mxu0
      %v3516 = vpop.f32.mrb[0].mxu0
      %v3517 = vadd.f32 %v3225, %v3516
      %v3518 = vpop.f32.mrb[0].mxu0
      %3519 = vmatprep.mubr.bf16.mxu0 %v3176
      %3520 = vmatmul.mubr.bf16.gmra.mrb[0].mxu0 %v3175
      %v3521 = vpop.f32.mrb[0].mxu0
      %v3522 = vadd.f32 %v3225, %v3521
      %v3523 = vpop.f32.mrb[0].mxu0
      %v3524 = vpop.f32.mrb[0].mxu0
      %v3525 = vadd.f32 %v3225, %v3524
      %v3526 = vpop.f32.mrb[0].mxu0
      %3527 = vmatprep.mubr.bf16.mxu0 %v3179
      %3528 = vmatmul.mubr.bf16.gmra.mrb[0].mxu0 %v3178
      %v3529 = vpop.f32.mrb[0].mxu0
      %v3530 = vadd.f32 %v3225, %v3529
      %v3531 = vpop.f32.mrb[0].mxu0
      %v3532 = vpop.f32.mrb[0].mxu0
      %v3533 = vadd.f32 %v3225, %v3532
      %v3534 = vpop.f32.mrb[0].mxu0
      %3535 = vmatprep.mubr.bf16.mxu0 %v3182
      %3536 = vmatmul.mubr.bf16.gmra.mrb[0].mxu0 %v3181
      %v3537 = vpop.f32.mrb[0].mxu0
      %v3538 = vadd.f32 %v3225, %v3537
      %v3539 = vpop.f32.mrb[0].mxu0
      %v3540 = vpop.f32.mrb[0].mxu0
      %v3541 = vadd.f32 %v3225, %v3540
      %v3542 = vpop.f32.mrb[0].mxu0
      %3543 = vdwg.mxu0
      %3544 = vmatprep.subr.bf16.mxu0 0
      %3545 = vmatpush1.bf16.msra.mxu0 %v3315
      %3546 = vmatprep.subr.bf16.mxu0 0
      %3547 = vmatpush1.bf16.msra.mxu0 %v3316
      %3548 = vmatprep.subr.bf16.mxu0 0
      %3549 = vmatpush1.bf16.msra.mxu0 0
      %3550 = vmatprep.subr.bf16.mxu0 0
      %3551 = vmatpush1.bf16.msra.mxu0 0
      %3552 = vmatprep.subr.bf16.mxu0 0
      %3553 = vmatpush1.bf16.msra.mxu0 0
      %3554 = vmatprep.subr.bf16.mxu0 0
      %3555 = vmatpush1.bf16.msra.mxu0 0
      %3556 = vmatprep.subr.bf16.mxu0 0
      %3557 = vmatpush1.bf16.msra.mxu0 0
      %3558 = vmatprep.subr.bf16.mxu0 0
      %3559 = vmatpush1.bf16.msra.mxu0 0
      %3560 = vmatprep.subr.bf16.mxu0 0
      %3561 = vmatpush1.bf16.msra.mxu0 0
      %3562 = vmatprep.subr.bf16.mxu0 0
      %3563 = vmatpush1.bf16.msra.mxu0 0
      %3564 = vmatprep.subr.bf16.mxu0 0
      %3565 = vmatpush1.bf16.msra.mxu0 0
      %3566 = vmatprep.subr.bf16.mxu0 0
      %3567 = vmatpush1.bf16.msra.mxu0 0
      %3568 = vmatprep.subr.bf16.mxu0 0
      %3569 = vmatpush1.bf16.msra.mxu0 0
      %3570 = vmatprep.subr.bf16.mxu0 0
      %3571 = vmatpush1.bf16.msra.mxu0 0
      %3572 = vmatprep.subr.bf16.mxu0 0
      %3573 = vmatpush1.bf16.msra.mxu0 0
      %3574 = vmatprep.subr.bf16.mxu0 0
      %3575 = vmatpush1.bf16.msra.mxu0 0
      %3576 = vmatprep.mubr.bf16.mxu0 0
      %3577 = vmatmul.mubr.bf16.gmra.mrb[0].mxu0 %v3336
      %v3578 = vpop.f32.mrb[0].mxu0
      %v3579 = vadd.f32 %v3418, %v3578
      %v3580 = vpop.f32.mrb[0].mxu0
      %v3581 = vpop.f32.mrb[0].mxu0
      %v3582 = vadd.f32 %v3421, %v3581
      %v3583 = vpop.f32.mrb[0].mxu0
      %3584 = vmatprep.mubr.bf16.mxu0 0
      %3585 = vmatmul.mubr.bf16.gmra.mrb[0].mxu0 %v3339
      %v3586 = vpop.f32.mrb[0].mxu0
      %v3587 = vadd.f32 %v3426, %v3586
      %v3588 = vpop.f32.mrb[0].mxu0
      %v3589 = vpop.f32.mrb[0].mxu0
      %v3590 = vadd.f32 %v3429, %v3589
      %v3591 = vpop.f32.mrb[0].mxu0
      %3592 = vmatprep.mubr.bf16.mxu0 0
      %3593 = vmatmul.mubr.bf16.gmra.mrb[0].mxu0 %v3342
      %v3594 = vpop.f32.mrb[0].mxu0
      %v3595 = vadd.f32 %v3434, %v3594
      %v3596 = vpop.f32.mrb[0].mxu0
      %v3597 = vpop.f32.mrb[0].mxu0
      %v3598 = vadd.f32 %v3437, %v3597
      %v3599 = vpop.f32.mrb[0].mxu0
      %3600 = vmatprep.mubr.bf16.mxu0 0
      %3601 = vmatmul.mubr.bf16.gmra.mrb[0].mxu0 %v3345
      %v3602 = vpop.f32.mrb[0].mxu0
      %v3603 = vadd.f32 %v3442, %v3602
      %v3604 = vpop.f32.mrb[0].mxu0
      %v3605 = vpop.f32.mrb[0].mxu0
      %v3606 = vadd.f32 %v3445, %v3605
      %v3607 = vpop.f32.mrb[0].mxu0
      %3608 = vmatprep.mubr.bf16.mxu0 0
      %3609 = vmatmul.mubr.bf16.gmra.mrb[0].mxu0 %v3348
      %v3610 = vpop.f32.mrb[0].mxu0
      %v3611 = vadd.f32 %v3450, %v3610
      %v3612 = vpop.f32.mrb[0].mxu0
      %v3613 = vpop.f32.mrb[0].mxu0
      %v3614 = vadd.f32 %v3453, %v3613
      %v3615 = vpop.f32.mrb[0].mxu0
      %3616 = vmatprep.mubr.bf16.mxu0 0
      %3617 = vmatmul.mubr.bf16.gmra.mrb[0].mxu0 %v3351
      %v3618 = vpop.f32.mrb[0].mxu0
      %v3619 = vadd.f32 %v3458, %v3618
      %v3620 = vpop.f32.mrb[0].mxu0
      %v3621 = vpop.f32.mrb[0].mxu0
      %v3622 = vadd.f32 %v3461, %v3621
      %v3623 = vpop.f32.mrb[0].mxu0
      %3624 = vmatprep.mubr.bf16.mxu0 0
      %3625 = vmatmul.mubr.bf16.gmra.mrb[0].mxu0 %v3354
      %v3626 = vpop.f32.mrb[0].mxu0
      %v3627 = vadd.f32 %v3466, %v3626
      %v3628 = vpop.f32.mrb[0].mxu0
      %v3629 = vpop.f32.mrb[0].mxu0
      %v3630 = vadd.f32 %v3469, %v3629
      %v3631 = vpop.f32.mrb[0].mxu0
      %3632 = vmatprep.mubr.bf16.mxu0 0
      %3633 = vmatmul.mubr.bf16.gmra.mrb[0].mxu0 %v3357
      %v3634 = vpop.f32.mrb[0].mxu0
      %v3635 = vadd.f32 %v3474, %v3634
      %v3636 = vpop.f32.mrb[0].mxu0
      %v3637 = vpop.f32.mrb[0].mxu0
      %v3638 = vadd.f32 %v3477, %v3637
      %v3639 = vpop.f32.mrb[0].mxu0
      %3640 = vmatprep.mubr.bf16.mxu0 0
      %3641 = vmatmul.mubr.bf16.gmra.mrb[0].mxu0 %v3360
      %v3642 = vpop.f32.mrb[0].mxu0
      %v3643 = vadd.f32 %v3482, %v3642
      %v3644 = vpop.f32.mrb[0].mxu0
      %v3645 = vpop.f32.mrb[0].mxu0
      %v3646 = vadd.f32 %v3485, %v3645
      %v3647 = vpop.f32.mrb[0].mxu0
      %3648 = vmatprep.mubr.bf16.mxu0 0
      %3649 = vmatmul.mubr.bf16.gmra.mrb[0].mxu0 %v3363
      %v3650 = vpop.f32.mrb[0].mxu0
      %v3651 = vadd.f32 %v3490, %v3650
      %v3652 = vpop.f32.mrb[0].mxu0
      %v3653 = vpop.f32.mrb[0].mxu0
      %v3654 = vadd.f32 %v3493, %v3653
      %v3655 = vpop.f32.mrb[0].mxu0
      %3656 = vmatprep.mubr.bf16.mxu0 0
      %3657 = vmatmul.mubr.bf16.gmra.mrb[0].mxu0 %v3366
      %v3658 = vpop.f32.mrb[0].mxu0
      %v3659 = vadd.f32 %v3498, %v3658
      %v3660 = vpop.f32.mrb[0].mxu0
      %v3661 = vpop.f32.mrb[0].mxu0
      %v3662 = vadd.f32 %v3501, %v3661
      %v3663 = vpop.f32.mrb[0].mxu0
      %3664 = vmatprep.mubr.bf16.mxu0 0
      %3665 = vmatmul.mubr.bf16.gmra.mrb[0].mxu0 %v3369
      %v3666 = vpop.f32.mrb[0].mxu0
      %v3667 = vadd.f32 %v3506, %v3666
      %v3668 = vpop.f32.mrb[0].mxu0
      %v3669 = vpop.f32.mrb[0].mxu0
      %v3670 = vadd.f32 %v3509, %v3669
      %v3671 = vpop.f32.mrb[0].mxu0
      %3672 = vmatprep.mubr.bf16.mxu0 0
      %3673 = vmatmul.mubr.bf16.gmra.mrb[0].mxu0 %v3372
      %v3674 = vpop.f32.mrb[0].mxu0
      %v3675 = vadd.f32 %v3514, %v3674
      %v3676 = vpop.f32.mrb[0].mxu0
      %v3677 = vpop.f32.mrb[0].mxu0
      %v3678 = vadd.f32 %v3517, %v3677
      %v3679 = vpop.f32.mrb[0].mxu0
      %3680 = vmatprep.mubr.bf16.mxu0 0
      %3681 = vmatmul.mubr.bf16.gmra.mrb[0].mxu0 %v3375
      %v3682 = vpop.f32.mrb[0].mxu0
      %v3683 = vadd.f32 %v3522, %v3682
      %v3684 = vpop.f32.mrb[0].mxu0
      %v3685 = vpop.f32.mrb[0].mxu0
      %v3686 = vadd.f32 %v3525, %v3685
      %v3687 = vpop.f32.mrb[0].mxu0
      %3688 = vmatprep.mubr.bf16.mxu0 0
      %3689 = vmatmul.mubr.bf16.gmra.mrb[0].mxu0 %v3378
      %v3690 = vpop.f32.mrb[0].mxu0
      %v3691 = vadd.f32 %v3530, %v3690
      %v3692 = vpop.f32.mrb[0].mxu0
      %v3693 = vpop.f32.mrb[0].mxu0
      %v3694 = vadd.f32 %v3533, %v3693
      %v3695 = vpop.f32.mrb[0].mxu0
      %3696 = vmatprep.mubr.bf16.mxu0 0
      %3697 = vmatmul.mubr.bf16.gmra.mrb[0].mxu0 %v3381
      %v3698 = vpop.f32.mrb[0].mxu0
      %v3699 = vadd.f32 %v3538, %v3698
      %v3700 = vpop.f32.mrb[0].mxu0
      %v3701 = vpop.f32.mrb[0].mxu0
      %v3702 = vadd.f32 %v3541, %v3701
      %v3703 = vpop.f32.mrb[0].mxu0
      %3704 = vdwg.mxu0
      %3705 = vxpose.xlu0.b32.start [1/16] %v3579, 128
      %3706 = vxpose.xlu0.b32.cont [2/16] %v3582, 128
      %3707 = vxpose.xlu0.b32.cont [3/16] %v3587, 128
      %3708 = vxpose.xlu0.b32.cont [4/16] %v3590, 128
      %3709 = vxpose.xlu0.b32.cont [5/16] %v3595, 128
      %3710 = vxpose.xlu0.b32.cont [6/16] %v3598, 128
      %3711 = vxpose.xlu0.b32.cont [7/16] %v3603, 128
      %3712 = vxpose.xlu0.b32.cont [8/16] %v3606, 128
      %3713 = vxpose.xlu0.b32.cont [9/16] %v3611, 128
      %3714 = vxpose.xlu0.b32.cont [10/16] %v3614, 128
      %3715 = vxpose.xlu0.b32.cont [11/16] %v3619, 128
      %3716 = vxpose.xlu0.b32.cont [12/16] %v3622, 128
      %3717 = vxpose.xlu0.b32.cont [13/16] %v3627, 128
      %3718 = vxpose.xlu0.b32.cont [14/16] %v3630, 128
      %3719 = vxpose.xlu0.b32.cont [15/16] %v3635, 128
      %3720 = vxpose.xlu0.b32.end [16/16] %v3638, 128
      %v3721 = vpop.trf.xlu0
      %v3722 = vpop.trf.xlu0
      %v3723 = vpop.trf.xlu0
      %v3724 = vpop.trf.xlu0
      %v3725 = vpop.trf.xlu0
      %v3726 = vpop.trf.xlu0
      %v3727 = vpop.trf.xlu0
      %v3728 = vpop.trf.xlu0
      %v3729 = vpop.trf.xlu0
      %v3730 = vpop.trf.xlu0
      %v3731 = vpop.trf.xlu0
      %v3732 = vpop.trf.xlu0
      %v3733 = vpop.trf.xlu0
      %v3734 = vpop.trf.xlu0
      %v3735 = vpop.trf.xlu0
      %v3736 = vpop.trf.xlu0
      %3737 = vxpose.xlu0.b32.start [1/16] %v3643, 128
      %3738 = vxpose.xlu0.b32.cont [2/16] %v3646, 128
      %3739 = vxpose.xlu0.b32.cont [3/16] %v3651, 128
      %3740 = vxpose.xlu0.b32.cont [4/16] %v3654, 128
      %3741 = vxpose.xlu0.b32.cont [5/16] %v3659, 128
      %3742 = vxpose.xlu0.b32.cont [6/16] %v3662, 128
      %3743 = vxpose.xlu0.b32.cont [7/16] %v3667, 128
      %3744 = vxpose.xlu0.b32.cont [8/16] %v3670, 128
      %3745 = vxpose.xlu0.b32.cont [9/16] %v3675, 128
      %3746 = vxpose.xlu0.b32.cont [10/16] %v3678, 128
      %3747 = vxpose.xlu0.b32.cont [11/16] %v3683, 128
      %3748 = vxpose.xlu0.b32.cont [12/16] %v3686, 128
      %3749 = vxpose.xlu0.b32.cont [13/16] %v3691, 128
      %3750 = vxpose.xlu0.b32.cont [14/16] %v3694, 128
      %3751 = vxpose.xlu0.b32.cont [15/16] %v3699, 128
      %3752 = vxpose.xlu0.b32.end [16/16] %v3702, 128
      %v3753 = vpop.trf.xlu0
      %v3754 = vpop.trf.xlu0
      %v3755 = vpop.trf.xlu0
      %v3756 = vpop.trf.xlu0
      %v3757 = vpop.trf.xlu0
      %v3758 = vpop.trf.xlu0
      %v3759 = vpop.trf.xlu0
      %v3760 = vpop.trf.xlu0
      %v3761 = vpop.trf.xlu0
      %v3762 = vpop.trf.xlu0
      %v3763 = vpop.trf.xlu0
      %v3764 = vpop.trf.xlu0
      %v3765 = vpop.trf.xlu0
      %v3766 = vpop.trf.xlu0
      %v3767 = vpop.trf.xlu0
      %v3768 = vpop.trf.xlu0
      %v3771 = vcombine.low %v3721, %v3753
      %3773 = vst [vmem:[%s421] sm:$0x77] %v3771
      %s3774 = smul.u32 2, %s23
      %p3775 = scmp.lt.s32.totalorder %s22, 1
      %s3776 = scalar_select %p3775, %s22, 1
      %p3777 = scmp.lt.s32.totalorder %s3774, 1
      %s3778 = scalar_select %p3777, %s3774, 1
      %s3779 = smul.addr %s3776, 2
      %s3780 = sadd.s32 %s3778, %s3779
      %s3781 = smul.addr %s3780, 4
      %s3782 = scalar_lea.vmem %s6, %s3781
      // Predicated region
      $region45: #{srresnet_decoder_forward.3} parent=43 // pred_check
        %p3783 = pneg %p207
      $region46: #{srresnet_decoder_forward.3} parent=43 // pred_check_branch
        %3785 = sbr.rel (%p3783) target = $region48
      $region47: #{srresnet_decoder_forward.3} parent=43 // pred_region
        %s3786 = smul.u32 2, %s23
      $region48: #{srresnet_decoder_forward.3} parent=43 // pred_fallthru
        _
    $region44: #{srresnet_decoder_forward.3} parent=5 // pred_fallthru
      _
    %p3787 = scmp.le.s32.totalorder 2, %s13
    // Predicated region
    $region49: #{srresnet_decoder_forward.3} parent=5 // pred_check
      %p3788 = pneg %p3787
    $region50: #{srresnet_decoder_forward.3} parent=5 // pred_check_branch
      %3790 = sbr.rel (%p3788) target = $region52
    $region51: #{srresnet_decoder_forward.3} parent=5 // pred_region
      %s3791 = ssub.s32 %s13, 2
      // Predicated region
      $region53: #{srresnet_decoder_forward.3} parent=51 // pred_check
        %p3792 = pneg %p213
      $region54: #{srresnet_decoder_forward.3} parent=51 // pred_check_branch
        %3794 = sbr.rel (%p3792) target = $region56
      $region55: #{srresnet_decoder_forward.3} parent=51 // pred_region
        %s3795 = smul.u32 2, %s25
        %p3796 = scmp.lt.s32.totalorder %s24, 1
        %s3797 = scalar_select %p3796, %s24, 1
        %p3798 = scmp.lt.s32.totalorder %s3795, 1
        %s3799 = scalar_select %p3798, %s3795, 1
        %s3800 = smul.addr %s3797, 2
        %s3801 = sadd.s32 %s3799, %s3800
        %s3802 = smul.addr %s3801, 4
        %s3803 = scalar_lea.vmem %s6, %s3802
      $region56: #{srresnet_decoder_forward.3} parent=51 // pred_fallthru
        _
    $region52: #{srresnet_decoder_forward.3} parent=5 // pred_fallthru
      _
  $region6: #{srresnet_decoder_forward.3} parent=0 // loop_footer
    %s17 = sadd.s32 1, %s13
  $region7: #{srresnet_decoder_forward.3} parent=0 // loop_footer_branch
    %12 = sbr.rel target = $region3
  $region8: #{srresnet_decoder_forward.3} parent=0 // loop_exit
    _

</llo_original>
